<compile_context>
chip_gen: v7x
topology: tpu7x:2x2x1
jax: 0.10.0
libtpu: 0.0.40
codegen_flags: <defaults>
</compile_context>

<pallas_src>
import functools

import jax
import jax.numpy as jnp
from jax.experimental import pallas as pl
from jax.experimental.pallas import tpu as pltpu

# ---------------------------------------------------------------------------
# Scaled-down VSNet configuration (original values in comments)
# ---------------------------------------------------------------------------
BATCH = 2
IMG_H, IMG_W = 95, 127          # chosen so the feature map is 2x3 (orig 14x19)
NUM_CLASSES = 2
CR_OC = 16                      # channelRed out channels   (orig 96)
FEAT_H, FEAT_W = 2, 3           # feature-map spatial        (orig 14, 19)
H1 = 256                        # classifier hidden          (orig 4096)
H2 = 128                        # classifier out / head dim  (orig 1024)
HEAD_DIM = 256                  # uniform padded width of the fused MLP head
HEAD_RELU = (True, True) + (False,) * 6   # ReLU only after classifier[1,4]

CONV_CFG = [                    # AlexNet .features convs (channels scaled)
    dict(ic=3,  oc=16, k=11, s=4, p=2),   # orig 3->64
    dict(ic=16, oc=32, k=5,  s=1, p=2),   # orig 64->192
    dict(ic=32, oc=48, k=3,  s=1, p=1),   # orig 192->384
    dict(ic=48, oc=32, k=3,  s=1, p=1),   # orig 384->256
    dict(ic=32, oc=32, k=3,  s=1, p=1),   # orig 256->256
]
POOL_AFTER = {0, 1, 4}          # MaxPool2d(3, 2) after these convs


def _round_up(x, m):
    return (x + m - 1) // m * m


# ---------------------------------------------------------------------------
# Pallas kernels
# ---------------------------------------------------------------------------
def _matmul_bias_kernel(a_ref, b_ref, bias_ref, o_ref, *, relu):
    # Single K tile: (tm, Kp) bf16 @ (Kp, tn) bf16 -> f32 on the MXU,
    # fused bias (+ReLU) epilogue, direct store (no scratch accumulator).
    acc = jnp.dot(a_ref[...], b_ref[...], preferred_element_type=jnp.float32)
    acc = acc + bias_ref[...]
    if relu:
        acc = jnp.maximum(acc, 0.0)
    o_ref[...] = acc


def _head_kernel(x_ref, w_ref, b_ref, o_ref, *, relu_flags):
    # Fused MLP head: all layer weights (L, 256, 256) bf16 stay resident in
    # VMEM; the (8, 256) activation never leaves VMEM between layers.
    h = x_ref[...]
    for l, relu in enumerate(relu_flags):
        y = jnp.dot(h.astype(jnp.bfloat16), w_ref[l],
                    preferred_element_type=jnp.float32)
        y = y + b_ref[l]
        if relu:
            y = jnp.maximum(y, 0.0)
        h = y
    o_ref[...] = h


def _maxpool_kernel(*refs):
    # refs = 9 wide 2-D window slices + output; unrolled elementwise max.
    o_ref = refs[-1]
    m = refs[0][...]
    for r in refs[1:-1]:
        m = jnp.maximum(m, r[...])
    o_ref[...] = m


# ---------------------------------------------------------------------------
# Wrappers (plain-JAX glue is only slicing / reshape / one transpose each way)
# ---------------------------------------------------------------------------
def matmul_bias(a_bf16, w_pad, bias_pad, *, n_out, relu, tm=128, tn=128):
    """a:(M,K) bf16 @ pre-padded w:(Kp,Np) bf16 + bias:(1,Np) f32 -> (M,n_out) f32."""
    M, K = a_bf16.shape
    Kp, Np = w_pad.shape
    Mp = _round_up(M, tm)
    a_p = jnp.pad(a_bf16, ((0, Mp - M), (0, Kp - K)))
    grid = (Mp // tm, Np // tn)
    out = pl.pallas_call(
        functools.partial(_matmul_bias_kernel, relu=relu),
        out_shape=jax.ShapeDtypeStruct((Mp, Np), jnp.float32),
        grid_spec=pltpu.PrefetchScalarGridSpec(
            num_scalar_prefetch=0,
            grid=grid,
            in_specs=[
                pl.BlockSpec((tm, Kp), lambda i, j: (i, 0)),
                pl.BlockSpec((Kp, tn), lambda i, j: (0, j)),
                pl.BlockSpec((1, tn), lambda i, j: (0, j)),
            ],
            out_specs=pl.BlockSpec((tm, tn), lambda i, j: (i, j)),
        ),
        compiler_params=pltpu.CompilerParams(
            dimension_semantics=("parallel", "parallel")),
    )(a_p, w_pad, bias_pad)
    return out[:M, :n_out]


def _im2col_nhwc(x, k, stride, pad):
    # Channels-last patch extraction, feature order (kh, kw, ic) -- matches
    # the weight flattening in _pack_conv. No big transposes.
    B, H, W, C = x.shape
    if pad:
        x = jnp.pad(x, ((0, 0), (pad, pad), (pad, pad), (0, 0)))
    Hp, Wp = H + 2 * pad, W + 2 * pad
    oh = (Hp - k) // stride + 1
    ow = (Wp - k) // stride + 1
    cols = jnp.concatenate(
        [x[:, i:i + stride * oh:stride, j:j + stride * ow:stride, :]
         for i in range(k) for j in range(k)], axis=-1)
    return cols.reshape(B * oh * ow, k * k * C).astype(jnp.bfloat16), oh, ow


def conv2d_nhwc(x, w_pad, b_pad, cfg, *, relu):
    cols, oh, ow = _im2col_nhwc(x, cfg["k"], cfg["s"], cfg["p"])
    y = matmul_bias(cols, w_pad, b_pad, n_out=cfg["oc"], relu=relu)
    return y.reshape(x.shape[0], oh, ow, cfg["oc"])


def maxpool2d_nhwc(x, k=3, s=2):
    B, H, W, C = x.shape
    oh = (H - k) // s + 1
    ow = (W - k) // s + 1
    slices = [x[:, i:i + s * oh:s, j:j + s * ow:s, :].reshape(B, oh * ow * C)
              for i in range(k) for j in range(k)]
    out = pl.pallas_call(
        _maxpool_kernel,
        out_shape=jax.ShapeDtypeStruct((B, oh * ow * C), jnp.float32),
    )(*slices)
    return out.reshape(B, oh, ow, C)


# ---------------------------------------------------------------------------
# Parameters: deterministic xavier-uniform init, packed/padded/bf16 ONCE.
# ---------------------------------------------------------------------------
def _xavier(key, shape, fan_in, fan_out):
    limit = (6.0 / (fan_in + fan_out)) ** 0.5
    return jax.random.uniform(key, shape, jnp.float32, -limit, limit)


def _pack_conv(w, b):
    # w:(OC,IC,KH,KW) -> (KH*KW*IC, OC) to match im2col (kh,kw,ic) order;
    # pad K and OC to 128 multiples; bf16 MXU operand, f32 bias.
    OC, IC, KH, KW = w.shape
    K = KH * KW * IC
    wf = w.transpose(2, 3, 1, 0).reshape(K, OC)
    Kp, Np = _round_up(K, 128), _round_up(OC, 128)
    w_pad = jnp.pad(wf, ((0, Kp - K), (0, Np - OC))).astype(jnp.bfloat16)
    b_pad = jnp.pad(b.reshape(1, OC), ((0, 0), (0, Np - OC)))
    return w_pad, b_pad


def _pack_linear(w, b):
    # torch Linear: y = x @ w.T + b, w:(out,in) -> pad to (HEAD_DIM, HEAD_DIM).
    out_d, in_d = w.shape
    w_pad = jnp.pad(w.T, ((0, HEAD_DIM - in_d),
                          (0, HEAD_DIM - out_d))).astype(jnp.bfloat16)
    b_pad = jnp.pad(b.reshape(1, out_d), ((0, 0), (0, HEAD_DIM - out_d)))
    return w_pad, b_pad


def init_params(key):
    keys = jax.random.split(key, 16)
    ki = iter(keys)

    convs = []
    for cfg in CONV_CFG:
        fan_in = cfg["ic"] * cfg["k"] * cfg["k"]
        w = _xavier(next(ki), (cfg["oc"], cfg["ic"], cfg["k"], cfg["k"]),
                    fan_in, cfg["oc"])
        convs.append(_pack_conv(w, jnp.zeros((cfg["oc"],), jnp.float32)))

    ic_cr = CONV_CFG[-1]["oc"]
    w_cr = _xavier(next(ki), (CR_OC, ic_cr, 1, 1), ic_cr, CR_OC)
    channel_red = _pack_conv(w_cr, jnp.zeros((CR_OC,), jnp.float32))

    flat = CR_OC * FEAT_H * FEAT_W
    concat_dim = 2 * flat
    head_dims = [(concat_dim, H1), (H1, H1), (H1, H2),          # classifier
                 (H2, H2), (H2, H2), (H2, H2), (H2, H2),        # output 1-4
                 (H2, NUM_CLASSES)]                             # output 5
    w_list, b_list = [], []
    for din, dout in head_dims:
        w = _xavier(next(ki), (dout, din), din, dout)
        wp, bp = _pack_linear(w, jnp.zeros((dout,), jnp.float32))
        w_list.append(wp)
        b_list.append(bp)
    head = (jnp.stack(w_list),          # (8, 256, 256) bf16
            jnp.stack(b_list))          # (8, 1, 256)   f32
    return {"features": convs, "channel_red": channel_red, "head": head}


# ---------------------------------------------------------------------------
# Forward pass
# ---------------------------------------------------------------------------
def _features(x, conv_weights):
    for idx, (cfg, (wp, bp)) in enumerate(zip(CONV_CFG, conv_weights)):
        x = conv2d_nhwc(x, wp, bp, cfg, relu=True)   # Conv + ReLU
        if idx in POOL_AFTER:
            x = maxpool2d_nhwc(x, 3, 2)
    return x


def _head(x_concat, head):
    w_stack, b_stack = head
    B, D = x_concat.shape
    x_p = jnp.pad(x_concat, ((0, 8 - B), (0, HEAD_DIM - D)))
    out = pl.pallas_call(
        functools.partial(_head_kernel, relu_flags=HEAD_RELU),
        out_shape=jax.ShapeDtypeStruct((8, HEAD_DIM), jnp.float32),
    )(x_p, w_stack, b_stack)
    return out[:B, :NUM_CLASSES]


def vsnet_forward(params, a, b):
    # Shared weights -> both branches run as one batch (NCHW -> NHWC once).
    x = jnp.concatenate([a, b], axis=0).transpose(0, 2, 3, 1)
    x = _features(x, params["features"])

    # channelRed: 1x1 conv == per-pixel channel matmul on the row layout.
    w_cr, b_cr = params["channel_red"]
    B2, H, W, C = x.shape
    y = matmul_bias(x.reshape(B2 * H * W, C).astype(jnp.bfloat16),
                    w_cr, b_cr, n_out=CR_OC, relu=False)
    y = y.reshape(B2, H, W, CR_OC)

    # flatten in torch .view order (C, H, W), then split branches + concat.
    y = y.transpose(0, 3, 1, 2).reshape(B2, CR_OC * H * W)
    x_concat = jnp.concatenate([y[:BATCH], y[BATCH:]], axis=1)

    # classifier (Dropout=identity, Linear+ReLU, Dropout, Linear+ReLU, Linear)
    # + output head (5 Linears): fused into one VMEM-resident Pallas kernel.
    return _head(x_concat, params["head"])


# ---------------------------------------------------------------------------
if __name__ == "__main__":
    key = jax.random.PRNGKey(0)
    kp, ka, kb = jax.random.split(key, 3)
    params = init_params(kp)
    a = jax.random.normal(ka, (BATCH, 3, IMG_H, IMG_W), jnp.float32)
    b = jax.random.normal(kb, (BATCH, 3, IMG_H, IMG_W), jnp.float32)

    out = jax.jit(vsnet_forward)(params, a, b)
    out = jax.block_until_ready(out)
    assert out.shape == (BATCH, NUM_CLASSES), out.shape
    assert bool(jnp.all(jnp.isfinite(out)))
    print("KERNEL_OK")
</pallas_src>

<mosaic_0001>
module attributes {stable_mosaic.version = 11 : i64} {
  func.func @_matmul_bias_kernel(%arg0: i32, %arg1: i32, %arg2: memref<128x384xbf16, #tpu.memory_space<vmem>>, %arg3: memref<384x128xbf16, #tpu.memory_space<vmem>>, %arg4: memref<1x128xf32, #tpu.memory_space<vmem>>, %arg5: memref<128x128xf32, #tpu.memory_space<vmem>>) attributes {dimension_semantics = [#tpu.dimension_semantics<parallel>, #tpu.dimension_semantics<parallel>], iteration_bounds = array<i64: 23, 1>, scalar_prefetch = 0 : i64, scratch_operands = 0 : i64, tpu.core_type = #tpu.core_type<tc>, window_params = [{transform_indices = @transform_0, window_bounds = array<i64: 128, 384>}, {transform_indices = @transform_1, window_bounds = array<i64: 384, 128>}, {transform_indices = @transform_2, window_bounds = array<i64: 1, 128>}, {transform_indices = @transform_3, window_bounds = array<i64: 128, 128>}]} {
    %c0 = arith.constant 0 : index
    %c0_0 = arith.constant 0 : index
    %0 = vector.load %arg2[%c0, %c0_0] : memref<128x384xbf16, #tpu.memory_space<vmem>>, vector<128x384xbf16>
    %c0_1 = arith.constant 0 : index
    %c0_2 = arith.constant 0 : index
    %1 = vector.load %arg3[%c0_1, %c0_2] : memref<384x128xbf16, #tpu.memory_space<vmem>>, vector<384x128xbf16>
    %cst = arith.constant dense<0.000000e+00> : vector<128x128xf32>
    %2 = tpu.matmul %0, %1, %cst {dimension_numbers = #tpu.dot_dimension_numbers<[1], [0], [0], [1], [0, 0, 1, 1], [], []>} : vector<128x384xbf16>, vector<384x128xbf16>, vector<128x128xf32> -> vector<128x128xf32>
    %c0_3 = arith.constant 0 : index
    %c0_4 = arith.constant 0 : index
    %3 = vector.load %arg4[%c0_3, %c0_4] : memref<1x128xf32, #tpu.memory_space<vmem>>, vector<1x128xf32>
    %4 = vector.broadcast %3 : vector<1x128xf32> to vector<128x128xf32>
    %5 = arith.addf %2, %4 : vector<128x128xf32>
    %cst_5 = arith.constant 0.000000e+00 : f32
    %6 = vector.broadcast %cst_5 : f32 to vector<128x128xf32>
    %7 = arith.maximumf %5, %6 : vector<128x128xf32>
    %c0_6 = arith.constant 0 : index
    %c0_7 = arith.constant 0 : index
    %8 = vector.load %arg5[%c0_6, %c0_7] : memref<128x128xf32, #tpu.memory_space<vmem>>, vector<128x128xf32>
    tpu.vector_store %arg5[%c0_6, %c0_7], %7 {strides = array<i32>} : memref<128x128xf32, #tpu.memory_space<vmem>>, vector<128x128xf32>,
    return
  }
  func.func @transform_0(%arg0: i32, %arg1: i32) -> (i32, i32) {
    %c0_i32 = arith.constant 0 : i32
    %c0_i32_0 = arith.constant 0 : i32
    return %arg0, %c0_i32 : i32, i32
  }
  func.func @transform_1(%arg0: i32, %arg1: i32) -> (i32, i32) {
    %c0_i32 = arith.constant 0 : i32
    %c0_i32_0 = arith.constant 0 : i32
    return %c0_i32, %arg1 : i32, i32
  }
  func.func @transform_2(%arg0: i32, %arg1: i32) -> (i32, i32) {
    %c0_i32 = arith.constant 0 : i32
    %c0_i32_0 = arith.constant 0 : i32
    return %c0_i32, %arg1 : i32, i32
  }
  func.func @transform_3(%arg0: i32, %arg1: i32) -> (i32, i32) {
    %c0_i32 = arith.constant 0 : i32
    return %arg0, %arg1 : i32, i32
  }
}

module attributes {stable_mosaic.version = 11 : i64} {
  func.func @_maxpool_kernel(%arg0: memref<4x2640xf32, #tpu.memory_space<vmem>>, %arg1: memref<4x2640xf32, #tpu.memory_space<vmem>>, %arg2: memref<4x2640xf32, #tpu.memory_space<vmem>>, %arg3: memref<4x2640xf32, #tpu.memory_space<vmem>>, %arg4: memref<4x2640xf32, #tpu.memory_space<vmem>>, %arg5: memref<4x2640xf32, #tpu.memory_space<vmem>>, %arg6: memref<4x2640xf32, #tpu.memory_space<vmem>>, %arg7: memref<4x2640xf32, #tpu.memory_space<vmem>>, %arg8: memref<4x2640xf32, #tpu.memory_space<vmem>>, %arg9: memref<4x2640xf32, #tpu.memory_space<vmem>>) attributes {dimension_semantics = [], scalar_prefetch = 0 : i64, scratch_operands = 0 : i64, tpu.core_type = #tpu.core_type<tc>} {
    %c0 = arith.constant 0 : index
    %c0_0 = arith.constant 0 : index
    %0 = vector.load %arg0[%c0, %c0_0] : memref<4x2640xf32, #tpu.memory_space<vmem>>, vector<4x2640xf32>
    %c0_1 = arith.constant 0 : index
    %c0_2 = arith.constant 0 : index
    %1 = vector.load %arg1[%c0_1, %c0_2] : memref<4x2640xf32, #tpu.memory_space<vmem>>, vector<4x2640xf32>
    %2 = arith.maximumf %0, %1 : vector<4x2640xf32>
    %c0_3 = arith.constant 0 : index
    %c0_4 = arith.constant 0 : index
    %3 = vector.load %arg2[%c0_3, %c0_4] : memref<4x2640xf32, #tpu.memory_space<vmem>>, vector<4x2640xf32>
    %4 = arith.maximumf %2, %3 : vector<4x2640xf32>
    %c0_5 = arith.constant 0 : index
    %c0_6 = arith.constant 0 : index
    %5 = vector.load %arg3[%c0_5, %c0_6] : memref<4x2640xf32, #tpu.memory_space<vmem>>, vector<4x2640xf32>
    %6 = arith.maximumf %4, %5 : vector<4x2640xf32>
    %c0_7 = arith.constant 0 : index
    %c0_8 = arith.constant 0 : index
    %7 = vector.load %arg4[%c0_7, %c0_8] : memref<4x2640xf32, #tpu.memory_space<vmem>>, vector<4x2640xf32>
    %8 = arith.maximumf %6, %7 : vector<4x2640xf32>
    %c0_9 = arith.constant 0 : index
    %c0_10 = arith.constant 0 : index
    %9 = vector.load %arg5[%c0_9, %c0_10] : memref<4x2640xf32, #tpu.memory_space<vmem>>, vector<4x2640xf32>
    %10 = arith.maximumf %8, %9 : vector<4x2640xf32>
    %c0_11 = arith.constant 0 : index
    %c0_12 = arith.constant 0 : index
    %11 = vector.load %arg6[%c0_11, %c0_12] : memref<4x2640xf32, #tpu.memory_space<vmem>>, vector<4x2640xf32>
    %12 = arith.maximumf %10, %11 : vector<4x2640xf32>
    %c0_13 = arith.constant 0 : index
    %c0_14 = arith.constant 0 : index
    %13 = vector.load %arg7[%c0_13, %c0_14] : memref<4x2640xf32, #tpu.memory_space<vmem>>, vector<4x2640xf32>
    %14 = arith.maximumf %12, %13 : vector<4x2640xf32>
    %c0_15 = arith.constant 0 : index
    %c0_16 = arith.constant 0 : index
    %15 = vector.load %arg8[%c0_15, %c0_16] : memref<4x2640xf32, #tpu.memory_space<vmem>>, vector<4x2640xf32>
    %16 = arith.maximumf %14, %15 : vector<4x2640xf32>
    %c0_17 = arith.constant 0 : index
    %c0_18 = arith.constant 0 : index
    %17 = vector.load %arg9[%c0_17, %c0_18] : memref<4x2640xf32, #tpu.memory_space<vmem>>, vector<4x2640xf32>
    tpu.vector_store %arg9[%c0_17, %c0_18], %16 {strides = array<i32>} : memref<4x2640xf32, #tpu.memory_space<vmem>>, vector<4x2640xf32>,
    return
  }
}

module attributes {stable_mosaic.version = 11 : i64} {
  func.func @_matmul_bias_kernel(%arg0: i32, %arg1: i32, %arg2: memref<128x512xbf16, #tpu.memory_space<vmem>>, %arg3: memref<512x128xbf16, #tpu.memory_space<vmem>>, %arg4: memref<1x128xf32, #tpu.memory_space<vmem>>, %arg5: memref<128x128xf32, #tpu.memory_space<vmem>>) attributes {dimension_semantics = [#tpu.dimension_semantics<parallel>, #tpu.dimension_semantics<parallel>], iteration_bounds = array<i64: 6, 1>, scalar_prefetch = 0 : i64, scratch_operands = 0 : i64, tpu.core_type = #tpu.core_type<tc>, window_params = [{transform_indices = @transform_0, window_bounds = array<i64: 128, 512>}, {transform_indices = @transform_1, window_bounds = array<i64: 512, 128>}, {transform_indices = @transform_2, window_bounds = array<i64: 1, 128>}, {transform_indices = @transform_3, window_bounds = array<i64: 128, 128>}]} {
    %c0 = arith.constant 0 : index
    %c0_0 = arith.constant 0 : index
    %0 = vector.load %arg2[%c0, %c0_0] : memref<128x512xbf16, #tpu.memory_space<vmem>>, vector<128x512xbf16>
    %c0_1 = arith.constant 0 : index
    %c0_2 = arith.constant 0 : index
    %1 = vector.load %arg3[%c0_1, %c0_2] : memref<512x128xbf16, #tpu.memory_space<vmem>>, vector<512x128xbf16>
    %cst = arith.constant dense<0.000000e+00> : vector<128x128xf32>
    %2 = tpu.matmul %0, %1, %cst {dimension_numbers = #tpu.dot_dimension_numbers<[1], [0], [0], [1], [0, 0, 1, 1], [], []>} : vector<128x512xbf16>, vector<512x128xbf16>, vector<128x128xf32> -> vector<128x128xf32>
    %c0_3 = arith.constant 0 : index
    %c0_4 = arith.constant 0 : index
    %3 = vector.load %arg4[%c0_3, %c0_4] : memref<1x128xf32, #tpu.memory_space<vmem>>, vector<1x128xf32>
    %4 = vector.broadcast %3 : vector<1x128xf32> to vector<128x128xf32>
    %5 = arith.addf %2, %4 : vector<128x128xf32>
    %cst_5 = arith.constant 0.000000e+00 : f32
    %6 = vector.broadcast %cst_5 : f32 to vector<128x128xf32>
    %7 = arith.maximumf %5, %6 : vector<128x128xf32>
    %c0_6 = arith.constant 0 : index
    %c0_7 = arith.constant 0 : index
    %8 = vector.load %arg5[%c0_6, %c0_7] : memref<128x128xf32, #tpu.memory_space<vmem>>, vector<128x128xf32>
    tpu.vector_store %arg5[%c0_6, %c0_7], %7 {strides = array<i32>} : memref<128x128xf32, #tpu.memory_space<vmem>>, vector<128x128xf32>,
    return
  }
  func.func @transform_0(%arg0: i32, %arg1: i32) -> (i32, i32) {
    %c0_i32 = arith.constant 0 : i32
    %c0_i32_0 = arith.constant 0 : i32
    return %arg0, %c0_i32 : i32, i32
  }
  func.func @transform_1(%arg0: i32, %arg1: i32) -> (i32, i32) {
    %c0_i32 = arith.constant 0 : i32
    %c0_i32_0 = arith.constant 0 : i32
    return %c0_i32, %arg1 : i32, i32
  }
  func.func @transform_2(%arg0: i32, %arg1: i32) -> (i32, i32) {
    %c0_i32 = arith.constant 0 : i32
    %c0_i32_0 = arith.constant 0 : i32
    return %c0_i32, %arg1 : i32, i32
  }
  func.func @transform_3(%arg0: i32, %arg1: i32) -> (i32, i32) {
    %c0_i32 = arith.constant 0 : i32
    return %arg0, %arg1 : i32, i32
  }
}

module attributes {stable_mosaic.version = 11 : i64} {
  func.func @_maxpool_kernel(%arg0: memref<4x1120xf32, #tpu.memory_space<vmem>>, %arg1: memref<4x1120xf32, #tpu.memory_space<vmem>>, %arg2: memref<4x1120xf32, #tpu.memory_space<vmem>>, %arg3: memref<4x1120xf32, #tpu.memory_space<vmem>>, %arg4: memref<4x1120xf32, #tpu.memory_space<vmem>>, %arg5: memref<4x1120xf32, #tpu.memory_space<vmem>>, %arg6: memref<4x1120xf32, #tpu.memory_space<vmem>>, %arg7: memref<4x1120xf32, #tpu.memory_space<vmem>>, %arg8: memref<4x1120xf32, #tpu.memory_space<vmem>>, %arg9: memref<4x1120xf32, #tpu.memory_space<vmem>>) attributes {dimension_semantics = [], scalar_prefetch = 0 : i64, scratch_operands = 0 : i64, tpu.core_type = #tpu.core_type<tc>} {
    %c0 = arith.constant 0 : index
    %c0_0 = arith.constant 0 : index
    %0 = vector.load %arg0[%c0, %c0_0] : memref<4x1120xf32, #tpu.memory_space<vmem>>, vector<4x1120xf32>
    %c0_1 = arith.constant 0 : index
    %c0_2 = arith.constant 0 : index
    %1 = vector.load %arg1[%c0_1, %c0_2] : memref<4x1120xf32, #tpu.memory_space<vmem>>, vector<4x1120xf32>
    %2 = arith.maximumf %0, %1 : vector<4x1120xf32>
    %c0_3 = arith.constant 0 : index
    %c0_4 = arith.constant 0 : index
    %3 = vector.load %arg2[%c0_3, %c0_4] : memref<4x1120xf32, #tpu.memory_space<vmem>>, vector<4x1120xf32>
    %4 = arith.maximumf %2, %3 : vector<4x1120xf32>
    %c0_5 = arith.constant 0 : index
    %c0_6 = arith.constant 0 : index
    %5 = vector.load %arg3[%c0_5, %c0_6] : memref<4x1120xf32, #tpu.memory_space<vmem>>, vector<4x1120xf32>
    %6 = arith.maximumf %4, %5 : vector<4x1120xf32>
    %c0_7 = arith.constant 0 : index
    %c0_8 = arith.constant 0 : index
    %7 = vector.load %arg4[%c0_7, %c0_8] : memref<4x1120xf32, #tpu.memory_space<vmem>>, vector<4x1120xf32>
    %8 = arith.maximumf %6, %7 : vector<4x1120xf32>
    %c0_9 = arith.constant 0 : index
    %c0_10 = arith.constant 0 : index
    %9 = vector.load %arg5[%c0_9, %c0_10] : memref<4x1120xf32, #tpu.memory_space<vmem>>, vector<4x1120xf32>
    %10 = arith.maximumf %8, %9 : vector<4x1120xf32>
    %c0_11 = arith.constant 0 : index
    %c0_12 = arith.constant 0 : index
    %11 = vector.load %arg6[%c0_11, %c0_12] : memref<4x1120xf32, #tpu.memory_space<vmem>>, vector<4x1120xf32>
    %12 = arith.maximumf %10, %11 : vector<4x1120xf32>
    %c0_13 = arith.constant 0 : index
    %c0_14 = arith.constant 0 : index
    %13 = vector.load %arg7[%c0_13, %c0_14] : memref<4x1120xf32, #tpu.memory_space<vmem>>, vector<4x1120xf32>
    %14 = arith.maximumf %12, %13 : vector<4x1120xf32>
    %c0_15 = arith.constant 0 : index
    %c0_16 = arith.constant 0 : index
    %15 = vector.load %arg8[%c0_15, %c0_16] : memref<4x1120xf32, #tpu.memory_space<vmem>>, vector<4x1120xf32>
    %16 = arith.maximumf %14, %15 : vector<4x1120xf32>
    %c0_17 = arith.constant 0 : index
    %c0_18 = arith.constant 0 : index
    %17 = vector.load %arg9[%c0_17, %c0_18] : memref<4x1120xf32, #tpu.memory_space<vmem>>, vector<4x1120xf32>
    tpu.vector_store %arg9[%c0_17, %c0_18], %16 {strides = array<i32>} : memref<4x1120xf32, #tpu.memory_space<vmem>>, vector<4x1120xf32>,
    return
  }
}

module attributes {stable_mosaic.version = 11 : i64} {
  func.func @_matmul_bias_kernel(%arg0: i32, %arg1: i32, %arg2: memref<128x384xbf16, #tpu.memory_space<vmem>>, %arg3: memref<384x128xbf16, #tpu.memory_space<vmem>>, %arg4: memref<1x128xf32, #tpu.memory_space<vmem>>, %arg5: memref<128x128xf32, #tpu.memory_space<vmem>>) attributes {dimension_semantics = [#tpu.dimension_semantics<parallel>, #tpu.dimension_semantics<parallel>], iteration_bounds = array<i64: 2, 1>, scalar_prefetch = 0 : i64, scratch_operands = 0 : i64, tpu.core_type = #tpu.core_type<tc>, window_params = [{transform_indices = @transform_0, window_bounds = array<i64: 128, 384>}, {transform_indices = @transform_1, window_bounds = array<i64: 384, 128>}, {transform_indices = @transform_2, window_bounds = array<i64: 1, 128>}, {transform_indices = @transform_3, window_bounds = array<i64: 128, 128>}]} {
    %c0 = arith.constant 0 : index
    %c0_0 = arith.constant 0 : index
    %0 = vector.load %arg2[%c0, %c0_0] : memref<128x384xbf16, #tpu.memory_space<vmem>>, vector<128x384xbf16>
    %c0_1 = arith.constant 0 : index
    %c0_2 = arith.constant 0 : index
    %1 = vector.load %arg3[%c0_1, %c0_2] : memref<384x128xbf16, #tpu.memory_space<vmem>>, vector<384x128xbf16>
    %cst = arith.constant dense<0.000000e+00> : vector<128x128xf32>
    %2 = tpu.matmul %0, %1, %cst {dimension_numbers = #tpu.dot_dimension_numbers<[1], [0], [0], [1], [0, 0, 1, 1], [], []>} : vector<128x384xbf16>, vector<384x128xbf16>, vector<128x128xf32> -> vector<128x128xf32>
    %c0_3 = arith.constant 0 : index
    %c0_4 = arith.constant 0 : index
    %3 = vector.load %arg4[%c0_3, %c0_4] : memref<1x128xf32, #tpu.memory_space<vmem>>, vector<1x128xf32>
    %4 = vector.broadcast %3 : vector<1x128xf32> to vector<128x128xf32>
    %5 = arith.addf %2, %4 : vector<128x128xf32>
    %cst_5 = arith.constant 0.000000e+00 : f32
    %6 = vector.broadcast %cst_5 : f32 to vector<128x128xf32>
    %7 = arith.maximumf %5, %6 : vector<128x128xf32>
    %c0_6 = arith.constant 0 : index
    %c0_7 = arith.constant 0 : index
    %8 = vector.load %arg5[%c0_6, %c0_7] : memref<128x128xf32, #tpu.memory_space<vmem>>, vector<128x128xf32>
    tpu.vector_store %arg5[%c0_6, %c0_7], %7 {strides = array<i32>} : memref<128x128xf32, #tpu.memory_space<vmem>>, vector<128x128xf32>,
    return
  }
  func.func @transform_0(%arg0: i32, %arg1: i32) -> (i32, i32) {
    %c0_i32 = arith.constant 0 : i32
    %c0_i32_0 = arith.constant 0 : i32
    return %arg0, %c0_i32 : i32, i32
  }
  func.func @transform_1(%arg0: i32, %arg1: i32) -> (i32, i32) {
    %c0_i32 = arith.constant 0 : i32
    %c0_i32_0 = arith.constant 0 : i32
    return %c0_i32, %arg1 : i32, i32
  }
  func.func @transform_2(%arg0: i32, %arg1: i32) -> (i32, i32) {
    %c0_i32 = arith.constant 0 : i32
    %c0_i32_0 = arith.constant 0 : i32
    return %c0_i32, %arg1 : i32, i32
  }
  func.func @transform_3(%arg0: i32, %arg1: i32) -> (i32, i32) {
    %c0_i32 = arith.constant 0 : i32
    return %arg0, %arg1 : i32, i32
  }
}

module attributes {stable_mosaic.version = 11 : i64} {
  func.func @_matmul_bias_kernel(%arg0: i32, %arg1: i32, %arg2: memref<128x512xbf16, #tpu.memory_space<vmem>>, %arg3: memref<512x128xbf16, #tpu.memory_space<vmem>>, %arg4: memref<1x128xf32, #tpu.memory_space<vmem>>, %arg5: memref<128x128xf32, #tpu.memory_space<vmem>>) attributes {dimension_semantics = [#tpu.dimension_semantics<parallel>, #tpu.dimension_semantics<parallel>], iteration_bounds = array<i64: 2, 1>, scalar_prefetch = 0 : i64, scratch_operands = 0 : i64, tpu.core_type = #tpu.core_type<tc>, window_params = [{transform_indices = @transform_0, window_bounds = array<i64: 128, 512>}, {transform_indices = @transform_1, window_bounds = array<i64: 512, 128>}, {transform_indices = @transform_2, window_bounds = array<i64: 1, 128>}, {transform_indices = @transform_3, window_bounds = array<i64: 128, 128>}]} {
    %c0 = arith.constant 0 : index
    %c0_0 = arith.constant 0 : index
    %0 = vector.load %arg2[%c0, %c0_0] : memref<128x512xbf16, #tpu.memory_space<vmem>>, vector<128x512xbf16>
    %c0_1 = arith.constant 0 : index
    %c0_2 = arith.constant 0 : index
    %1 = vector.load %arg3[%c0_1, %c0_2] : memref<512x128xbf16, #tpu.memory_space<vmem>>, vector<512x128xbf16>
    %cst = arith.constant dense<0.000000e+00> : vector<128x128xf32>
    %2 = tpu.matmul %0, %1, %cst {dimension_numbers = #tpu.dot_dimension_numbers<[1], [0], [0], [1], [0, 0, 1, 1], [], []>} : vector<128x512xbf16>, vector<512x128xbf16>, vector<128x128xf32> -> vector<128x128xf32>
    %c0_3 = arith.constant 0 : index
    %c0_4 = arith.constant 0 : index
    %3 = vector.load %arg4[%c0_3, %c0_4] : memref<1x128xf32, #tpu.memory_space<vmem>>, vector<1x128xf32>
    %4 = vector.broadcast %3 : vector<1x128xf32> to vector<128x128xf32>
    %5 = arith.addf %2, %4 : vector<128x128xf32>
    %cst_5 = arith.constant 0.000000e+00 : f32
    %6 = vector.broadcast %cst_5 : f32 to vector<128x128xf32>
    %7 = arith.maximumf %5, %6 : vector<128x128xf32>
    %c0_6 = arith.constant 0 : index
    %c0_7 = arith.constant 0 : index
    %8 = vector.load %arg5[%c0_6, %c0_7] : memref<128x128xf32, #tpu.memory_space<vmem>>, vector<128x128xf32>
    tpu.vector_store %arg5[%c0_6, %c0_7], %7 {strides = array<i32>} : memref<128x128xf32, #tpu.memory_space<vmem>>, vector<128x128xf32>,
    return
  }
  func.func @transform_0(%arg0: i32, %arg1: i32) -> (i32, i32) {
    %c0_i32 = arith.constant 0 : i32
    %c0_i32_0 = arith.constant 0 : i32
    return %arg0, %c0_i32 : i32, i32
  }
  func.func @transform_1(%arg0: i32, %arg1: i32) -> (i32, i32) {
    %c0_i32 = arith.constant 0 : i32
    %c0_i32_0 = arith.constant 0 : i32
    return %c0_i32, %arg1 : i32, i32
  }
  func.func @transform_2(%arg0: i32, %arg1: i32) -> (i32, i32) {
    %c0_i32 = arith.constant 0 : i32
    %c0_i32_0 = arith.constant 0 : i32
    return %c0_i32, %arg1 : i32, i32
  }
  func.func @transform_3(%arg0: i32, %arg1: i32) -> (i32, i32) {
    %c0_i32 = arith.constant 0 : i32
    return %arg0, %arg1 : i32, i32
  }
}

module attributes {stable_mosaic.version = 11 : i64} {
  func.func @_maxpool_kernel(%arg0: memref<4x192xf32, #tpu.memory_space<vmem>>, %arg1: memref<4x192xf32, #tpu.memory_space<vmem>>, %arg2: memref<4x192xf32, #tpu.memory_space<vmem>>, %arg3: memref<4x192xf32, #tpu.memory_space<vmem>>, %arg4: memref<4x192xf32, #tpu.memory_space<vmem>>, %arg5: memref<4x192xf32, #tpu.memory_space<vmem>>, %arg6: memref<4x192xf32, #tpu.memory_space<vmem>>, %arg7: memref<4x192xf32, #tpu.memory_space<vmem>>, %arg8: memref<4x192xf32, #tpu.memory_space<vmem>>, %arg9: memref<4x192xf32, #tpu.memory_space<vmem>>) attributes {dimension_semantics = [], scalar_prefetch = 0 : i64, scratch_operands = 0 : i64, tpu.core_type = #tpu.core_type<tc>} {
    %c0 = arith.constant 0 : index
    %c0_0 = arith.constant 0 : index
    %0 = vector.load %arg0[%c0, %c0_0] : memref<4x192xf32, #tpu.memory_space<vmem>>, vector<4x192xf32>
    %c0_1 = arith.constant 0 : index
    %c0_2 = arith.constant 0 : index
    %1 = vector.load %arg1[%c0_1, %c0_2] : memref<4x192xf32, #tpu.memory_space<vmem>>, vector<4x192xf32>
    %2 = arith.maximumf %0, %1 : vector<4x192xf32>
    %c0_3 = arith.constant 0 : index
    %c0_4 = arith.constant 0 : index
    %3 = vector.load %arg2[%c0_3, %c0_4] : memref<4x192xf32, #tpu.memory_space<vmem>>, vector<4x192xf32>
    %4 = arith.maximumf %2, %3 : vector<4x192xf32>
    %c0_5 = arith.constant 0 : index
    %c0_6 = arith.constant 0 : index
    %5 = vector.load %arg3[%c0_5, %c0_6] : memref<4x192xf32, #tpu.memory_space<vmem>>, vector<4x192xf32>
    %6 = arith.maximumf %4, %5 : vector<4x192xf32>
    %c0_7 = arith.constant 0 : index
    %c0_8 = arith.constant 0 : index
    %7 = vector.load %arg4[%c0_7, %c0_8] : memref<4x192xf32, #tpu.memory_space<vmem>>, vector<4x192xf32>
    %8 = arith.maximumf %6, %7 : vector<4x192xf32>
    %c0_9 = arith.constant 0 : index
    %c0_10 = arith.constant 0 : index
    %9 = vector.load %arg5[%c0_9, %c0_10] : memref<4x192xf32, #tpu.memory_space<vmem>>, vector<4x192xf32>
    %10 = arith.maximumf %8, %9 : vector<4x192xf32>
    %c0_11 = arith.constant 0 : index
    %c0_12 = arith.constant 0 : index
    %11 = vector.load %arg6[%c0_11, %c0_12] : memref<4x192xf32, #tpu.memory_space<vmem>>, vector<4x192xf32>
    %12 = arith.maximumf %10, %11 : vector<4x192xf32>
    %c0_13 = arith.constant 0 : index
    %c0_14 = arith.constant 0 : index
    %13 = vector.load %arg7[%c0_13, %c0_14] : memref<4x192xf32, #tpu.memory_space<vmem>>, vector<4x192xf32>
    %14 = arith.maximumf %12, %13 : vector<4x192xf32>
    %c0_15 = arith.constant 0 : index
    %c0_16 = arith.constant 0 : index
    %15 = vector.load %arg8[%c0_15, %c0_16] : memref<4x192xf32, #tpu.memory_space<vmem>>, vector<4x192xf32>
    %16 = arith.maximumf %14, %15 : vector<4x192xf32>
    %c0_17 = arith.constant 0 : index
    %c0_18 = arith.constant 0 : index
    %17 = vector.load %arg9[%c0_17, %c0_18] : memref<4x192xf32, #tpu.memory_space<vmem>>, vector<4x192xf32>
    tpu.vector_store %arg9[%c0_17, %c0_18], %16 {strides = array<i32>} : memref<4x192xf32, #tpu.memory_space<vmem>>, vector<4x192xf32>,
    return
  }
}

module attributes {stable_mosaic.version = 11 : i64} {
  func.func @_matmul_bias_kernel(%arg0: i32, %arg1: i32, %arg2: memref<128x128xbf16, #tpu.memory_space<vmem>>, %arg3: memref<128x128xbf16, #tpu.memory_space<vmem>>, %arg4: memref<1x128xf32, #tpu.memory_space<vmem>>, %arg5: memref<128x128xf32, #tpu.memory_space<vmem>>) attributes {dimension_semantics = [#tpu.dimension_semantics<parallel>, #tpu.dimension_semantics<parallel>], iteration_bounds = array<i64: 1, 1>, scalar_prefetch = 0 : i64, scratch_operands = 0 : i64, tpu.core_type = #tpu.core_type<tc>, window_params = [{transform_indices = @transform_0, window_bounds = array<i64: 128, 128>}, {transform_indices = @transform_1, window_bounds = array<i64: 128, 128>}, {transform_indices = @transform_2, window_bounds = array<i64: 1, 128>}, {transform_indices = @transform_3, window_bounds = array<i64: 128, 128>}]} {
    %c0 = arith.constant 0 : index
    %c0_0 = arith.constant 0 : index
    %0 = vector.load %arg2[%c0, %c0_0] : memref<128x128xbf16, #tpu.memory_space<vmem>>, vector<128x128xbf16>
    %c0_1 = arith.constant 0 : index
    %c0_2 = arith.constant 0 : index
    %1 = vector.load %arg3[%c0_1, %c0_2] : memref<128x128xbf16, #tpu.memory_space<vmem>>, vector<128x128xbf16>
    %cst = arith.constant dense<0.000000e+00> : vector<128x128xf32>
    %2 = tpu.matmul %0, %1, %cst {dimension_numbers = #tpu.dot_dimension_numbers<[1], [0], [0], [1], [0, 0, 1, 1], [], []>} : vector<128x128xbf16>, vector<128x128xbf16>, vector<128x128xf32> -> vector<128x128xf32>
    %c0_3 = arith.constant 0 : index
    %c0_4 = arith.constant 0 : index
    %3 = vector.load %arg4[%c0_3, %c0_4] : memref<1x128xf32, #tpu.memory_space<vmem>>, vector<1x128xf32>
    %4 = vector.broadcast %3 : vector<1x128xf32> to vector<128x128xf32>
    %5 = arith.addf %2, %4 : vector<128x128xf32>
    %c0_5 = arith.constant 0 : index
    %c0_6 = arith.constant 0 : index
    %6 = vector.load %arg5[%c0_5, %c0_6] : memref<128x128xf32, #tpu.memory_space<vmem>>, vector<128x128xf32>
    tpu.vector_store %arg5[%c0_5, %c0_6], %5 {strides = array<i32>} : memref<128x128xf32, #tpu.memory_space<vmem>>, vector<128x128xf32>,
    return
  }
  func.func @transform_0(%arg0: i32, %arg1: i32) -> (i32, i32) {
    %c0_i32 = arith.constant 0 : i32
    %c0_i32_0 = arith.constant 0 : i32
    return %arg0, %c0_i32 : i32, i32
  }
  func.func @transform_1(%arg0: i32, %arg1: i32) -> (i32, i32) {
    %c0_i32 = arith.constant 0 : i32
    %c0_i32_0 = arith.constant 0 : i32
    return %c0_i32, %arg1 : i32, i32
  }
  func.func @transform_2(%arg0: i32, %arg1: i32) -> (i32, i32) {
    %c0_i32 = arith.constant 0 : i32
    %c0_i32_0 = arith.constant 0 : i32
    return %c0_i32, %arg1 : i32, i32
  }
  func.func @transform_3(%arg0: i32, %arg1: i32) -> (i32, i32) {
    %c0_i32 = arith.constant 0 : i32
    return %arg0, %arg1 : i32, i32
  }
}

module attributes {stable_mosaic.version = 11 : i64} {
  func.func @_head_kernel(%arg0: memref<8x256xf32, #tpu.memory_space<vmem>>, %arg1: memref<8x256x256xbf16, #tpu.memory_space<vmem>>, %arg2: memref<8x1x256xf32, #tpu.memory_space<vmem>>, %arg3: memref<8x256xf32, #tpu.memory_space<vmem>>) attributes {dimension_semantics = [], scalar_prefetch = 0 : i64, scratch_operands = 0 : i64, tpu.core_type = #tpu.core_type<tc>} {
    %c0 = arith.constant 0 : index
    %c0_0 = arith.constant 0 : index
    %0 = vector.load %arg0[%c0, %c0_0] : memref<8x256xf32, #tpu.memory_space<vmem>>, vector<8x256xf32>
    %1 = arith.truncf %0 : vector<8x256xf32> to vector<8x256xbf16>
    %c0_1 = arith.constant 0 : index
    %c0_2 = arith.constant 0 : index
    %c0_3 = arith.constant 0 : index
    %2 = vector.load %arg1[%c0_1, %c0_2, %c0_3] : memref<8x256x256xbf16, #tpu.memory_space<vmem>>, vector<1x256x256xbf16>
    %3 = vector.shape_cast %2 : vector<1x256x256xbf16> to vector<256x256xbf16>
    %cst = arith.constant dense<0.000000e+00> : vector<8x256xf32>
    %4 = tpu.matmul %1, %3, %cst {dimension_numbers = #tpu.dot_dimension_numbers<[1], [0], [0], [1], [0, 0, 1, 1], [], []>} : vector<8x256xbf16>, vector<256x256xbf16>, vector<8x256xf32> -> vector<8x256xf32>
    %c0_4 = arith.constant 0 : index
    %c0_5 = arith.constant 0 : index
    %c0_6 = arith.constant 0 : index
    %5 = vector.load %arg2[%c0_4, %c0_5, %c0_6] : memref<8x1x256xf32, #tpu.memory_space<vmem>>, vector<1x1x256xf32>
    %6 = vector.shape_cast %5 : vector<1x1x256xf32> to vector<1x256xf32>
    %7 = vector.broadcast %6 : vector<1x256xf32> to vector<8x256xf32>
    %8 = arith.addf %4, %7 : vector<8x256xf32>
    %cst_7 = arith.constant 0.000000e+00 : f32
    %9 = vector.broadcast %cst_7 : f32 to vector<8x256xf32>
    %10 = arith.maximumf %8, %9 : vector<8x256xf32>
    %11 = arith.truncf %10 : vector<8x256xf32> to vector<8x256xbf16>
    %c1 = arith.constant 1 : index
    %c0_8 = arith.constant 0 : index
    %c0_9 = arith.constant 0 : index
    %12 = vector.load %arg1[%c1, %c0_8, %c0_9] : memref<8x256x256xbf16, #tpu.memory_space<vmem>>, vector<1x256x256xbf16>
    %13 = vector.shape_cast %12 : vector<1x256x256xbf16> to vector<256x256xbf16>
    %cst_10 = arith.constant dense<0.000000e+00> : vector<8x256xf32>
    %14 = tpu.matmul %11, %13, %cst_10 {dimension_numbers = #tpu.dot_dimension_numbers<[1], [0], [0], [1], [0, 0, 1, 1], [], []>} : vector<8x256xbf16>, vector<256x256xbf16>, vector<8x256xf32> -> vector<8x256xf32>
    %c1_11 = arith.constant 1 : index
    %c0_12 = arith.constant 0 : index
    %c0_13 = arith.constant 0 : index
    %15 = vector.load %arg2[%c1_11, %c0_12, %c0_13] : memref<8x1x256xf32, #tpu.memory_space<vmem>>, vector<1x1x256xf32>
    %16 = vector.shape_cast %15 : vector<1x1x256xf32> to vector<1x256xf32>
    %17 = vector.broadcast %16 : vector<1x256xf32> to vector<8x256xf32>
    %18 = arith.addf %14, %17 : vector<8x256xf32>
    %cst_14 = arith.constant 0.000000e+00 : f32
    %19 = vector.broadcast %cst_14 : f32 to vector<8x256xf32>
    %20 = arith.maximumf %18, %19 : vector<8x256xf32>
    %21 = arith.truncf %20 : vector<8x256xf32> to vector<8x256xbf16>
    %c2 = arith.constant 2 : index
    %c0_15 = arith.constant 0 : index
    %c0_16 = arith.constant 0 : index
    %22 = vector.load %arg1[%c2, %c0_15, %c0_16] : memref<8x256x256xbf16, #tpu.memory_space<vmem>>, vector<1x256x256xbf16>
    %23 = vector.shape_cast %22 : vector<1x256x256xbf16> to vector<256x256xbf16>
    %cst_17 = arith.constant dense<0.000000e+00> : vector<8x256xf32>
    %24 = tpu.matmul %21, %23, %cst_17 {dimension_numbers = #tpu.dot_dimension_numbers<[1], [0], [0], [1], [0, 0, 1, 1], [], []>} : vector<8x256xbf16>, vector<256x256xbf16>, vector<8x256xf32> -> vector<8x256xf32>
    %c2_18 = arith.constant 2 : index
    %c0_19 = arith.constant 0 : index
    %c0_20 = arith.constant 0 : index
    %25 = vector.load %arg2[%c2_18, %c0_19, %c0_20] : memref<8x1x256xf32, #tpu.memory_space<vmem>>, vector<1x1x256xf32>
    %26 = vector.shape_cast %25 : vector<1x1x256xf32> to vector<1x256xf32>
    %27 = vector.broadcast %26 : vector<1x256xf32> to vector<8x256xf32>
    %28 = arith.addf %24, %27 : vector<8x256xf32>
    %29 = arith.truncf %28 : vector<8x256xf32> to vector<8x256xbf16>
    %c3 = arith.constant 3 : index
    %c0_21 = arith.constant 0 : index
    %c0_22 = arith.constant 0 : index
    %30 = vector.load %arg1[%c3, %c0_21, %c0_22] : memref<8x256x256xbf16, #tpu.memory_space<vmem>>, vector<1x256x256xbf16>
    %31 = vector.shape_cast %30 : vector<1x256x256xbf16> to vector<256x256xbf16>
    %cst_23 = arith.constant dense<0.000000e+00> : vector<8x256xf32>
    %32 = tpu.matmul %29, %31, %cst_23 {dimension_numbers = #tpu.dot_dimension_numbers<[1], [0], [0], [1], [0, 0, 1, 1], [], []>} : vector<8x256xbf16>, vector<256x256xbf16>, vector<8x256xf32> -> vector<8x256xf32>
    %c3_24 = arith.constant 3 : index
    %c0_25 = arith.constant 0 : index
    %c0_26 = arith.constant 0 : index
    %33 = vector.load %arg2[%c3_24, %c0_25, %c0_26] : memref<8x1x256xf32, #tpu.memory_space<vmem>>, vector<1x1x256xf32>
    %34 = vector.shape_cast %33 : vector<1x1x256xf32> to vector<1x256xf32>
    %35 = vector.broadcast %34 : vector<1x256xf32> to vector<8x256xf32>
    %36 = arith.addf %32, %35 : vector<8x256xf32>
    %37 = arith.truncf %36 : vector<8x256xf32> to vector<8x256xbf16>
    %c4 = arith.constant 4 : index
    %c0_27 = arith.constant 0 : index
    %c0_28 = arith.constant 0 : index
    %38 = vector.load %arg1[%c4, %c0_27, %c0_28] : memref<8x256x256xbf16, #tpu.memory_space<vmem>>, vector<1x256x256xbf16>
    %39 = vector.shape_cast %38 : vector<1x256x256xbf16> to vector<256x256xbf16>
    %cst_29 = arith.constant dense<0.000000e+00> : vector<8x256xf32>
    %40 = tpu.matmul %37, %39, %cst_29 {dimension_numbers = #tpu.dot_dimension_numbers<[1], [0], [0], [1], [0, 0, 1, 1], [], []>} : vector<8x256xbf16>, vector<256x256xbf16>, vector<8x256xf32> -> vector<8x256xf32>
    %c4_30 = arith.constant 4 : index
    %c0_31 = arith.constant 0 : index
    %c0_32 = arith.constant 0 : index
    %41 = vector.load %arg2[%c4_30, %c0_31, %c0_32] : memref<8x1x256xf32, #tpu.memory_space<vmem>>, vector<1x1x256xf32>
    %42 = vector.shape_cast %41 : vector<1x1x256xf32> to vector<1x256xf32>
    %43 = vector.broadcast %42 : vector<1x256xf32> to vector<8x256xf32>
    %44 = arith.addf %40, %43 : vector<8x256xf32>
    %45 = arith.truncf %44 : vector<8x256xf32> to vector<8x256xbf16>
    %c5 = arith.constant 5 : index
    %c0_33 = arith.constant 0 : index
    %c0_34 = arith.constant 0 : index
    %46 = vector.load %arg1[%c5, %c0_33, %c0_34] : memref<8x256x256xbf16, #tpu.memory_space<vmem>>, vector<1x256x256xbf16>
    %47 = vector.shape_cast %46 : vector<1x256x256xbf16> to vector<256x256xbf16>
    %cst_35 = arith.constant dense<0.000000e+00> : vector<8x256xf32>
    %48 = tpu.matmul %45, %47, %cst_35 {dimension_numbers = #tpu.dot_dimension_numbers<[1], [0], [0], [1], [0, 0, 1, 1], [], []>} : vector<8x256xbf16>, vector<256x256xbf16>, vector<8x256xf32> -> vector<8x256xf32>
    %c5_36 = arith.constant 5 : index
    %c0_37 = arith.constant 0 : index
    %c0_38 = arith.constant 0 : index
    %49 = vector.load %arg2[%c5_36, %c0_37, %c0_38] : memref<8x1x256xf32, #tpu.memory_space<vmem>>, vector<1x1x256xf32>
    %50 = vector.shape_cast %49 : vector<1x1x256xf32> to vector<1x256xf32>
    %51 = vector.broadcast %50 : vector<1x256xf32> to vector<8x256xf32>
    %52 = arith.addf %48, %51 : vector<8x256xf32>
    %53 = arith.truncf %52 : vector<8x256xf32> to vector<8x256xbf16>
    %c6 = arith.constant 6 : index
    %c0_39 = arith.constant 0 : index
    %c0_40 = arith.constant 0 : index
    %54 = vector.load %arg1[%c6, %c0_39, %c0_40] : memref<8x256x256xbf16, #tpu.memory_space<vmem>>, vector<1x256x256xbf16>
    %55 = vector.shape_cast %54 : vector<1x256x256xbf16> to vector<256x256xbf16>
    %cst_41 = arith.constant dense<0.000000e+00> : vector<8x256xf32>
    %56 = tpu.matmul %53, %55, %cst_41 {dimension_numbers = #tpu.dot_dimension_numbers<[1], [0], [0], [1], [0, 0, 1, 1], [], []>} : vector<8x256xbf16>, vector<256x256xbf16>, vector<8x256xf32> -> vector<8x256xf32>
    %c6_42 = arith.constant 6 : index
    %c0_43 = arith.constant 0 : index
    %c0_44 = arith.constant 0 : index
    %57 = vector.load %arg2[%c6_42, %c0_43, %c0_44] : memref<8x1x256xf32, #tpu.memory_space<vmem>>, vector<1x1x256xf32>
    %58 = vector.shape_cast %57 : vector<1x1x256xf32> to vector<1x256xf32>
    %59 = vector.broadcast %58 : vector<1x256xf32> to vector<8x256xf32>
    %60 = arith.addf %56, %59 : vector<8x256xf32>
    %61 = arith.truncf %60 : vector<8x256xf32> to vector<8x256xbf16>
    %c7 = arith.constant 7 : index
    %c0_45 = arith.constant 0 : index
    %c0_46 = arith.constant 0 : index
    %62 = vector.load %arg1[%c7, %c0_45, %c0_46] : memref<8x256x256xbf16, #tpu.memory_space<vmem>>, vector<1x256x256xbf16>
    %63 = vector.shape_cast %62 : vector<1x256x256xbf16> to vector<256x256xbf16>
    %cst_47 = arith.constant dense<0.000000e+00> : vector<8x256xf32>
    %64 = tpu.matmul %61, %63, %cst_47 {dimension_numbers = #tpu.dot_dimension_numbers<[1], [0], [0], [1], [0, 0, 1, 1], [], []>} : vector<8x256xbf16>, vector<256x256xbf16>, vector<8x256xf32> -> vector<8x256xf32>
    %c7_48 = arith.constant 7 : index
    %c0_49 = arith.constant 0 : index
    %c0_50 = arith.constant 0 : index
    %65 = vector.load %arg2[%c7_48, %c0_49, %c0_50] : memref<8x1x256xf32, #tpu.memory_space<vmem>>, vector<1x1x256xf32>
    %66 = vector.shape_cast %65 : vector<1x1x256xf32> to vector<1x256xf32>
    %67 = vector.broadcast %66 : vector<1x256xf32> to vector<8x256xf32>
    %68 = arith.addf %64, %67 : vector<8x256xf32>
    %c0_51 = arith.constant 0 : index
    %c0_52 = arith.constant 0 : index
    %69 = vector.load %arg3[%c0_51, %c0_52] : memref<8x256xf32, #tpu.memory_space<vmem>>, vector<8x256xf32>
    tpu.vector_store %arg3[%c0_51, %c0_52], %68 {strides = array<i32>} : memref<8x256xf32, #tpu.memory_space<vmem>>, vector<8x256xf32>,
    return
  }
}

</mosaic_0001>

<llo_original>
// kernel: vsnet_forward.10
$region0: #{vsnet_forward.10}
  #allocation0 [shape = 'u32[]', space=smem, size = 0x4, offset = 0x4, fixed_abs, tag = 'smem constant byte address 0x4 - core index']
  #allocation1 [shape = 'u32[144,128]{1,0:T(1,128)}', space=vmem, size = 0x12000, scoped, tag = 'internal scratch']
  %s0 = inlined_call_operand.vmem [shape: bf16[2944,384], index: 0, kind: input, shape index: {}]
  %s1 = inlined_call_operand.vmem [shape: bf16[384,128], index: 1, kind: input, shape index: {}]
  %s2 = inlined_call_operand.vmem [shape: f32[1,128], index: 2, kind: input, shape index: {}]
  %s3 = inlined_call_operand.vmem [shape: f32[2944,128], index: 3, kind: output, shape index: {}]
  %s4 = sld [smem:[#allocation0]]
  $region45: #{vsnet_forward.10} parent=0
    _
  %s6 = ssub.s32 1, %s4
  %s7 = scalar_select 0, %s6, %s4
  loop: start=0, step=1, limit=25
  $region2: #{vsnet_forward.10} parent=0 // loop_pre_header
    _
  $region3: #{vsnet_forward.10} parent=0 // loop_header
    %s9 = sphi 0, %s13
    %p10 = scmp.ge.s32.totalorder %s9, 25
    %s16 = sphi 0, %s28
    %s17 = sphi 0, %s24
    %s18 = sphi 0, %s16
    %s19 = sphi 0, %s17
    %s20 = sphi 0, %s18
    %s21 = sphi 0, %s19
    %s31 = sphi 0, %s33
    %s34 = sphi 0, %s31
    %s35 = sphi 0, %s34
    %s51 = sphi 0, %s35
    %s57 = sphi 0, %s59
    %s60 = sphi 0, %s57
    %s61 = sphi 0, %s60
    %s77 = sphi 0, %s61
    %s83 = sphi 0, %s85
    %s86 = sphi 0, %s83
    %s87 = sphi 0, %s86
    %s103 = sphi 0, %s87
    %s111 = sphi 0, %s113
    %s114 = sphi 0, %s111
    %s115 = sphi 0, %s114
    %s131 = sphi 0, %s115
  $region4: #{vsnet_forward.10} parent=0 // loop_header_branch
    %12 = sbr.rel (%p10) target = $region8
  $region5: #{vsnet_forward.10} parent=0 // loop_body
    %s14 = ssub.s32 %s9, 1
    %s15 = ssub.s32 %s9, 2
    %s22 = sadd.s32 1, %s17
    %p23 = scmp.ge.s32.totalorder %s22, 1
    %s24 = scalar_select %p23, 0, %s22
    %s25 = sadd.s32 1, %s16
    %s26 = scalar_select %p23, %s25, %s16
    %p27 = scmp.ge.s32.totalorder %s26, 23
    %s28 = scalar_select %p27, 0, %s26
    %s29 = ssub.s32 %s16, %s28
    %p30 = scmp.eq.s32.totalorder %s29, 0
    %s32 = sadd.s32 %s31, 1
    %s33 = scalar_select %p30, %s31, %s32
    %p36 = pneg %p30
    %p37 = scmp.eq.s32.totalorder %s9, 22
    %p38 = por %p36, %p37
    %p39 = scmp.ne.s32.totalorder %s31, %s34
    %p40 = scmp.eq.s32.totalorder %s9, 0
    %p41 = por %p39, %p40
    %p42 = scmp.ne.s32.totalorder %s31, %s34
    %p43 = scmp.eq.s32.totalorder %s14, 22
    %p44 = por %p42, %p43
    %p45 = scmp.ne.s32.totalorder %s34, %s35
    %p46 = scmp.eq.s32.totalorder %s14, 0
    %p47 = por %p45, %p46
    %p48 = scmp.ne.s32.totalorder %s34, %s35
    %p49 = scmp.eq.s32.totalorder %s15, 22
    %p50 = por %p48, %p49
    %p52 = scmp.ne.s32.totalorder %s35, %s51
    %p53 = scmp.eq.s32.totalorder %s15, 0
    %p54 = por %p52, %p53
    %s55 = ssub.s32 %s17, %s24
    %p56 = scmp.eq.s32.totalorder %s55, 0
    %s58 = sadd.s32 %s57, 1
    %s59 = scalar_select %p56, %s57, %s58
    %p62 = pneg %p56
    %p63 = scmp.eq.s32.totalorder %s9, 22
    %p64 = por %p62, %p63
    %p65 = scmp.ne.s32.totalorder %s57, %s60
    %p66 = scmp.eq.s32.totalorder %s9, 0
    %p67 = por %p65, %p66
    %p68 = scmp.ne.s32.totalorder %s57, %s60
    %p69 = scmp.eq.s32.totalorder %s14, 22
    %p70 = por %p68, %p69
    %p71 = scmp.ne.s32.totalorder %s60, %s61
    %p72 = scmp.eq.s32.totalorder %s14, 0
    %p73 = por %p71, %p72
    %p74 = scmp.ne.s32.totalorder %s60, %s61
    %p75 = scmp.eq.s32.totalorder %s15, 22
    %p76 = por %p74, %p75
    %p78 = scmp.ne.s32.totalorder %s61, %s77
    %p79 = scmp.eq.s32.totalorder %s15, 0
    %p80 = por %p78, %p79
    %s81 = ssub.s32 %s17, %s24
    %p82 = scmp.eq.s32.totalorder %s81, 0
    %s84 = sadd.s32 %s83, 1
    %s85 = scalar_select %p82, %s83, %s84
    %p88 = pneg %p82
    %p89 = scmp.eq.s32.totalorder %s9, 22
    %p90 = por %p88, %p89
    %p91 = scmp.ne.s32.totalorder %s83, %s86
    %p92 = scmp.eq.s32.totalorder %s9, 0
    %p93 = por %p91, %p92
    %p94 = scmp.ne.s32.totalorder %s83, %s86
    %p95 = scmp.eq.s32.totalorder %s14, 22
    %p96 = por %p94, %p95
    %p97 = scmp.ne.s32.totalorder %s86, %s87
    %p98 = scmp.eq.s32.totalorder %s14, 0
    %p99 = por %p97, %p98
    %p100 = scmp.ne.s32.totalorder %s86, %s87
    %p101 = scmp.eq.s32.totalorder %s15, 22
    %p102 = por %p100, %p101
    %p104 = scmp.ne.s32.totalorder %s87, %s103
    %p105 = scmp.eq.s32.totalorder %s15, 0
    %p106 = por %p104, %p105
    %s107 = ssub.s32 %s16, %s28
    %s108 = ssub.s32 %s17, %s24
    %s109 = sor.u32 %s107, %s108
    %p110 = scmp.eq.s32.totalorder %s109, 0
    %s112 = sadd.s32 %s111, 1
    %s113 = scalar_select %p110, %s111, %s112
    %p116 = pneg %p110
    %p117 = scmp.eq.s32.totalorder %s9, 22
    %p118 = por %p116, %p117
    %p119 = scmp.ne.s32.totalorder %s111, %s114
    %p120 = scmp.eq.s32.totalorder %s9, 0
    %p121 = por %p119, %p120
    %p122 = scmp.ne.s32.totalorder %s111, %s114
    %p123 = scmp.eq.s32.totalorder %s14, 22
    %p124 = por %p122, %p123
    %p125 = scmp.ne.s32.totalorder %s114, %s115
    %p126 = scmp.eq.s32.totalorder %s14, 0
    %p127 = por %p125, %p126
    %p128 = scmp.ne.s32.totalorder %s114, %s115
    %p129 = scmp.eq.s32.totalorder %s15, 22
    %p130 = por %p128, %p129
    %p132 = scmp.ne.s32.totalorder %s115, %s131
    %p133 = scmp.eq.s32.totalorder %s15, 0
    %p134 = por %p132, %p133
    %p135 = scmp.le.s32.totalorder 1, %s9
    %p136 = scmp.lt.s32.totalorder %s9, 24
    %p137 = pnand %p135, %p136
    %p138 = pneg %p137
    // Predicated region
    $region9: #{vsnet_forward.10} parent=5 // pred_check
      _
    $region10: #{vsnet_forward.10} parent=5 // pred_check_branch
      %140 = sbr.rel (%p137) target = $region12
    $region11: #{vsnet_forward.10} parent=5 // pred_region
      %s141 = ssub.s32 %s9, 1
      // Predicated region
      $region13: #{vsnet_forward.10} parent=11 // pred_check
        %p142 = pneg %p73
      $region14: #{vsnet_forward.10} parent=11 // pred_check_branch
        %144 = sbr.rel (%p142) target = $region16
      $region15: #{vsnet_forward.10} parent=11 // pred_region
        %p145 = scmp.lt.s32.totalorder %s19, 0
        %s146 = scalar_select %p145, %s19, 0
        %s147 = smul.addr %s146, 4
        %s148 = scalar_lea.vmem %s1, %s147
      $region16: #{vsnet_forward.10} parent=11 // pred_fallthru
        _
      // Predicated region
      $region17: #{vsnet_forward.10} parent=11 // pred_check
        %p149 = pneg %p99
      $region18: #{vsnet_forward.10} parent=11 // pred_check_branch
        %151 = sbr.rel (%p149) target = $region20
      $region19: #{vsnet_forward.10} parent=11 // pred_region
        %p152 = scmp.lt.s32.totalorder %s19, 0
        %s153 = scalar_select %p152, %s19, 0
        %s154 = scalar_lea.vmem %s2, %s153
      $region20: #{vsnet_forward.10} parent=11 // pred_fallthru
        _
    $region12: #{vsnet_forward.10} parent=5 // pred_fallthru
      _
    %p155 = scmp.lt.s32.totalorder %s9, 23
    // Predicated region
    $region21: #{vsnet_forward.10} parent=5 // pred_check
      %p156 = pneg %p155
    $region22: #{vsnet_forward.10} parent=5 // pred_check_branch
      %158 = sbr.rel (%p156) target = $region24
    $region23: #{vsnet_forward.10} parent=5 // pred_region
      // Predicated region
      $region25: #{vsnet_forward.10} parent=23 // pred_check
        %p159 = pneg %p41
      $region26: #{vsnet_forward.10} parent=23 // pred_check_branch
        %161 = sbr.rel (%p159) target = $region28
      $region27: #{vsnet_forward.10} parent=23 // pred_region
        %s162 = smul.u32 16, %s16
        %p163 = scmp.lt.s32.totalorder %s162, 367
        %s164 = scalar_select %p163, %s162, 367
        %s165 = smul.addr %s164, 3
        %s166 = smul.addr %s165, 4
        %s167 = scalar_lea.vmem %s0, %s166
        %s168 = smul.u32 16, %s16
      $region28: #{vsnet_forward.10} parent=23 // pred_fallthru
        _
    $region24: #{vsnet_forward.10} parent=5 // pred_fallthru
      _
    %p169 = scmp.le.s32.totalorder 1, %s9
    %p170 = scmp.lt.s32.totalorder %s9, 24
    %p171 = pnand %p169, %p170
    %p172 = pneg %p171
    // Predicated region
    $region29: #{vsnet_forward.10} parent=5 // pred_check
      _
    $region30: #{vsnet_forward.10} parent=5 // pred_check_branch
      %174 = sbr.rel (%p171) target = $region32
    $region31: #{vsnet_forward.10} parent=5 // pred_region
      %s175 = ssub.s32 %s9, 1
      %s176 = smul.u32 16, %s18
      %p177 = scmp.lt.s32.totalorder %s176, 367
      %s178 = scalar_select %p177, %s176, 367
      %s179 = smul.addr %s178, 3
      %s180 = smul.addr %s179, 4
      %s181 = scalar_lea.vmem %s0, %s180
      %p182 = pneg %p47
      %p183 = pneg %p44
      %p184 = scmp.lt.s32.totalorder %s19, 0
      %s185 = scalar_select %p184, %s19, 0
      %s186 = smul.addr %s185, 4
      %s187 = scalar_lea.vmem %s1, %s186
      %p188 = pneg %p73
      %p189 = pneg %p70
      %p190 = scmp.lt.s32.totalorder %s19, 0
      %s191 = scalar_select %p190, %s19, 0
      %s192 = scalar_lea.vmem %s2, %s191
      %p193 = pneg %p99
      %p194 = pneg %p96
      %p195 = pneg %p127
      %p196 = pneg %p124
      %s197 = smul.u32 16, %s18
      %p198 = scmp.lt.s32.totalorder %s197, 367
      %s199 = scalar_select %p198, %s197, 367
      %p200 = scmp.lt.s32.totalorder %s19, 0
      %s201 = scalar_select %p200, %s19, 0
      %s202 = sadd.s32 %s201, %s199
      %s203 = smul.addr %s202, 8
      %s204 = scalar_lea.vmem %s3, %s203
      %s205 = smul.u32 16, %s18
      %p206 = scmp.lt.s32.totalorder %s205, 367
      %s207 = scalar_select %p206, %s205, 367
      %s208 = smul.addr %s207, 3
      %s209 = smul.addr %s208, 4
      %s210 = scalar_lea.vmem %s0, %s209
      %s211 = smul.u32 16, %s18
      %p212 = scmp.lt.s32.totalorder %s19, 0
      %s213 = scalar_select %p212, %s19, 0
      %s214 = smul.addr %s213, 4
      %s215 = scalar_lea.vmem %s1, %s214
      %p216 = scmp.lt.s32.totalorder %s19, 0
      %s217 = scalar_select %p216, %s19, 0
      %s218 = scalar_lea.vmem %s2, %s217
      %s219 = smul.u32 16, %s18
      %p220 = scmp.lt.s32.totalorder %s219, 367
      %s221 = scalar_select %p220, %s219, 367
      %p222 = scmp.lt.s32.totalorder %s19, 0
      %s223 = scalar_select %p222, %s19, 0
      %s224 = sadd.s32 %s223, %s221
      %s225 = smul.addr %s224, 8
      %s226 = scalar_lea.vmem %s3, %s225
      %s227 = smul.u32 16, %s18
      %v229 = vld [vmem:[%s210] sm:$0xff]
      %v230 = vld [vmem:[%s210 + $0x8] sm:$0xf]
      %v231 = vld [vmem:[%s210 + $0xc] sm:$0xff]
      %v232 = vld [vmem:[%s210 + $0x14] sm:$0xf]
      %v233 = vld [vmem:[%s210 + $0x18] sm:$0xff]
      %v234 = vld [vmem:[%s210 + $0x20] sm:$0xf]
      %v235 = vld [vmem:[%s210 + $0x24] sm:$0xff]
      %v236 = vld [vmem:[%s210 + $0x2c] sm:$0xf]
      %v237 = vld [vmem:[%s210 + $0x30] sm:$0xff]
      %v238 = vld [vmem:[%s210 + $0x38] sm:$0xf]
      %v239 = vld [vmem:[%s210 + $0x3c] sm:$0xff]
      %v240 = vld [vmem:[%s210 + $0x44] sm:$0xf]
      %v241 = vld [vmem:[%s210 + $0x48] sm:$0xff]
      %v242 = vld [vmem:[%s210 + $0x50] sm:$0xf]
      %v243 = vld [vmem:[%s210 + $0x54] sm:$0xff]
      %v244 = vld [vmem:[%s210 + $0x5c] sm:$0xf]
      %v245 = vld [vmem:[%s210 + $0x60] sm:$0xff]
      %v246 = vld [vmem:[%s210 + $0x68] sm:$0xf]
      %v247 = vld [vmem:[%s210 + $0x6c] sm:$0xff]
      %v248 = vld [vmem:[%s210 + $0x74] sm:$0xf]
      %v249 = vld [vmem:[%s210 + $0x78] sm:$0xff]
      %v250 = vld [vmem:[%s210 + $0x80] sm:$0xf]
      %v251 = vld [vmem:[%s210 + $0x84] sm:$0xff]
      %v252 = vld [vmem:[%s210 + $0x8c] sm:$0xf]
      %v253 = vld [vmem:[%s210 + $0x90] sm:$0xff]
      %v254 = vld [vmem:[%s210 + $0x98] sm:$0xf]
      %v255 = vld [vmem:[%s210 + $0x9c] sm:$0xff]
      %v256 = vld [vmem:[%s210 + $0xa4] sm:$0xf]
      %v257 = vld [vmem:[%s210 + $0xa8] sm:$0xff]
      %v258 = vld [vmem:[%s210 + $0xb0] sm:$0xf]
      %v259 = vld [vmem:[%s210 + $0xb4] sm:$0xff]
      %v260 = vld [vmem:[%s210 + $0xbc] sm:$0xf]
      %v261 = vld [vmem:[%s215] sm:$0xf]
      %v262 = vld [vmem:[%s215 + $0x4] sm:$0xf]
      %v263 = vld [vmem:[%s215 + $0x8] sm:$0xf]
      %v264 = vld [vmem:[%s215 + $0xc] sm:$0xf]
      %v265 = vld [vmem:[%s215 + $0x10] sm:$0xf]
      %v266 = vld [vmem:[%s215 + $0x14] sm:$0xf]
      %v267 = vld [vmem:[%s215 + $0x18] sm:$0xf]
      %v268 = vld [vmem:[%s215 + $0x1c] sm:$0xf]
      %v269 = vld [vmem:[%s215 + $0x20] sm:$0xf]
      %v270 = vld [vmem:[%s215 + $0x24] sm:$0xf]
      %v271 = vld [vmem:[%s215 + $0x28] sm:$0xf]
      %v272 = vld [vmem:[%s215 + $0x2c] sm:$0xf]
      %v273 = vld [vmem:[%s215 + $0x30] sm:$0xf]
      %v274 = vld [vmem:[%s215 + $0x34] sm:$0xf]
      %v275 = vld [vmem:[%s215 + $0x38] sm:$0xf]
      %v276 = vld [vmem:[%s215 + $0x3c] sm:$0xf]
      %v277 = vld [vmem:[%s215 + $0x40] sm:$0xf]
      %v278 = vld [vmem:[%s215 + $0x44] sm:$0xf]
      %v279 = vld [vmem:[%s215 + $0x48] sm:$0xf]
      %v280 = vld [vmem:[%s215 + $0x4c] sm:$0xf]
      %v281 = vld [vmem:[%s215 + $0x50] sm:$0xf]
      %v282 = vld [vmem:[%s215 + $0x54] sm:$0xf]
      %v283 = vld [vmem:[%s215 + $0x58] sm:$0xf]
      %v284 = vld [vmem:[%s215 + $0x5c] sm:$0xf]
      %v285 = vld [vmem:[%s215 + $0x60] sm:$0xf]
      %v286 = vld [vmem:[%s215 + $0x64] sm:$0xf]
      %v287 = vld [vmem:[%s215 + $0x68] sm:$0xf]
      %v288 = vld [vmem:[%s215 + $0x6c] sm:$0xf]
      %v289 = vld [vmem:[%s215 + $0x70] sm:$0xf]
      %v290 = vld [vmem:[%s215 + $0x74] sm:$0xf]
      %v291 = vld [vmem:[%s215 + $0x78] sm:$0xf]
      %v292 = vld [vmem:[%s215 + $0x7c] sm:$0xf]
      %v293 = vld [vmem:[%s215 + $0x80] sm:$0xf]
      %v294 = vld [vmem:[%s215 + $0x84] sm:$0xf]
      %v295 = vld [vmem:[%s215 + $0x88] sm:$0xf]
      %v296 = vld [vmem:[%s215 + $0x8c] sm:$0xf]
      %v297 = vld [vmem:[%s215 + $0x90] sm:$0xf]
      %v298 = vld [vmem:[%s215 + $0x94] sm:$0xf]
      %v299 = vld [vmem:[%s215 + $0x98] sm:$0xf]
      %v300 = vld [vmem:[%s215 + $0x9c] sm:$0xf]
      %v301 = vld [vmem:[%s215 + $0xa0] sm:$0xf]
      %v302 = vld [vmem:[%s215 + $0xa4] sm:$0xf]
      %v303 = vld [vmem:[%s215 + $0xa8] sm:$0xf]
      %v304 = vld [vmem:[%s215 + $0xac] sm:$0xf]
      %v305 = vld [vmem:[%s215 + $0xb0] sm:$0xf]
      %v306 = vld [vmem:[%s215 + $0xb4] sm:$0xf]
      %v307 = vld [vmem:[%s215 + $0xb8] sm:$0xf]
      %v308 = vld [vmem:[%s215 + $0xbc] sm:$0xf]
      %v309 = vld [vmem:[%s218] sm:$0x1]
      %v311 = vlaneseq
      %v312 = vshrl.u32 %v311, 7
      %v313 = vsub.s32 0, %v312
      %v314 = vrot.slane %v309, %v313
      %v348 = vunpack.c.l.b16 %v229
      %v349 = vunpack.c.h.b16 %v229
      %v350 = vunpack.c.l.b16 %v230
      %v351 = vunpack.c.l.b16 %v231
      %v352 = vunpack.c.h.b16 %v231
      %v353 = vunpack.c.l.b16 %v232
      %v354 = vunpack.c.l.b16 %v233
      %v355 = vunpack.c.h.b16 %v233
      %v356 = vunpack.c.l.b16 %v234
      %v357 = vunpack.c.l.b16 %v235
      %v358 = vunpack.c.h.b16 %v235
      %v359 = vunpack.c.l.b16 %v236
      %v360 = vunpack.c.l.b16 %v237
      %v361 = vunpack.c.h.b16 %v237
      %v362 = vunpack.c.l.b16 %v238
      %v363 = vunpack.c.l.b16 %v239
      %v364 = vunpack.c.h.b16 %v239
      %v365 = vunpack.c.l.b16 %v240
      %v366 = vunpack.c.l.b16 %v241
      %v367 = vunpack.c.h.b16 %v241
      %v368 = vunpack.c.l.b16 %v242
      %v369 = vunpack.c.l.b16 %v243
      %v370 = vunpack.c.h.b16 %v243
      %v371 = vunpack.c.l.b16 %v244
      %v372 = vunpack.c.l.b16 %v245
      %v373 = vunpack.c.h.b16 %v245
      %v374 = vunpack.c.l.b16 %v246
      %v375 = vunpack.c.l.b16 %v247
      %v376 = vunpack.c.h.b16 %v247
      %v377 = vunpack.c.l.b16 %v248
      %v378 = vunpack.c.l.b16 %v249
      %v379 = vunpack.c.h.b16 %v249
      %v380 = vunpack.c.l.b16 %v250
      %v381 = vunpack.c.l.b16 %v251
      %v382 = vunpack.c.h.b16 %v251
      %v383 = vunpack.c.l.b16 %v252
      %v384 = vunpack.c.l.b16 %v253
      %v385 = vunpack.c.h.b16 %v253
      %v386 = vunpack.c.l.b16 %v254
      %v387 = vunpack.c.l.b16 %v255
      %v388 = vunpack.c.h.b16 %v255
      %v389 = vunpack.c.l.b16 %v256
      %v390 = vunpack.c.l.b16 %v257
      %v391 = vunpack.c.h.b16 %v257
      %v392 = vunpack.c.l.b16 %v258
      %v393 = vunpack.c.l.b16 %v259
      %v394 = vunpack.c.h.b16 %v259
      %v395 = vunpack.c.l.b16 %v260
      %v396 = vpack.c.b16 %v351, %v348
      %v397 = vpack.c.b16 %v352, %v349
      %v398 = vpack.c.b16 %v353, %v350
      %v399 = vpack.c.b16 %v357, %v354
      %v400 = vpack.c.b16 %v358, %v355
      %v401 = vpack.c.b16 %v359, %v356
      %v402 = vpack.c.b16 %v363, %v360
      %v403 = vpack.c.b16 %v364, %v361
      %v404 = vpack.c.b16 %v365, %v362
      %v405 = vpack.c.b16 %v369, %v366
      %v406 = vpack.c.b16 %v370, %v367
      %v407 = vpack.c.b16 %v371, %v368
      %v408 = vpack.c.b16 %v375, %v372
      %v409 = vpack.c.b16 %v376, %v373
      %v410 = vpack.c.b16 %v377, %v374
      %v411 = vpack.c.b16 %v381, %v378
      %v412 = vpack.c.b16 %v382, %v379
      %v413 = vpack.c.b16 %v383, %v380
      %v414 = vpack.c.b16 %v387, %v384
      %v415 = vpack.c.b16 %v388, %v385
      %v416 = vpack.c.b16 %v389, %v386
      %v417 = vpack.c.b16 %v393, %v390
      %v418 = vpack.c.b16 %v394, %v391
      %v419 = vpack.c.b16 %v395, %v392
      %v492 = vunpack.c.l.b16 %v261
      %v493 = vunpack.c.l.b16 %v262
      %v494 = vunpack.c.l.b16 %v263
      %v495 = vunpack.c.l.b16 %v264
      %v496 = vunpack.c.l.b16 %v265
      %v497 = vunpack.c.l.b16 %v266
      %v498 = vunpack.c.l.b16 %v267
      %v499 = vunpack.c.l.b16 %v268
      %v500 = vunpack.c.l.b16 %v269
      %v501 = vunpack.c.l.b16 %v270
      %v502 = vunpack.c.l.b16 %v271
      %v503 = vunpack.c.l.b16 %v272
      %v504 = vunpack.c.l.b16 %v273
      %v505 = vunpack.c.l.b16 %v274
      %v506 = vunpack.c.l.b16 %v275
      %v507 = vunpack.c.l.b16 %v276
      %v508 = vunpack.c.l.b16 %v277
      %v509 = vunpack.c.l.b16 %v278
      %v510 = vunpack.c.l.b16 %v279
      %v511 = vunpack.c.l.b16 %v280
      %v512 = vunpack.c.l.b16 %v281
      %v513 = vunpack.c.l.b16 %v282
      %v514 = vunpack.c.l.b16 %v283
      %v515 = vunpack.c.l.b16 %v284
      %v516 = vunpack.c.l.b16 %v285
      %v517 = vunpack.c.l.b16 %v286
      %v518 = vunpack.c.l.b16 %v287
      %v519 = vunpack.c.l.b16 %v288
      %v520 = vunpack.c.l.b16 %v289
      %v521 = vunpack.c.l.b16 %v290
      %v522 = vunpack.c.l.b16 %v291
      %v523 = vunpack.c.l.b16 %v292
      %v524 = vunpack.c.l.b16 %v293
      %v525 = vunpack.c.l.b16 %v294
      %v526 = vunpack.c.l.b16 %v295
      %v527 = vunpack.c.l.b16 %v296
      %v528 = vunpack.c.l.b16 %v297
      %v529 = vunpack.c.l.b16 %v298
      %v530 = vunpack.c.l.b16 %v299
      %v531 = vunpack.c.l.b16 %v300
      %v532 = vunpack.c.l.b16 %v301
      %v533 = vunpack.c.l.b16 %v302
      %v534 = vunpack.c.l.b16 %v303
      %v535 = vunpack.c.l.b16 %v304
      %v536 = vunpack.c.l.b16 %v305
      %v537 = vunpack.c.l.b16 %v306
      %v538 = vunpack.c.l.b16 %v307
      %v539 = vunpack.c.l.b16 %v308
      %v540 = vpack.c.b16 %v493, %v492
      %v541 = vpack.c.b16 %v495, %v494
      %v542 = vpack.c.b16 %v497, %v496
      %v543 = vpack.c.b16 %v499, %v498
      %v544 = vpack.c.b16 %v501, %v500
      %v545 = vpack.c.b16 %v503, %v502
      %v546 = vpack.c.b16 %v505, %v504
      %v547 = vpack.c.b16 %v507, %v506
      %v548 = vpack.c.b16 %v509, %v508
      %v549 = vpack.c.b16 %v511, %v510
      %v550 = vpack.c.b16 %v513, %v512
      %v551 = vpack.c.b16 %v515, %v514
      %v552 = vpack.c.b16 %v517, %v516
      %v553 = vpack.c.b16 %v519, %v518
      %v554 = vpack.c.b16 %v521, %v520
      %v555 = vpack.c.b16 %v523, %v522
      %v556 = vpack.c.b16 %v525, %v524
      %v557 = vpack.c.b16 %v527, %v526
      %v558 = vpack.c.b16 %v529, %v528
      %v559 = vpack.c.b16 %v531, %v530
      %v560 = vpack.c.b16 %v533, %v532
      %v561 = vpack.c.b16 %v535, %v534
      %v562 = vpack.c.b16 %v537, %v536
      %v563 = vpack.c.b16 %v539, %v538
      %588 = vmatprep.subr.bf16.mxu0 0
      %589 = vmatpush1.bf16.msra.mxu0 %v540
      %590 = vmatprep.subr.bf16.mxu0 0
      %591 = vmatpush1.bf16.msra.mxu0 %v541
      %592 = vmatprep.subr.bf16.mxu0 0
      %593 = vmatpush1.bf16.msra.mxu0 %v542
      %594 = vmatprep.subr.bf16.mxu0 0
      %595 = vmatpush1.bf16.msra.mxu0 %v543
      %596 = vmatprep.subr.bf16.mxu0 0
      %597 = vmatpush1.bf16.msra.mxu0 %v544
      %598 = vmatprep.subr.bf16.mxu0 0
      %599 = vmatpush1.bf16.msra.mxu0 %v545
      %600 = vmatprep.subr.bf16.mxu0 0
      %601 = vmatpush1.bf16.msra.mxu0 %v546
      %602 = vmatprep.subr.bf16.mxu0 0
      %603 = vmatpush1.bf16.msra.mxu0 %v547
      %604 = vmatprep.subr.bf16.mxu0 0
      %605 = vmatpush1.bf16.msra.mxu0 %v548
      %606 = vmatprep.subr.bf16.mxu0 0
      %607 = vmatpush1.bf16.msra.mxu0 %v549
      %608 = vmatprep.subr.bf16.mxu0 0
      %609 = vmatpush1.bf16.msra.mxu0 %v550
      %610 = vmatprep.subr.bf16.mxu0 0
      %611 = vmatpush1.bf16.msra.mxu0 %v551
      %612 = vmatprep.subr.bf16.mxu0 0
      %613 = vmatpush1.bf16.msra.mxu0 %v552
      %614 = vmatprep.subr.bf16.mxu0 0
      %615 = vmatpush1.bf16.msra.mxu0 %v553
      %616 = vmatprep.subr.bf16.mxu0 0
      %617 = vmatpush1.bf16.msra.mxu0 %v554
      %618 = vmatprep.subr.bf16.mxu0 0
      %619 = vmatpush1.bf16.msra.mxu0 %v555
      %620 = vmatprep.mubr.bf16.mxu0 %v397
      %621 = vmatmul.mubr.bf16.gmra.mrb[0].mxu0 %v396
      %v622 = vpop.f32.mrb[0].mxu0
      %v623 = vadd.f32 %v314, %v622
      %v624 = vpop.f32.mrb[0].mxu0
      %v625 = vpop.f32.mrb[0].mxu0
      %v626 = vadd.f32 %v314, %v625
      %v627 = vpop.f32.mrb[0].mxu0
      %628 = vmatprep.mubr.bf16.mxu0 %v400
      %629 = vmatmul.mubr.bf16.gmra.mrb[0].mxu0 %v399
      %v630 = vpop.f32.mrb[0].mxu0
      %v631 = vadd.f32 %v314, %v630
      %v632 = vpop.f32.mrb[0].mxu0
      %v633 = vpop.f32.mrb[0].mxu0
      %v634 = vadd.f32 %v314, %v633
      %v635 = vpop.f32.mrb[0].mxu0
      %636 = vmatprep.mubr.bf16.mxu0 %v403
      %637 = vmatmul.mubr.bf16.gmra.mrb[0].mxu0 %v402
      %v638 = vpop.f32.mrb[0].mxu0
      %v639 = vadd.f32 %v314, %v638
      %v640 = vpop.f32.mrb[0].mxu0
      %v641 = vpop.f32.mrb[0].mxu0
      %v642 = vadd.f32 %v314, %v641
      %v643 = vpop.f32.mrb[0].mxu0
      %644 = vmatprep.mubr.bf16.mxu0 %v406
      %645 = vmatmul.mubr.bf16.gmra.mrb[0].mxu0 %v405
      %v646 = vpop.f32.mrb[0].mxu0
      %v647 = vadd.f32 %v314, %v646
      %v648 = vpop.f32.mrb[0].mxu0
      %v649 = vpop.f32.mrb[0].mxu0
      %v650 = vadd.f32 %v314, %v649
      %v651 = vpop.f32.mrb[0].mxu0
      %652 = vmatprep.mubr.bf16.mxu0 %v409
      %653 = vmatmul.mubr.bf16.gmra.mrb[0].mxu0 %v408
      %v654 = vpop.f32.mrb[0].mxu0
      %v655 = vadd.f32 %v314, %v654
      %v656 = vpop.f32.mrb[0].mxu0
      %v657 = vpop.f32.mrb[0].mxu0
      %v658 = vadd.f32 %v314, %v657
      %v659 = vpop.f32.mrb[0].mxu0
      %660 = vmatprep.mubr.bf16.mxu0 %v412
      %661 = vmatmul.mubr.bf16.gmra.mrb[0].mxu0 %v411
      %v662 = vpop.f32.mrb[0].mxu0
      %v663 = vadd.f32 %v314, %v662
      %v664 = vpop.f32.mrb[0].mxu0
      %v665 = vpop.f32.mrb[0].mxu0
      %v666 = vadd.f32 %v314, %v665
      %v667 = vpop.f32.mrb[0].mxu0
      %668 = vmatprep.mubr.bf16.mxu0 %v415
      %669 = vmatmul.mubr.bf16.gmra.mrb[0].mxu0 %v414
      %v670 = vpop.f32.mrb[0].mxu0
      %v671 = vadd.f32 %v314, %v670
      %v672 = vpop.f32.mrb[0].mxu0
      %v673 = vpop.f32.mrb[0].mxu0
      %v674 = vadd.f32 %v314, %v673
      %v675 = vpop.f32.mrb[0].mxu0
      %676 = vmatprep.mubr.bf16.mxu0 %v418
      %677 = vmatmul.mubr.bf16.gmra.mrb[0].mxu0 %v417
      %v678 = vpop.f32.mrb[0].mxu0
      %v679 = vadd.f32 %v314, %v678
      %v680 = vpop.f32.mrb[0].mxu0
      %v681 = vpop.f32.mrb[0].mxu0
      %v682 = vadd.f32 %v314, %v681
      %v683 = vpop.f32.mrb[0].mxu0
      %684 = vdwg.mxu0
      %685 = vmatprep.subr.bf16.mxu0 0
      %686 = vmatpush1.bf16.msra.mxu0 %v556
      %687 = vmatprep.subr.bf16.mxu0 0
      %688 = vmatpush1.bf16.msra.mxu0 %v557
      %689 = vmatprep.subr.bf16.mxu0 0
      %690 = vmatpush1.bf16.msra.mxu0 %v558
      %691 = vmatprep.subr.bf16.mxu0 0
      %692 = vmatpush1.bf16.msra.mxu0 %v559
      %693 = vmatprep.subr.bf16.mxu0 0
      %694 = vmatpush1.bf16.msra.mxu0 %v560
      %695 = vmatprep.subr.bf16.mxu0 0
      %696 = vmatpush1.bf16.msra.mxu0 %v561
      %697 = vmatprep.subr.bf16.mxu0 0
      %698 = vmatpush1.bf16.msra.mxu0 %v562
      %699 = vmatprep.subr.bf16.mxu0 0
      %700 = vmatpush1.bf16.msra.mxu0 %v563
      %701 = vmatprep.subr.bf16.mxu0 0
      %702 = vmatpush1.bf16.msra.mxu0 0
      %703 = vmatprep.subr.bf16.mxu0 0
      %704 = vmatpush1.bf16.msra.mxu0 0
      %705 = vmatprep.subr.bf16.mxu0 0
      %706 = vmatpush1.bf16.msra.mxu0 0
      %707 = vmatprep.subr.bf16.mxu0 0
      %708 = vmatpush1.bf16.msra.mxu0 0
      %709 = vmatprep.subr.bf16.mxu0 0
      %710 = vmatpush1.bf16.msra.mxu0 0
      %711 = vmatprep.subr.bf16.mxu0 0
      %712 = vmatpush1.bf16.msra.mxu0 0
      %713 = vmatprep.subr.bf16.mxu0 0
      %714 = vmatpush1.bf16.msra.mxu0 0
      %715 = vmatprep.subr.bf16.mxu0 0
      %716 = vmatpush1.bf16.msra.mxu0 0
      %717 = vmatprep.mubr.bf16.mxu0 0
      %718 = vmatmul.mubr.bf16.gmra.mrb[0].mxu0 %v398
      %v719 = vpop.f32.mrb[0].mxu0
      %v720 = vadd.f32 %v623, %v719
      %v721 = vpop.f32.mrb[0].mxu0
      %v722 = vpop.f32.mrb[0].mxu0
      %v723 = vadd.f32 %v626, %v722
      %v724 = vpop.f32.mrb[0].mxu0
      %725 = vmatprep.mubr.bf16.mxu0 0
      %726 = vmatmul.mubr.bf16.gmra.mrb[0].mxu0 %v401
      %v727 = vpop.f32.mrb[0].mxu0
      %v728 = vadd.f32 %v631, %v727
      %v729 = vpop.f32.mrb[0].mxu0
      %v730 = vpop.f32.mrb[0].mxu0
      %v731 = vadd.f32 %v634, %v730
      %v732 = vpop.f32.mrb[0].mxu0
      %733 = vmatprep.mubr.bf16.mxu0 0
      %734 = vmatmul.mubr.bf16.gmra.mrb[0].mxu0 %v404
      %v735 = vpop.f32.mrb[0].mxu0
      %v736 = vadd.f32 %v639, %v735
      %v737 = vpop.f32.mrb[0].mxu0
      %v738 = vpop.f32.mrb[0].mxu0
      %v739 = vadd.f32 %v642, %v738
      %v740 = vpop.f32.mrb[0].mxu0
      %741 = vmatprep.mubr.bf16.mxu0 0
      %742 = vmatmul.mubr.bf16.gmra.mrb[0].mxu0 %v407
      %v743 = vpop.f32.mrb[0].mxu0
      %v744 = vadd.f32 %v647, %v743
      %v745 = vpop.f32.mrb[0].mxu0
      %v746 = vpop.f32.mrb[0].mxu0
      %v747 = vadd.f32 %v650, %v746
      %v748 = vpop.f32.mrb[0].mxu0
      %749 = vmatprep.mubr.bf16.mxu0 0
      %750 = vmatmul.mubr.bf16.gmra.mrb[0].mxu0 %v410
      %v751 = vpop.f32.mrb[0].mxu0
      %v752 = vadd.f32 %v655, %v751
      %v753 = vpop.f32.mrb[0].mxu0
      %v754 = vpop.f32.mrb[0].mxu0
      %v755 = vadd.f32 %v658, %v754
      %v756 = vpop.f32.mrb[0].mxu0
      %757 = vmatprep.mubr.bf16.mxu0 0
      %758 = vmatmul.mubr.bf16.gmra.mrb[0].mxu0 %v413
      %v759 = vpop.f32.mrb[0].mxu0
      %v760 = vadd.f32 %v663, %v759
      %v761 = vpop.f32.mrb[0].mxu0
      %v762 = vpop.f32.mrb[0].mxu0
      %v763 = vadd.f32 %v666, %v762
      %v764 = vpop.f32.mrb[0].mxu0
      %765 = vmatprep.mubr.bf16.mxu0 0
      %766 = vmatmul.mubr.bf16.gmra.mrb[0].mxu0 %v416
      %v767 = vpop.f32.mrb[0].mxu0
      %v768 = vadd.f32 %v671, %v767
      %v769 = vpop.f32.mrb[0].mxu0
      %v770 = vpop.f32.mrb[0].mxu0
      %v771 = vadd.f32 %v674, %v770
      %v772 = vpop.f32.mrb[0].mxu0
      %773 = vmatprep.mubr.bf16.mxu0 0
      %774 = vmatmul.mubr.bf16.gmra.mrb[0].mxu0 %v419
      %v775 = vpop.f32.mrb[0].mxu0
      %v776 = vadd.f32 %v679, %v775
      %v777 = vpop.f32.mrb[0].mxu0
      %v778 = vpop.f32.mrb[0].mxu0
      %v779 = vadd.f32 %v682, %v778
      %v780 = vpop.f32.mrb[0].mxu0
      %781 = vdwg.mxu0
      %v782 = vmax.f32 %v720, 0.0
      %v783 = vmax.f32 %v723, 0.0
      %v784 = vmax.f32 %v728, 0.0
      %v785 = vmax.f32 %v731, 0.0
      %v786 = vmax.f32 %v736, 0.0
      %v787 = vmax.f32 %v739, 0.0
      %v788 = vmax.f32 %v744, 0.0
      %v789 = vmax.f32 %v747, 0.0
      %v790 = vmax.f32 %v752, 0.0
      %v791 = vmax.f32 %v755, 0.0
      %v792 = vmax.f32 %v760, 0.0
      %v793 = vmax.f32 %v763, 0.0
      %v794 = vmax.f32 %v768, 0.0
      %v795 = vmax.f32 %v771, 0.0
      %v796 = vmax.f32 %v776, 0.0
      %v797 = vmax.f32 %v779, 0.0
      %798 = vst [vmem:[%s226] sm:$0xff] %v782
      %799 = vst [vmem:[%s226 + $0x8] sm:$0xff] %v783
      %800 = vst [vmem:[%s226 + $0x10] sm:$0xff] %v784
      %801 = vst [vmem:[%s226 + $0x18] sm:$0xff] %v785
      %802 = vst [vmem:[%s226 + $0x20] sm:$0xff] %v786
      %803 = vst [vmem:[%s226 + $0x28] sm:$0xff] %v787
      %804 = vst [vmem:[%s226 + $0x30] sm:$0xff] %v788
      %805 = vst [vmem:[%s226 + $0x38] sm:$0xff] %v789
      %806 = vst [vmem:[%s226 + $0x40] sm:$0xff] %v790
      %807 = vst [vmem:[%s226 + $0x48] sm:$0xff] %v791
      %808 = vst [vmem:[%s226 + $0x50] sm:$0xff] %v792
      %809 = vst [vmem:[%s226 + $0x58] sm:$0xff] %v793
      %810 = vst [vmem:[%s226 + $0x60] sm:$0xff] %v794
      %811 = vst [vmem:[%s226 + $0x68] sm:$0xff] %v795
      %812 = vst [vmem:[%s226 + $0x70] sm:$0xff] %v796
      %813 = vst [vmem:[%s226 + $0x78] sm:$0xff] %v797
      %s814 = smul.u32 16, %s18
      %p815 = scmp.lt.s32.totalorder %s814, 367
      %s816 = scalar_select %p815, %s814, 367
      %p817 = scmp.lt.s32.totalorder %s19, 0
      %s818 = scalar_select %p817, %s19, 0
      %s819 = sadd.s32 %s818, %s816
      %s820 = smul.addr %s819, 8
      %s821 = scalar_lea.vmem %s3, %s820
      // Predicated region
      $region33: #{vsnet_forward.10} parent=31 // pred_check
        %p822 = pneg %p124
      $region34: #{vsnet_forward.10} parent=31 // pred_check_branch
        %824 = sbr.rel (%p822) target = $region36
      $region35: #{vsnet_forward.10} parent=31 // pred_region
        %s825 = smul.u32 16, %s18
      $region36: #{vsnet_forward.10} parent=31 // pred_fallthru
        _
    $region32: #{vsnet_forward.10} parent=5 // pred_fallthru
      _
    %p826 = scmp.le.s32.totalorder 2, %s9
    // Predicated region
    $region37: #{vsnet_forward.10} parent=5 // pred_check
      %p827 = pneg %p826
    $region38: #{vsnet_forward.10} parent=5 // pred_check_branch
      %829 = sbr.rel (%p827) target = $region40
    $region39: #{vsnet_forward.10} parent=5 // pred_region
      %s830 = ssub.s32 %s9, 2
      // Predicated region
      $region41: #{vsnet_forward.10} parent=39 // pred_check
        %p831 = pneg %p130
      $region42: #{vsnet_forward.10} parent=39 // pred_check_branch
        %833 = sbr.rel (%p831) target = $region44
      $region43: #{vsnet_forward.10} parent=39 // pred_region
        %s834 = smul.u32 16, %s20
        %p835 = scmp.lt.s32.totalorder %s834, 367
        %s836 = scalar_select %p835, %s834, 367
        %p837 = scmp.lt.s32.totalorder %s21, 0
        %s838 = scalar_select %p837, %s21, 0
        %s839 = sadd.s32 %s838, %s836
        %s840 = smul.addr %s839, 8
        %s841 = scalar_lea.vmem %s3, %s840
      $region44: #{vsnet_forward.10} parent=39 // pred_fallthru
        _
    $region40: #{vsnet_forward.10} parent=5 // pred_fallthru
      _
  $region6: #{vsnet_forward.10} parent=0 // loop_footer
    %s13 = sadd.s32 1, %s9
  $region7: #{vsnet_forward.10} parent=0 // loop_footer_branch
    %8 = sbr.rel target = $region3
  $region8: #{vsnet_forward.10} parent=0 // loop_exit
    _

// kernel: vsnet_forward.11
$region0: #{vsnet_forward.11}
  #allocation0 [shape = 'u32[]', space=smem, size = 0x4, offset = 0x4, fixed_abs, tag = 'smem constant byte address 0x4 - core index']
  #allocation1 [shape = 'u32[144,128]{1,0:T(1,128)}', space=vmem, size = 0x12000, scoped, tag = 'internal scratch']
  %s0 = inlined_call_operand.vmem [shape: f32[4,2640], index: 0, kind: input, shape index: {}]
  %s1 = inlined_call_operand.vmem [shape: f32[4,2640], index: 1, kind: input, shape index: {}]
  %s2 = inlined_call_operand.vmem [shape: f32[4,2640], index: 2, kind: input, shape index: {}]
  %s3 = inlined_call_operand.vmem [shape: f32[4,2640], index: 3, kind: input, shape index: {}]
  %s4 = inlined_call_operand.vmem [shape: f32[4,2640], index: 4, kind: input, shape index: {}]
  %s5 = inlined_call_operand.vmem [shape: f32[4,2640], index: 5, kind: input, shape index: {}]
  %s6 = inlined_call_operand.vmem [shape: f32[4,2640], index: 6, kind: input, shape index: {}]
  %s7 = inlined_call_operand.vmem [shape: f32[4,2640], index: 7, kind: input, shape index: {}]
  %s8 = inlined_call_operand.vmem [shape: f32[4,2640], index: 8, kind: input, shape index: {}]
  %s9 = inlined_call_operand.vmem [shape: f32[4,2640], index: 9, kind: output, shape index: {}]
  %s10 = sld [smem:[#allocation0]]
  $region46: #{vsnet_forward.11} parent=0
    _
  %s12 = ssub.s32 1, %s10
  %s13 = scalar_select 0, %s12, %s10
  // Predicated region
  $region2: #{vsnet_forward.11} parent=0 // pred_check
    _
  $region3: #{vsnet_forward.11} parent=0 // pred_check_branch
    %15 = sbr.rel (0) target = $region5
  $region4: #{vsnet_forward.11} parent=0 // pred_region
    _
  $region5: #{vsnet_forward.11} parent=0 // pred_fallthru
    _
  // Predicated region
  $region6: #{vsnet_forward.11} parent=0 // pred_check
    _
  $region7: #{vsnet_forward.11} parent=0 // pred_check_branch
    %17 = sbr.rel (0) target = $region9
  $region8: #{vsnet_forward.11} parent=0 // pred_region
    _
  $region9: #{vsnet_forward.11} parent=0 // pred_fallthru
    _
  // Predicated region
  $region10: #{vsnet_forward.11} parent=0 // pred_check
    _
  $region11: #{vsnet_forward.11} parent=0 // pred_check_branch
    %19 = sbr.rel (0) target = $region13
  $region12: #{vsnet_forward.11} parent=0 // pred_region
    _
  $region13: #{vsnet_forward.11} parent=0 // pred_fallthru
    _
  // Predicated region
  $region14: #{vsnet_forward.11} parent=0 // pred_check
    _
  $region15: #{vsnet_forward.11} parent=0 // pred_check_branch
    %21 = sbr.rel (0) target = $region17
  $region16: #{vsnet_forward.11} parent=0 // pred_region
    _
  $region17: #{vsnet_forward.11} parent=0 // pred_fallthru
    _
  // Predicated region
  $region18: #{vsnet_forward.11} parent=0 // pred_check
    _
  $region19: #{vsnet_forward.11} parent=0 // pred_check_branch
    %23 = sbr.rel (0) target = $region21
  $region20: #{vsnet_forward.11} parent=0 // pred_region
    _
  $region21: #{vsnet_forward.11} parent=0 // pred_fallthru
    _
  // Predicated region
  $region22: #{vsnet_forward.11} parent=0 // pred_check
    _
  $region23: #{vsnet_forward.11} parent=0 // pred_check_branch
    %25 = sbr.rel (0) target = $region25
  $region24: #{vsnet_forward.11} parent=0 // pred_region
    _
  $region25: #{vsnet_forward.11} parent=0 // pred_fallthru
    _
  // Predicated region
  $region26: #{vsnet_forward.11} parent=0 // pred_check
    _
  $region27: #{vsnet_forward.11} parent=0 // pred_check_branch
    %27 = sbr.rel (0) target = $region29
  $region28: #{vsnet_forward.11} parent=0 // pred_region
    _
  $region29: #{vsnet_forward.11} parent=0 // pred_fallthru
    _
  // Predicated region
  $region30: #{vsnet_forward.11} parent=0 // pred_check
    _
  $region31: #{vsnet_forward.11} parent=0 // pred_check_branch
    %29 = sbr.rel (0) target = $region33
  $region32: #{vsnet_forward.11} parent=0 // pred_region
    _
  $region33: #{vsnet_forward.11} parent=0 // pred_fallthru
    _
  // Predicated region
  $region34: #{vsnet_forward.11} parent=0 // pred_check
    _
  $region35: #{vsnet_forward.11} parent=0 // pred_check_branch
    %31 = sbr.rel (0) target = $region37
  $region36: #{vsnet_forward.11} parent=0 // pred_region
    _
  $region37: #{vsnet_forward.11} parent=0 // pred_fallthru
    _
  %v32 = vld [vmem:[%s0] sm:$0xff]
  %v33 = vld [vmem:[%s0 + $0x8] sm:$0xff]
  %v34 = vld [vmem:[%s0 + $0x10] sm:$0xff]
  %v35 = vld [vmem:[%s0 + $0x18] sm:$0xff]
  %v36 = vld [vmem:[%s0 + $0x20] sm:$0xff]
  %v37 = vld [vmem:[%s0 + $0x28] sm:$0xff]
  %v38 = vld [vmem:[%s0 + $0x30] sm:$0xff]
  %v39 = vld [vmem:[%s0 + $0x38] sm:$0xff]
  %v40 = vld [vmem:[%s0 + $0x40] sm:$0xff]
  %v41 = vld [vmem:[%s0 + $0x48] sm:$0xff]
  %v42 = vld [vmem:[%s0 + $0x50] sm:$0xf]
  %v43 = vld [vmem:[%s1] sm:$0xff]
  %v44 = vld [vmem:[%s1 + $0x8] sm:$0xff]
  %v45 = vld [vmem:[%s1 + $0x10] sm:$0xff]
  %v46 = vld [vmem:[%s1 + $0x18] sm:$0xff]
  %v47 = vld [vmem:[%s1 + $0x20] sm:$0xff]
  %v48 = vld [vmem:[%s1 + $0x28] sm:$0xff]
  %v49 = vld [vmem:[%s1 + $0x30] sm:$0xff]
  %v50 = vld [vmem:[%s1 + $0x38] sm:$0xff]
  %v51 = vld [vmem:[%s1 + $0x40] sm:$0xff]
  %v52 = vld [vmem:[%s1 + $0x48] sm:$0xff]
  %v53 = vld [vmem:[%s1 + $0x50] sm:$0xf]
  %v54 = vmax.f32 %v32, %v43
  %v55 = vmax.f32 %v33, %v44
  %v56 = vmax.f32 %v34, %v45
  %v57 = vmax.f32 %v35, %v46
  %v58 = vmax.f32 %v36, %v47
  %v59 = vmax.f32 %v37, %v48
  %v60 = vmax.f32 %v38, %v49
  %v61 = vmax.f32 %v39, %v50
  %v62 = vmax.f32 %v40, %v51
  %v63 = vmax.f32 %v41, %v52
  %v64 = vmax.f32 %v42, %v53
  %v65 = vld [vmem:[%s2] sm:$0xff]
  %v66 = vld [vmem:[%s2 + $0x8] sm:$0xff]
  %v67 = vld [vmem:[%s2 + $0x10] sm:$0xff]
  %v68 = vld [vmem:[%s2 + $0x18] sm:$0xff]
  %v69 = vld [vmem:[%s2 + $0x20] sm:$0xff]
  %v70 = vld [vmem:[%s2 + $0x28] sm:$0xff]
  %v71 = vld [vmem:[%s2 + $0x30] sm:$0xff]
  %v72 = vld [vmem:[%s2 + $0x38] sm:$0xff]
  %v73 = vld [vmem:[%s2 + $0x40] sm:$0xff]
  %v74 = vld [vmem:[%s2 + $0x48] sm:$0xff]
  %v75 = vld [vmem:[%s2 + $0x50] sm:$0xf]
  %v76 = vmax.f32 %v54, %v65
  %v77 = vmax.f32 %v55, %v66
  %v78 = vmax.f32 %v56, %v67
  %v79 = vmax.f32 %v57, %v68
  %v80 = vmax.f32 %v58, %v69
  %v81 = vmax.f32 %v59, %v70
  %v82 = vmax.f32 %v60, %v71
  %v83 = vmax.f32 %v61, %v72
  %v84 = vmax.f32 %v62, %v73
  %v85 = vmax.f32 %v63, %v74
  %v86 = vmax.f32 %v64, %v75
  %v87 = vld [vmem:[%s3] sm:$0xff]
  %v88 = vld [vmem:[%s3 + $0x8] sm:$0xff]
  %v89 = vld [vmem:[%s3 + $0x10] sm:$0xff]
  %v90 = vld [vmem:[%s3 + $0x18] sm:$0xff]
  %v91 = vld [vmem:[%s3 + $0x20] sm:$0xff]
  %v92 = vld [vmem:[%s3 + $0x28] sm:$0xff]
  %v93 = vld [vmem:[%s3 + $0x30] sm:$0xff]
  %v94 = vld [vmem:[%s3 + $0x38] sm:$0xff]
  %v95 = vld [vmem:[%s3 + $0x40] sm:$0xff]
  %v96 = vld [vmem:[%s3 + $0x48] sm:$0xff]
  %v97 = vld [vmem:[%s3 + $0x50] sm:$0xf]
  %v98 = vmax.f32 %v76, %v87
  %v99 = vmax.f32 %v77, %v88
  %v100 = vmax.f32 %v78, %v89
  %v101 = vmax.f32 %v79, %v90
  %v102 = vmax.f32 %v80, %v91
  %v103 = vmax.f32 %v81, %v92
  %v104 = vmax.f32 %v82, %v93
  %v105 = vmax.f32 %v83, %v94
  %v106 = vmax.f32 %v84, %v95
  %v107 = vmax.f32 %v85, %v96
  %v108 = vmax.f32 %v86, %v97
  %v109 = vld [vmem:[%s4] sm:$0xff]
  %v110 = vld [vmem:[%s4 + $0x8] sm:$0xff]
  %v111 = vld [vmem:[%s4 + $0x10] sm:$0xff]
  %v112 = vld [vmem:[%s4 + $0x18] sm:$0xff]
  %v113 = vld [vmem:[%s4 + $0x20] sm:$0xff]
  %v114 = vld [vmem:[%s4 + $0x28] sm:$0xff]
  %v115 = vld [vmem:[%s4 + $0x30] sm:$0xff]
  %v116 = vld [vmem:[%s4 + $0x38] sm:$0xff]
  %v117 = vld [vmem:[%s4 + $0x40] sm:$0xff]
  %v118 = vld [vmem:[%s4 + $0x48] sm:$0xff]
  %v119 = vld [vmem:[%s4 + $0x50] sm:$0xf]
  %v120 = vmax.f32 %v98, %v109
  %v121 = vmax.f32 %v99, %v110
  %v122 = vmax.f32 %v100, %v111
  %v123 = vmax.f32 %v101, %v112
  %v124 = vmax.f32 %v102, %v113
  %v125 = vmax.f32 %v103, %v114
  %v126 = vmax.f32 %v104, %v115
  %v127 = vmax.f32 %v105, %v116
  %v128 = vmax.f32 %v106, %v117
  %v129 = vmax.f32 %v107, %v118
  %v130 = vmax.f32 %v108, %v119
  %v131 = vld [vmem:[%s5] sm:$0xff]
  %v132 = vld [vmem:[%s5 + $0x8] sm:$0xff]
  %v133 = vld [vmem:[%s5 + $0x10] sm:$0xff]
  %v134 = vld [vmem:[%s5 + $0x18] sm:$0xff]
  %v135 = vld [vmem:[%s5 + $0x20] sm:$0xff]
  %v136 = vld [vmem:[%s5 + $0x28] sm:$0xff]
  %v137 = vld [vmem:[%s5 + $0x30] sm:$0xff]
  %v138 = vld [vmem:[%s5 + $0x38] sm:$0xff]
  %v139 = vld [vmem:[%s5 + $0x40] sm:$0xff]
  %v140 = vld [vmem:[%s5 + $0x48] sm:$0xff]
  %v141 = vld [vmem:[%s5 + $0x50] sm:$0xf]
  %v142 = vmax.f32 %v120, %v131
  %v143 = vmax.f32 %v121, %v132
  %v144 = vmax.f32 %v122, %v133
  %v145 = vmax.f32 %v123, %v134
  %v146 = vmax.f32 %v124, %v135
  %v147 = vmax.f32 %v125, %v136
  %v148 = vmax.f32 %v126, %v137
  %v149 = vmax.f32 %v127, %v138
  %v150 = vmax.f32 %v128, %v139
  %v151 = vmax.f32 %v129, %v140
  %v152 = vmax.f32 %v130, %v141
  %v153 = vld [vmem:[%s6] sm:$0xff]
  %v154 = vld [vmem:[%s6 + $0x8] sm:$0xff]
  %v155 = vld [vmem:[%s6 + $0x10] sm:$0xff]
  %v156 = vld [vmem:[%s6 + $0x18] sm:$0xff]
  %v157 = vld [vmem:[%s6 + $0x20] sm:$0xff]
  %v158 = vld [vmem:[%s6 + $0x28] sm:$0xff]
  %v159 = vld [vmem:[%s6 + $0x30] sm:$0xff]
  %v160 = vld [vmem:[%s6 + $0x38] sm:$0xff]
  %v161 = vld [vmem:[%s6 + $0x40] sm:$0xff]
  %v162 = vld [vmem:[%s6 + $0x48] sm:$0xff]
  %v163 = vld [vmem:[%s6 + $0x50] sm:$0xf]
  %v164 = vmax.f32 %v142, %v153
  %v165 = vmax.f32 %v143, %v154
  %v166 = vmax.f32 %v144, %v155
  %v167 = vmax.f32 %v145, %v156
  %v168 = vmax.f32 %v146, %v157
  %v169 = vmax.f32 %v147, %v158
  %v170 = vmax.f32 %v148, %v159
  %v171 = vmax.f32 %v149, %v160
  %v172 = vmax.f32 %v150, %v161
  %v173 = vmax.f32 %v151, %v162
  %v174 = vmax.f32 %v152, %v163
  %v175 = vld [vmem:[%s7] sm:$0xff]
  %v176 = vld [vmem:[%s7 + $0x8] sm:$0xff]
  %v177 = vld [vmem:[%s7 + $0x10] sm:$0xff]
  %v178 = vld [vmem:[%s7 + $0x18] sm:$0xff]
  %v179 = vld [vmem:[%s7 + $0x20] sm:$0xff]
  %v180 = vld [vmem:[%s7 + $0x28] sm:$0xff]
  %v181 = vld [vmem:[%s7 + $0x30] sm:$0xff]
  %v182 = vld [vmem:[%s7 + $0x38] sm:$0xff]
  %v183 = vld [vmem:[%s7 + $0x40] sm:$0xff]
  %v184 = vld [vmem:[%s7 + $0x48] sm:$0xff]
  %v185 = vld [vmem:[%s7 + $0x50] sm:$0xf]
  %v186 = vmax.f32 %v164, %v175
  %v187 = vmax.f32 %v165, %v176
  %v188 = vmax.f32 %v166, %v177
  %v189 = vmax.f32 %v167, %v178
  %v190 = vmax.f32 %v168, %v179
  %v191 = vmax.f32 %v169, %v180
  %v192 = vmax.f32 %v170, %v181
  %v193 = vmax.f32 %v171, %v182
  %v194 = vmax.f32 %v172, %v183
  %v195 = vmax.f32 %v173, %v184
  %v196 = vmax.f32 %v174, %v185
  %v197 = vld [vmem:[%s8] sm:$0xff]
  %v198 = vld [vmem:[%s8 + $0x8] sm:$0xff]
  %v199 = vld [vmem:[%s8 + $0x10] sm:$0xff]
  %v200 = vld [vmem:[%s8 + $0x18] sm:$0xff]
  %v201 = vld [vmem:[%s8 + $0x20] sm:$0xff]
  %v202 = vld [vmem:[%s8 + $0x28] sm:$0xff]
  %v203 = vld [vmem:[%s8 + $0x30] sm:$0xff]
  %v204 = vld [vmem:[%s8 + $0x38] sm:$0xff]
  %v205 = vld [vmem:[%s8 + $0x40] sm:$0xff]
  %v206 = vld [vmem:[%s8 + $0x48] sm:$0xff]
  %v207 = vld [vmem:[%s8 + $0x50] sm:$0xf]
  %v208 = vmax.f32 %v186, %v197
  %v209 = vmax.f32 %v187, %v198
  %v210 = vmax.f32 %v188, %v199
  %v211 = vmax.f32 %v189, %v200
  %v212 = vmax.f32 %v190, %v201
  %v213 = vmax.f32 %v191, %v202
  %v214 = vmax.f32 %v192, %v203
  %v215 = vmax.f32 %v193, %v204
  %v216 = vmax.f32 %v194, %v205
  %v217 = vmax.f32 %v195, %v206
  %v218 = vmax.f32 %v196, %v207
  %219 = vst [vmem:[%s9] sm:$0xff] %v208
  %220 = vst [vmem:[%s9 + $0x8] sm:$0xff] %v209
  %221 = vst [vmem:[%s9 + $0x10] sm:$0xff] %v210
  %222 = vst [vmem:[%s9 + $0x18] sm:$0xff] %v211
  %223 = vst [vmem:[%s9 + $0x20] sm:$0xff] %v212
  %224 = vst [vmem:[%s9 + $0x28] sm:$0xff] %v213
  %225 = vst [vmem:[%s9 + $0x30] sm:$0xff] %v214
  %226 = vst [vmem:[%s9 + $0x38] sm:$0xff] %v215
  %227 = vst [vmem:[%s9 + $0x40] sm:$0xff] %v216
  %228 = vst [vmem:[%s9 + $0x48] sm:$0xff] %v217
  %vm229 = vcmask 650240
  %230 = vst.msk [vmem:[%s9 + $0x50] sm:$0xf] %vm229, %v218
  // Predicated region
  $region38: #{vsnet_forward.11} parent=0 // pred_check
    _
  $region39: #{vsnet_forward.11} parent=0 // pred_check_branch
    %232 = sbr.rel (0) target = $region41
  $region40: #{vsnet_forward.11} parent=0 // pred_region
    _
  $region41: #{vsnet_forward.11} parent=0 // pred_fallthru
    _
  // Predicated region
  $region42: #{vsnet_forward.11} parent=0 // pred_check
    _
  $region43: #{vsnet_forward.11} parent=0 // pred_check_branch
    %234 = sbr.rel (0) target = $region45
  $region44: #{vsnet_forward.11} parent=0 // pred_region
    _
  $region45: #{vsnet_forward.11} parent=0 // pred_fallthru
    _

// kernel: vsnet_forward.12
$region0: #{vsnet_forward.12}
  #allocation0 [shape = 'u32[]', space=smem, size = 0x4, offset = 0x4, fixed_abs, tag = 'smem constant byte address 0x4 - core index']
  #allocation1 [shape = 'u32[144,128]{1,0:T(1,128)}', space=vmem, size = 0x12000, scoped, tag = 'internal scratch']
  %s0 = inlined_call_operand.vmem [shape: bf16[768,512], index: 0, kind: input, shape index: {}]
  %s1 = inlined_call_operand.vmem [shape: bf16[512,128], index: 1, kind: input, shape index: {}]
  %s2 = inlined_call_operand.vmem [shape: f32[1,128], index: 2, kind: input, shape index: {}]
  %s3 = inlined_call_operand.vmem [shape: f32[768,128], index: 3, kind: output, shape index: {}]
  %s4 = sld [smem:[#allocation0]]
  $region45: #{vsnet_forward.12} parent=0
    _
  %s6 = ssub.s32 1, %s4
  %s7 = scalar_select 0, %s6, %s4
  loop: start=0, step=1, limit=8
  $region2: #{vsnet_forward.12} parent=0 // loop_pre_header
    _
  $region3: #{vsnet_forward.12} parent=0 // loop_header
    %s9 = sphi 0, %s13
    %p10 = scmp.ge.s32.totalorder %s9, 8
    %s16 = sphi 0, %s28
    %s17 = sphi 0, %s24
    %s18 = sphi 0, %s16
    %s19 = sphi 0, %s17
    %s20 = sphi 0, %s18
    %s21 = sphi 0, %s19
    %s31 = sphi 0, %s33
    %s34 = sphi 0, %s31
    %s35 = sphi 0, %s34
    %s51 = sphi 0, %s35
    %s57 = sphi 0, %s59
    %s60 = sphi 0, %s57
    %s61 = sphi 0, %s60
    %s77 = sphi 0, %s61
    %s83 = sphi 0, %s85
    %s86 = sphi 0, %s83
    %s87 = sphi 0, %s86
    %s103 = sphi 0, %s87
    %s111 = sphi 0, %s113
    %s114 = sphi 0, %s111
    %s115 = sphi 0, %s114
    %s131 = sphi 0, %s115
  $region4: #{vsnet_forward.12} parent=0 // loop_header_branch
    %12 = sbr.rel (%p10) target = $region8
  $region5: #{vsnet_forward.12} parent=0 // loop_body
    %s14 = ssub.s32 %s9, 1
    %s15 = ssub.s32 %s9, 2
    %s22 = sadd.s32 1, %s17
    %p23 = scmp.ge.s32.totalorder %s22, 1
    %s24 = scalar_select %p23, 0, %s22
    %s25 = sadd.s32 1, %s16
    %s26 = scalar_select %p23, %s25, %s16
    %p27 = scmp.ge.s32.totalorder %s26, 6
    %s28 = scalar_select %p27, 0, %s26
    %s29 = ssub.s32 %s16, %s28
    %p30 = scmp.eq.s32.totalorder %s29, 0
    %s32 = sadd.s32 %s31, 1
    %s33 = scalar_select %p30, %s31, %s32
    %p36 = pneg %p30
    %p37 = scmp.eq.s32.totalorder %s9, 5
    %p38 = por %p36, %p37
    %p39 = scmp.ne.s32.totalorder %s31, %s34
    %p40 = scmp.eq.s32.totalorder %s9, 0
    %p41 = por %p39, %p40
    %p42 = scmp.ne.s32.totalorder %s31, %s34
    %p43 = scmp.eq.s32.totalorder %s14, 5
    %p44 = por %p42, %p43
    %p45 = scmp.ne.s32.totalorder %s34, %s35
    %p46 = scmp.eq.s32.totalorder %s14, 0
    %p47 = por %p45, %p46
    %p48 = scmp.ne.s32.totalorder %s34, %s35
    %p49 = scmp.eq.s32.totalorder %s15, 5
    %p50 = por %p48, %p49
    %p52 = scmp.ne.s32.totalorder %s35, %s51
    %p53 = scmp.eq.s32.totalorder %s15, 0
    %p54 = por %p52, %p53
    %s55 = ssub.s32 %s17, %s24
    %p56 = scmp.eq.s32.totalorder %s55, 0
    %s58 = sadd.s32 %s57, 1
    %s59 = scalar_select %p56, %s57, %s58
    %p62 = pneg %p56
    %p63 = scmp.eq.s32.totalorder %s9, 5
    %p64 = por %p62, %p63
    %p65 = scmp.ne.s32.totalorder %s57, %s60
    %p66 = scmp.eq.s32.totalorder %s9, 0
    %p67 = por %p65, %p66
    %p68 = scmp.ne.s32.totalorder %s57, %s60
    %p69 = scmp.eq.s32.totalorder %s14, 5
    %p70 = por %p68, %p69
    %p71 = scmp.ne.s32.totalorder %s60, %s61
    %p72 = scmp.eq.s32.totalorder %s14, 0
    %p73 = por %p71, %p72
    %p74 = scmp.ne.s32.totalorder %s60, %s61
    %p75 = scmp.eq.s32.totalorder %s15, 5
    %p76 = por %p74, %p75
    %p78 = scmp.ne.s32.totalorder %s61, %s77
    %p79 = scmp.eq.s32.totalorder %s15, 0
    %p80 = por %p78, %p79
    %s81 = ssub.s32 %s17, %s24
    %p82 = scmp.eq.s32.totalorder %s81, 0
    %s84 = sadd.s32 %s83, 1
    %s85 = scalar_select %p82, %s83, %s84
    %p88 = pneg %p82
    %p89 = scmp.eq.s32.totalorder %s9, 5
    %p90 = por %p88, %p89
    %p91 = scmp.ne.s32.totalorder %s83, %s86
    %p92 = scmp.eq.s32.totalorder %s9, 0
    %p93 = por %p91, %p92
    %p94 = scmp.ne.s32.totalorder %s83, %s86
    %p95 = scmp.eq.s32.totalorder %s14, 5
    %p96 = por %p94, %p95
    %p97 = scmp.ne.s32.totalorder %s86, %s87
    %p98 = scmp.eq.s32.totalorder %s14, 0
    %p99 = por %p97, %p98
    %p100 = scmp.ne.s32.totalorder %s86, %s87
    %p101 = scmp.eq.s32.totalorder %s15, 5
    %p102 = por %p100, %p101
    %p104 = scmp.ne.s32.totalorder %s87, %s103
    %p105 = scmp.eq.s32.totalorder %s15, 0
    %p106 = por %p104, %p105
    %s107 = ssub.s32 %s16, %s28
    %s108 = ssub.s32 %s17, %s24
    %s109 = sor.u32 %s107, %s108
    %p110 = scmp.eq.s32.totalorder %s109, 0
    %s112 = sadd.s32 %s111, 1
    %s113 = scalar_select %p110, %s111, %s112
    %p116 = pneg %p110
    %p117 = scmp.eq.s32.totalorder %s9, 5
    %p118 = por %p116, %p117
    %p119 = scmp.ne.s32.totalorder %s111, %s114
    %p120 = scmp.eq.s32.totalorder %s9, 0
    %p121 = por %p119, %p120
    %p122 = scmp.ne.s32.totalorder %s111, %s114
    %p123 = scmp.eq.s32.totalorder %s14, 5
    %p124 = por %p122, %p123
    %p125 = scmp.ne.s32.totalorder %s114, %s115
    %p126 = scmp.eq.s32.totalorder %s14, 0
    %p127 = por %p125, %p126
    %p128 = scmp.ne.s32.totalorder %s114, %s115
    %p129 = scmp.eq.s32.totalorder %s15, 5
    %p130 = por %p128, %p129
    %p132 = scmp.ne.s32.totalorder %s115, %s131
    %p133 = scmp.eq.s32.totalorder %s15, 0
    %p134 = por %p132, %p133
    %p135 = scmp.le.s32.totalorder 1, %s9
    %p136 = scmp.lt.s32.totalorder %s9, 7
    %p137 = pnand %p135, %p136
    %p138 = pneg %p137
    // Predicated region
    $region9: #{vsnet_forward.12} parent=5 // pred_check
      _
    $region10: #{vsnet_forward.12} parent=5 // pred_check_branch
      %140 = sbr.rel (%p137) target = $region12
    $region11: #{vsnet_forward.12} parent=5 // pred_region
      %s141 = ssub.s32 %s9, 1
      // Predicated region
      $region13: #{vsnet_forward.12} parent=11 // pred_check
        %p142 = pneg %p73
      $region14: #{vsnet_forward.12} parent=11 // pred_check_branch
        %144 = sbr.rel (%p142) target = $region16
      $region15: #{vsnet_forward.12} parent=11 // pred_region
        %p145 = scmp.lt.s32.totalorder %s19, 0
        %s146 = scalar_select %p145, %s19, 0
        %s147 = smul.addr %s146, 4
        %s148 = scalar_lea.vmem %s1, %s147
      $region16: #{vsnet_forward.12} parent=11 // pred_fallthru
        _
      // Predicated region
      $region17: #{vsnet_forward.12} parent=11 // pred_check
        %p149 = pneg %p99
      $region18: #{vsnet_forward.12} parent=11 // pred_check_branch
        %151 = sbr.rel (%p149) target = $region20
      $region19: #{vsnet_forward.12} parent=11 // pred_region
        %p152 = scmp.lt.s32.totalorder %s19, 0
        %s153 = scalar_select %p152, %s19, 0
        %s154 = scalar_lea.vmem %s2, %s153
      $region20: #{vsnet_forward.12} parent=11 // pred_fallthru
        _
    $region12: #{vsnet_forward.12} parent=5 // pred_fallthru
      _
    %p155 = scmp.lt.s32.totalorder %s9, 6
    // Predicated region
    $region21: #{vsnet_forward.12} parent=5 // pred_check
      %p156 = pneg %p155
    $region22: #{vsnet_forward.12} parent=5 // pred_check_branch
      %158 = sbr.rel (%p156) target = $region24
    $region23: #{vsnet_forward.12} parent=5 // pred_region
      // Predicated region
      $region25: #{vsnet_forward.12} parent=23 // pred_check
        %p159 = pneg %p41
      $region26: #{vsnet_forward.12} parent=23 // pred_check_branch
        %161 = sbr.rel (%p159) target = $region28
      $region27: #{vsnet_forward.12} parent=23 // pred_region
        %s162 = smul.u32 16, %s16
        %p163 = scmp.lt.s32.totalorder %s162, 95
        %s164 = scalar_select %p163, %s162, 95
        %s165 = smul.addr %s164, 4
        %s166 = smul.addr %s165, 4
        %s167 = scalar_lea.vmem %s0, %s166
        %s168 = smul.u32 16, %s16
      $region28: #{vsnet_forward.12} parent=23 // pred_fallthru
        _
    $region24: #{vsnet_forward.12} parent=5 // pred_fallthru
      _
    %p169 = scmp.le.s32.totalorder 1, %s9
    %p170 = scmp.lt.s32.totalorder %s9, 7
    %p171 = pnand %p169, %p170
    %p172 = pneg %p171
    // Predicated region
    $region29: #{vsnet_forward.12} parent=5 // pred_check
      _
    $region30: #{vsnet_forward.12} parent=5 // pred_check_branch
      %174 = sbr.rel (%p171) target = $region32
    $region31: #{vsnet_forward.12} parent=5 // pred_region
      %s175 = ssub.s32 %s9, 1
      %s176 = smul.u32 16, %s18
      %p177 = scmp.lt.s32.totalorder %s176, 95
      %s178 = scalar_select %p177, %s176, 95
      %s179 = smul.addr %s178, 4
      %s180 = smul.addr %s179, 4
      %s181 = scalar_lea.vmem %s0, %s180
      %p182 = pneg %p47
      %p183 = pneg %p44
      %p184 = scmp.lt.s32.totalorder %s19, 0
      %s185 = scalar_select %p184, %s19, 0
      %s186 = smul.addr %s185, 4
      %s187 = scalar_lea.vmem %s1, %s186
      %p188 = pneg %p73
      %p189 = pneg %p70
      %p190 = scmp.lt.s32.totalorder %s19, 0
      %s191 = scalar_select %p190, %s19, 0
      %s192 = scalar_lea.vmem %s2, %s191
      %p193 = pneg %p99
      %p194 = pneg %p96
      %p195 = pneg %p127
      %p196 = pneg %p124
      %s197 = smul.u32 16, %s18
      %p198 = scmp.lt.s32.totalorder %s197, 95
      %s199 = scalar_select %p198, %s197, 95
      %p200 = scmp.lt.s32.totalorder %s19, 0
      %s201 = scalar_select %p200, %s19, 0
      %s202 = sadd.s32 %s201, %s199
      %s203 = smul.addr %s202, 8
      %s204 = scalar_lea.vmem %s3, %s203
      %s205 = smul.u32 16, %s18
      %p206 = scmp.lt.s32.totalorder %s205, 95
      %s207 = scalar_select %p206, %s205, 95
      %s208 = smul.addr %s207, 4
      %s209 = smul.addr %s208, 4
      %s210 = scalar_lea.vmem %s0, %s209
      %s211 = smul.u32 16, %s18
      %p212 = scmp.lt.s32.totalorder %s19, 0
      %s213 = scalar_select %p212, %s19, 0
      %s214 = smul.addr %s213, 4
      %s215 = scalar_lea.vmem %s1, %s214
      %p216 = scmp.lt.s32.totalorder %s19, 0
      %s217 = scalar_select %p216, %s19, 0
      %s218 = scalar_lea.vmem %s2, %s217
      %s219 = smul.u32 16, %s18
      %p220 = scmp.lt.s32.totalorder %s219, 95
      %s221 = scalar_select %p220, %s219, 95
      %p222 = scmp.lt.s32.totalorder %s19, 0
      %s223 = scalar_select %p222, %s19, 0
      %s224 = sadd.s32 %s223, %s221
      %s225 = smul.addr %s224, 8
      %s226 = scalar_lea.vmem %s3, %s225
      %s227 = smul.u32 16, %s18
      %v229 = vld [vmem:[%s210] sm:$0xff]
      %v230 = vld [vmem:[%s210 + $0x8] sm:$0xff]
      %v231 = vld [vmem:[%s210 + $0x10] sm:$0xff]
      %v232 = vld [vmem:[%s210 + $0x18] sm:$0xff]
      %v233 = vld [vmem:[%s210 + $0x20] sm:$0xff]
      %v234 = vld [vmem:[%s210 + $0x28] sm:$0xff]
      %v235 = vld [vmem:[%s210 + $0x30] sm:$0xff]
      %v236 = vld [vmem:[%s210 + $0x38] sm:$0xff]
      %v237 = vld [vmem:[%s210 + $0x40] sm:$0xff]
      %v238 = vld [vmem:[%s210 + $0x48] sm:$0xff]
      %v239 = vld [vmem:[%s210 + $0x50] sm:$0xff]
      %v240 = vld [vmem:[%s210 + $0x58] sm:$0xff]
      %v241 = vld [vmem:[%s210 + $0x60] sm:$0xff]
      %v242 = vld [vmem:[%s210 + $0x68] sm:$0xff]
      %v243 = vld [vmem:[%s210 + $0x70] sm:$0xff]
      %v244 = vld [vmem:[%s210 + $0x78] sm:$0xff]
      %v245 = vld [vmem:[%s210 + $0x80] sm:$0xff]
      %v246 = vld [vmem:[%s210 + $0x88] sm:$0xff]
      %v247 = vld [vmem:[%s210 + $0x90] sm:$0xff]
      %v248 = vld [vmem:[%s210 + $0x98] sm:$0xff]
      %v249 = vld [vmem:[%s210 + $0xa0] sm:$0xff]
      %v250 = vld [vmem:[%s210 + $0xa8] sm:$0xff]
      %v251 = vld [vmem:[%s210 + $0xb0] sm:$0xff]
      %v252 = vld [vmem:[%s210 + $0xb8] sm:$0xff]
      %v253 = vld [vmem:[%s210 + $0xc0] sm:$0xff]
      %v254 = vld [vmem:[%s210 + $0xc8] sm:$0xff]
      %v255 = vld [vmem:[%s210 + $0xd0] sm:$0xff]
      %v256 = vld [vmem:[%s210 + $0xd8] sm:$0xff]
      %v257 = vld [vmem:[%s210 + $0xe0] sm:$0xff]
      %v258 = vld [vmem:[%s210 + $0xe8] sm:$0xff]
      %v259 = vld [vmem:[%s210 + $0xf0] sm:$0xff]
      %v260 = vld [vmem:[%s210 + $0xf8] sm:$0xff]
      %v261 = vld [vmem:[%s215] sm:$0xf]
      %v262 = vld [vmem:[%s215 + $0x4] sm:$0xf]
      %v263 = vld [vmem:[%s215 + $0x8] sm:$0xf]
      %v264 = vld [vmem:[%s215 + $0xc] sm:$0xf]
      %v265 = vld [vmem:[%s215 + $0x10] sm:$0xf]
      %v266 = vld [vmem:[%s215 + $0x14] sm:$0xf]
      %v267 = vld [vmem:[%s215 + $0x18] sm:$0xf]
      %v268 = vld [vmem:[%s215 + $0x1c] sm:$0xf]
      %v269 = vld [vmem:[%s215 + $0x20] sm:$0xf]
      %v270 = vld [vmem:[%s215 + $0x24] sm:$0xf]
      %v271 = vld [vmem:[%s215 + $0x28] sm:$0xf]
      %v272 = vld [vmem:[%s215 + $0x2c] sm:$0xf]
      %v273 = vld [vmem:[%s215 + $0x30] sm:$0xf]
      %v274 = vld [vmem:[%s215 + $0x34] sm:$0xf]
      %v275 = vld [vmem:[%s215 + $0x38] sm:$0xf]
      %v276 = vld [vmem:[%s215 + $0x3c] sm:$0xf]
      %v277 = vld [vmem:[%s215 + $0x40] sm:$0xf]
      %v278 = vld [vmem:[%s215 + $0x44] sm:$0xf]
      %v279 = vld [vmem:[%s215 + $0x48] sm:$0xf]
      %v280 = vld [vmem:[%s215 + $0x4c] sm:$0xf]
      %v281 = vld [vmem:[%s215 + $0x50] sm:$0xf]
      %v282 = vld [vmem:[%s215 + $0x54] sm:$0xf]
      %v283 = vld [vmem:[%s215 + $0x58] sm:$0xf]
      %v284 = vld [vmem:[%s215 + $0x5c] sm:$0xf]
      %v285 = vld [vmem:[%s215 + $0x60] sm:$0xf]
      %v286 = vld [vmem:[%s215 + $0x64] sm:$0xf]
      %v287 = vld [vmem:[%s215 + $0x68] sm:$0xf]
      %v288 = vld [vmem:[%s215 + $0x6c] sm:$0xf]
      %v289 = vld [vmem:[%s215 + $0x70] sm:$0xf]
      %v290 = vld [vmem:[%s215 + $0x74] sm:$0xf]
      %v291 = vld [vmem:[%s215 + $0x78] sm:$0xf]
      %v292 = vld [vmem:[%s215 + $0x7c] sm:$0xf]
      %v293 = vld [vmem:[%s215 + $0x80] sm:$0xf]
      %v294 = vld [vmem:[%s215 + $0x84] sm:$0xf]
      %v295 = vld [vmem:[%s215 + $0x88] sm:$0xf]
      %v296 = vld [vmem:[%s215 + $0x8c] sm:$0xf]
      %v297 = vld [vmem:[%s215 + $0x90] sm:$0xf]
      %v298 = vld [vmem:[%s215 + $0x94] sm:$0xf]
      %v299 = vld [vmem:[%s215 + $0x98] sm:$0xf]
      %v300 = vld [vmem:[%s215 + $0x9c] sm:$0xf]
      %v301 = vld [vmem:[%s215 + $0xa0] sm:$0xf]
      %v302 = vld [vmem:[%s215 + $0xa4] sm:$0xf]
      %v303 = vld [vmem:[%s215 + $0xa8] sm:$0xf]
      %v304 = vld [vmem:[%s215 + $0xac] sm:$0xf]
      %v305 = vld [vmem:[%s215 + $0xb0] sm:$0xf]
      %v306 = vld [vmem:[%s215 + $0xb4] sm:$0xf]
      %v307 = vld [vmem:[%s215 + $0xb8] sm:$0xf]
      %v308 = vld [vmem:[%s215 + $0xbc] sm:$0xf]
      %v309 = vld [vmem:[%s215 + $0xc0] sm:$0xf]
      %v310 = vld [vmem:[%s215 + $0xc4] sm:$0xf]
      %v311 = vld [vmem:[%s215 + $0xc8] sm:$0xf]
      %v312 = vld [vmem:[%s215 + $0xcc] sm:$0xf]
      %v313 = vld [vmem:[%s215 + $0xd0] sm:$0xf]
      %v314 = vld [vmem:[%s215 + $0xd4] sm:$0xf]
      %v315 = vld [vmem:[%s215 + $0xd8] sm:$0xf]
      %v316 = vld [vmem:[%s215 + $0xdc] sm:$0xf]
      %v317 = vld [vmem:[%s215 + $0xe0] sm:$0xf]
      %v318 = vld [vmem:[%s215 + $0xe4] sm:$0xf]
      %v319 = vld [vmem:[%s215 + $0xe8] sm:$0xf]
      %v320 = vld [vmem:[%s215 + $0xec] sm:$0xf]
      %v321 = vld [vmem:[%s215 + $0xf0] sm:$0xf]
      %v322 = vld [vmem:[%s215 + $0xf4] sm:$0xf]
      %v323 = vld [vmem:[%s215 + $0xf8] sm:$0xf]
      %v324 = vld [vmem:[%s215 + $0xfc] sm:$0xf]
      %v325 = vld [vmem:[%s218] sm:$0x1]
      %v327 = vlaneseq
      %v328 = vshrl.u32 %v327, 7
      %v329 = vsub.s32 0, %v328
      %v330 = vrot.slane %v325, %v329
      %v364 = vunpack.c.l.b16 %v229
      %v365 = vunpack.c.h.b16 %v229
      %v366 = vunpack.c.l.b16 %v230
      %v367 = vunpack.c.h.b16 %v230
      %v368 = vunpack.c.l.b16 %v231
      %v369 = vunpack.c.h.b16 %v231
      %v370 = vunpack.c.l.b16 %v232
      %v371 = vunpack.c.h.b16 %v232
      %v372 = vunpack.c.l.b16 %v233
      %v373 = vunpack.c.h.b16 %v233
      %v374 = vunpack.c.l.b16 %v234
      %v375 = vunpack.c.h.b16 %v234
      %v376 = vunpack.c.l.b16 %v235
      %v377 = vunpack.c.h.b16 %v235
      %v378 = vunpack.c.l.b16 %v236
      %v379 = vunpack.c.h.b16 %v236
      %v380 = vunpack.c.l.b16 %v237
      %v381 = vunpack.c.h.b16 %v237
      %v382 = vunpack.c.l.b16 %v238
      %v383 = vunpack.c.h.b16 %v238
      %v384 = vunpack.c.l.b16 %v239
      %v385 = vunpack.c.h.b16 %v239
      %v386 = vunpack.c.l.b16 %v240
      %v387 = vunpack.c.h.b16 %v240
      %v388 = vunpack.c.l.b16 %v241
      %v389 = vunpack.c.h.b16 %v241
      %v390 = vunpack.c.l.b16 %v242
      %v391 = vunpack.c.h.b16 %v242
      %v392 = vunpack.c.l.b16 %v243
      %v393 = vunpack.c.h.b16 %v243
      %v394 = vunpack.c.l.b16 %v244
      %v395 = vunpack.c.h.b16 %v244
      %v396 = vunpack.c.l.b16 %v245
      %v397 = vunpack.c.h.b16 %v245
      %v398 = vunpack.c.l.b16 %v246
      %v399 = vunpack.c.h.b16 %v246
      %v400 = vunpack.c.l.b16 %v247
      %v401 = vunpack.c.h.b16 %v247
      %v402 = vunpack.c.l.b16 %v248
      %v403 = vunpack.c.h.b16 %v248
      %v404 = vunpack.c.l.b16 %v249
      %v405 = vunpack.c.h.b16 %v249
      %v406 = vunpack.c.l.b16 %v250
      %v407 = vunpack.c.h.b16 %v250
      %v408 = vunpack.c.l.b16 %v251
      %v409 = vunpack.c.h.b16 %v251
      %v410 = vunpack.c.l.b16 %v252
      %v411 = vunpack.c.h.b16 %v252
      %v412 = vunpack.c.l.b16 %v253
      %v413 = vunpack.c.h.b16 %v253
      %v414 = vunpack.c.l.b16 %v254
      %v415 = vunpack.c.h.b16 %v254
      %v416 = vunpack.c.l.b16 %v255
      %v417 = vunpack.c.h.b16 %v255
      %v418 = vunpack.c.l.b16 %v256
      %v419 = vunpack.c.h.b16 %v256
      %v420 = vunpack.c.l.b16 %v257
      %v421 = vunpack.c.h.b16 %v257
      %v422 = vunpack.c.l.b16 %v258
      %v423 = vunpack.c.h.b16 %v258
      %v424 = vunpack.c.l.b16 %v259
      %v425 = vunpack.c.h.b16 %v259
      %v426 = vunpack.c.l.b16 %v260
      %v427 = vunpack.c.h.b16 %v260
      %v428 = vpack.c.b16 %v368, %v364
      %v429 = vpack.c.b16 %v369, %v365
      %v430 = vpack.c.b16 %v370, %v366
      %v431 = vpack.c.b16 %v371, %v367
      %v432 = vpack.c.b16 %v376, %v372
      %v433 = vpack.c.b16 %v377, %v373
      %v434 = vpack.c.b16 %v378, %v374
      %v435 = vpack.c.b16 %v379, %v375
      %v436 = vpack.c.b16 %v384, %v380
      %v437 = vpack.c.b16 %v385, %v381
      %v438 = vpack.c.b16 %v386, %v382
      %v439 = vpack.c.b16 %v387, %v383
      %v440 = vpack.c.b16 %v392, %v388
      %v441 = vpack.c.b16 %v393, %v389
      %v442 = vpack.c.b16 %v394, %v390
      %v443 = vpack.c.b16 %v395, %v391
      %v444 = vpack.c.b16 %v400, %v396
      %v445 = vpack.c.b16 %v401, %v397
      %v446 = vpack.c.b16 %v402, %v398
      %v447 = vpack.c.b16 %v403, %v399
      %v448 = vpack.c.b16 %v408, %v404
      %v449 = vpack.c.b16 %v409, %v405
      %v450 = vpack.c.b16 %v410, %v406
      %v451 = vpack.c.b16 %v411, %v407
      %v452 = vpack.c.b16 %v416, %v412
      %v453 = vpack.c.b16 %v417, %v413
      %v454 = vpack.c.b16 %v418, %v414
      %v455 = vpack.c.b16 %v419, %v415
      %v456 = vpack.c.b16 %v424, %v420
      %v457 = vpack.c.b16 %v425, %v421
      %v458 = vpack.c.b16 %v426, %v422
      %v459 = vpack.c.b16 %v427, %v423
      %v556 = vunpack.c.l.b16 %v261
      %v557 = vunpack.c.l.b16 %v262
      %v558 = vunpack.c.l.b16 %v263
      %v559 = vunpack.c.l.b16 %v264
      %v560 = vunpack.c.l.b16 %v265
      %v561 = vunpack.c.l.b16 %v266
      %v562 = vunpack.c.l.b16 %v267
      %v563 = vunpack.c.l.b16 %v268
      %v564 = vunpack.c.l.b16 %v269
      %v565 = vunpack.c.l.b16 %v270
      %v566 = vunpack.c.l.b16 %v271
      %v567 = vunpack.c.l.b16 %v272
      %v568 = vunpack.c.l.b16 %v273
      %v569 = vunpack.c.l.b16 %v274
      %v570 = vunpack.c.l.b16 %v275
      %v571 = vunpack.c.l.b16 %v276
      %v572 = vunpack.c.l.b16 %v277
      %v573 = vunpack.c.l.b16 %v278
      %v574 = vunpack.c.l.b16 %v279
      %v575 = vunpack.c.l.b16 %v280
      %v576 = vunpack.c.l.b16 %v281
      %v577 = vunpack.c.l.b16 %v282
      %v578 = vunpack.c.l.b16 %v283
      %v579 = vunpack.c.l.b16 %v284
      %v580 = vunpack.c.l.b16 %v285
      %v581 = vunpack.c.l.b16 %v286
      %v582 = vunpack.c.l.b16 %v287
      %v583 = vunpack.c.l.b16 %v288
      %v584 = vunpack.c.l.b16 %v289
      %v585 = vunpack.c.l.b16 %v290
      %v586 = vunpack.c.l.b16 %v291
      %v587 = vunpack.c.l.b16 %v292
      %v588 = vunpack.c.l.b16 %v293
      %v589 = vunpack.c.l.b16 %v294
      %v590 = vunpack.c.l.b16 %v295
      %v591 = vunpack.c.l.b16 %v296
      %v592 = vunpack.c.l.b16 %v297
      %v593 = vunpack.c.l.b16 %v298
      %v594 = vunpack.c.l.b16 %v299
      %v595 = vunpack.c.l.b16 %v300
      %v596 = vunpack.c.l.b16 %v301
      %v597 = vunpack.c.l.b16 %v302
      %v598 = vunpack.c.l.b16 %v303
      %v599 = vunpack.c.l.b16 %v304
      %v600 = vunpack.c.l.b16 %v305
      %v601 = vunpack.c.l.b16 %v306
      %v602 = vunpack.c.l.b16 %v307
      %v603 = vunpack.c.l.b16 %v308
      %v604 = vunpack.c.l.b16 %v309
      %v605 = vunpack.c.l.b16 %v310
      %v606 = vunpack.c.l.b16 %v311
      %v607 = vunpack.c.l.b16 %v312
      %v608 = vunpack.c.l.b16 %v313
      %v609 = vunpack.c.l.b16 %v314
      %v610 = vunpack.c.l.b16 %v315
      %v611 = vunpack.c.l.b16 %v316
      %v612 = vunpack.c.l.b16 %v317
      %v613 = vunpack.c.l.b16 %v318
      %v614 = vunpack.c.l.b16 %v319
      %v615 = vunpack.c.l.b16 %v320
      %v616 = vunpack.c.l.b16 %v321
      %v617 = vunpack.c.l.b16 %v322
      %v618 = vunpack.c.l.b16 %v323
      %v619 = vunpack.c.l.b16 %v324
      %v620 = vpack.c.b16 %v557, %v556
      %v621 = vpack.c.b16 %v559, %v558
      %v622 = vpack.c.b16 %v561, %v560
      %v623 = vpack.c.b16 %v563, %v562
      %v624 = vpack.c.b16 %v565, %v564
      %v625 = vpack.c.b16 %v567, %v566
      %v626 = vpack.c.b16 %v569, %v568
      %v627 = vpack.c.b16 %v571, %v570
      %v628 = vpack.c.b16 %v573, %v572
      %v629 = vpack.c.b16 %v575, %v574
      %v630 = vpack.c.b16 %v577, %v576
      %v631 = vpack.c.b16 %v579, %v578
      %v632 = vpack.c.b16 %v581, %v580
      %v633 = vpack.c.b16 %v583, %v582
      %v634 = vpack.c.b16 %v585, %v584
      %v635 = vpack.c.b16 %v587, %v586
      %v636 = vpack.c.b16 %v589, %v588
      %v637 = vpack.c.b16 %v591, %v590
      %v638 = vpack.c.b16 %v593, %v592
      %v639 = vpack.c.b16 %v595, %v594
      %v640 = vpack.c.b16 %v597, %v596
      %v641 = vpack.c.b16 %v599, %v598
      %v642 = vpack.c.b16 %v601, %v600
      %v643 = vpack.c.b16 %v603, %v602
      %v644 = vpack.c.b16 %v605, %v604
      %v645 = vpack.c.b16 %v607, %v606
      %v646 = vpack.c.b16 %v609, %v608
      %v647 = vpack.c.b16 %v611, %v610
      %v648 = vpack.c.b16 %v613, %v612
      %v649 = vpack.c.b16 %v615, %v614
      %v650 = vpack.c.b16 %v617, %v616
      %v651 = vpack.c.b16 %v619, %v618
      %684 = vmatprep.subr.bf16.mxu0 0
      %685 = vmatpush1.bf16.msra.mxu0 %v620
      %686 = vmatprep.subr.bf16.mxu0 0
      %687 = vmatpush1.bf16.msra.mxu0 %v621
      %688 = vmatprep.subr.bf16.mxu0 0
      %689 = vmatpush1.bf16.msra.mxu0 %v622
      %690 = vmatprep.subr.bf16.mxu0 0
      %691 = vmatpush1.bf16.msra.mxu0 %v623
      %692 = vmatprep.subr.bf16.mxu0 0
      %693 = vmatpush1.bf16.msra.mxu0 %v624
      %694 = vmatprep.subr.bf16.mxu0 0
      %695 = vmatpush1.bf16.msra.mxu0 %v625
      %696 = vmatprep.subr.bf16.mxu0 0
      %697 = vmatpush1.bf16.msra.mxu0 %v626
      %698 = vmatprep.subr.bf16.mxu0 0
      %699 = vmatpush1.bf16.msra.mxu0 %v627
      %700 = vmatprep.subr.bf16.mxu0 0
      %701 = vmatpush1.bf16.msra.mxu0 %v628
      %702 = vmatprep.subr.bf16.mxu0 0
      %703 = vmatpush1.bf16.msra.mxu0 %v629
      %704 = vmatprep.subr.bf16.mxu0 0
      %705 = vmatpush1.bf16.msra.mxu0 %v630
      %706 = vmatprep.subr.bf16.mxu0 0
      %707 = vmatpush1.bf16.msra.mxu0 %v631
      %708 = vmatprep.subr.bf16.mxu0 0
      %709 = vmatpush1.bf16.msra.mxu0 %v632
      %710 = vmatprep.subr.bf16.mxu0 0
      %711 = vmatpush1.bf16.msra.mxu0 %v633
      %712 = vmatprep.subr.bf16.mxu0 0
      %713 = vmatpush1.bf16.msra.mxu0 %v634
      %714 = vmatprep.subr.bf16.mxu0 0
      %715 = vmatpush1.bf16.msra.mxu0 %v635
      %716 = vmatprep.mubr.bf16.mxu0 %v429
      %717 = vmatmul.mubr.bf16.gmra.mrb[0].mxu0 %v428
      %v718 = vpop.f32.mrb[0].mxu0
      %v719 = vadd.f32 %v330, %v718
      %v720 = vpop.f32.mrb[0].mxu0
      %v721 = vpop.f32.mrb[0].mxu0
      %v722 = vadd.f32 %v330, %v721
      %v723 = vpop.f32.mrb[0].mxu0
      %724 = vmatprep.mubr.bf16.mxu0 %v433
      %725 = vmatmul.mubr.bf16.gmra.mrb[0].mxu0 %v432
      %v726 = vpop.f32.mrb[0].mxu0
      %v727 = vadd.f32 %v330, %v726
      %v728 = vpop.f32.mrb[0].mxu0
      %v729 = vpop.f32.mrb[0].mxu0
      %v730 = vadd.f32 %v330, %v729
      %v731 = vpop.f32.mrb[0].mxu0
      %732 = vmatprep.mubr.bf16.mxu0 %v437
      %733 = vmatmul.mubr.bf16.gmra.mrb[0].mxu0 %v436
      %v734 = vpop.f32.mrb[0].mxu0
      %v735 = vadd.f32 %v330, %v734
      %v736 = vpop.f32.mrb[0].mxu0
      %v737 = vpop.f32.mrb[0].mxu0
      %v738 = vadd.f32 %v330, %v737
      %v739 = vpop.f32.mrb[0].mxu0
      %740 = vmatprep.mubr.bf16.mxu0 %v441
      %741 = vmatmul.mubr.bf16.gmra.mrb[0].mxu0 %v440
      %v742 = vpop.f32.mrb[0].mxu0
      %v743 = vadd.f32 %v330, %v742
      %v744 = vpop.f32.mrb[0].mxu0
      %v745 = vpop.f32.mrb[0].mxu0
      %v746 = vadd.f32 %v330, %v745
      %v747 = vpop.f32.mrb[0].mxu0
      %748 = vmatprep.mubr.bf16.mxu0 %v445
      %749 = vmatmul.mubr.bf16.gmra.mrb[0].mxu0 %v444
      %v750 = vpop.f32.mrb[0].mxu0
      %v751 = vadd.f32 %v330, %v750
      %v752 = vpop.f32.mrb[0].mxu0
      %v753 = vpop.f32.mrb[0].mxu0
      %v754 = vadd.f32 %v330, %v753
      %v755 = vpop.f32.mrb[0].mxu0
      %756 = vmatprep.mubr.bf16.mxu0 %v449
      %757 = vmatmul.mubr.bf16.gmra.mrb[0].mxu0 %v448
      %v758 = vpop.f32.mrb[0].mxu0
      %v759 = vadd.f32 %v330, %v758
      %v760 = vpop.f32.mrb[0].mxu0
      %v761 = vpop.f32.mrb[0].mxu0
      %v762 = vadd.f32 %v330, %v761
      %v763 = vpop.f32.mrb[0].mxu0
      %764 = vmatprep.mubr.bf16.mxu0 %v453
      %765 = vmatmul.mubr.bf16.gmra.mrb[0].mxu0 %v452
      %v766 = vpop.f32.mrb[0].mxu0
      %v767 = vadd.f32 %v330, %v766
      %v768 = vpop.f32.mrb[0].mxu0
      %v769 = vpop.f32.mrb[0].mxu0
      %v770 = vadd.f32 %v330, %v769
      %v771 = vpop.f32.mrb[0].mxu0
      %772 = vmatprep.mubr.bf16.mxu0 %v457
      %773 = vmatmul.mubr.bf16.gmra.mrb[0].mxu0 %v456
      %v774 = vpop.f32.mrb[0].mxu0
      %v775 = vadd.f32 %v330, %v774
      %v776 = vpop.f32.mrb[0].mxu0
      %v777 = vpop.f32.mrb[0].mxu0
      %v778 = vadd.f32 %v330, %v777
      %v779 = vpop.f32.mrb[0].mxu0
      %780 = vdwg.mxu0
      %781 = vmatprep.subr.bf16.mxu0 0
      %782 = vmatpush1.bf16.msra.mxu0 %v636
      %783 = vmatprep.subr.bf16.mxu0 0
      %784 = vmatpush1.bf16.msra.mxu0 %v637
      %785 = vmatprep.subr.bf16.mxu0 0
      %786 = vmatpush1.bf16.msra.mxu0 %v638
      %787 = vmatprep.subr.bf16.mxu0 0
      %788 = vmatpush1.bf16.msra.mxu0 %v639
      %789 = vmatprep.subr.bf16.mxu0 0
      %790 = vmatpush1.bf16.msra.mxu0 %v640
      %791 = vmatprep.subr.bf16.mxu0 0
      %792 = vmatpush1.bf16.msra.mxu0 %v641
      %793 = vmatprep.subr.bf16.mxu0 0
      %794 = vmatpush1.bf16.msra.mxu0 %v642
      %795 = vmatprep.subr.bf16.mxu0 0
      %796 = vmatpush1.bf16.msra.mxu0 %v643
      %797 = vmatprep.subr.bf16.mxu0 0
      %798 = vmatpush1.bf16.msra.mxu0 %v644
      %799 = vmatprep.subr.bf16.mxu0 0
      %800 = vmatpush1.bf16.msra.mxu0 %v645
      %801 = vmatprep.subr.bf16.mxu0 0
      %802 = vmatpush1.bf16.msra.mxu0 %v646
      %803 = vmatprep.subr.bf16.mxu0 0
      %804 = vmatpush1.bf16.msra.mxu0 %v647
      %805 = vmatprep.subr.bf16.mxu0 0
      %806 = vmatpush1.bf16.msra.mxu0 %v648
      %807 = vmatprep.subr.bf16.mxu0 0
      %808 = vmatpush1.bf16.msra.mxu0 %v649
      %809 = vmatprep.subr.bf16.mxu0 0
      %810 = vmatpush1.bf16.msra.mxu0 %v650
      %811 = vmatprep.subr.bf16.mxu0 0
      %812 = vmatpush1.bf16.msra.mxu0 %v651
      %813 = vmatprep.mubr.bf16.mxu0 %v431
      %814 = vmatmul.mubr.bf16.gmra.mrb[0].mxu0 %v430
      %v815 = vpop.f32.mrb[0].mxu0
      %v816 = vadd.f32 %v719, %v815
      %v817 = vpop.f32.mrb[0].mxu0
      %v818 = vpop.f32.mrb[0].mxu0
      %v819 = vadd.f32 %v722, %v818
      %v820 = vpop.f32.mrb[0].mxu0
      %821 = vmatprep.mubr.bf16.mxu0 %v435
      %822 = vmatmul.mubr.bf16.gmra.mrb[0].mxu0 %v434
      %v823 = vpop.f32.mrb[0].mxu0
      %v824 = vadd.f32 %v727, %v823
      %v825 = vpop.f32.mrb[0].mxu0
      %v826 = vpop.f32.mrb[0].mxu0
      %v827 = vadd.f32 %v730, %v826
      %v828 = vpop.f32.mrb[0].mxu0
      %829 = vmatprep.mubr.bf16.mxu0 %v439
      %830 = vmatmul.mubr.bf16.gmra.mrb[0].mxu0 %v438
      %v831 = vpop.f32.mrb[0].mxu0
      %v832 = vadd.f32 %v735, %v831
      %v833 = vpop.f32.mrb[0].mxu0
      %v834 = vpop.f32.mrb[0].mxu0
      %v835 = vadd.f32 %v738, %v834
      %v836 = vpop.f32.mrb[0].mxu0
      %837 = vmatprep.mubr.bf16.mxu0 %v443
      %838 = vmatmul.mubr.bf16.gmra.mrb[0].mxu0 %v442
      %v839 = vpop.f32.mrb[0].mxu0
      %v840 = vadd.f32 %v743, %v839
      %v841 = vpop.f32.mrb[0].mxu0
      %v842 = vpop.f32.mrb[0].mxu0
      %v843 = vadd.f32 %v746, %v842
      %v844 = vpop.f32.mrb[0].mxu0
      %845 = vmatprep.mubr.bf16.mxu0 %v447
      %846 = vmatmul.mubr.bf16.gmra.mrb[0].mxu0 %v446
      %v847 = vpop.f32.mrb[0].mxu0
      %v848 = vadd.f32 %v751, %v847
      %v849 = vpop.f32.mrb[0].mxu0
      %v850 = vpop.f32.mrb[0].mxu0
      %v851 = vadd.f32 %v754, %v850
      %v852 = vpop.f32.mrb[0].mxu0
      %853 = vmatprep.mubr.bf16.mxu0 %v451
      %854 = vmatmul.mubr.bf16.gmra.mrb[0].mxu0 %v450
      %v855 = vpop.f32.mrb[0].mxu0
      %v856 = vadd.f32 %v759, %v855
      %v857 = vpop.f32.mrb[0].mxu0
      %v858 = vpop.f32.mrb[0].mxu0
      %v859 = vadd.f32 %v762, %v858
      %v860 = vpop.f32.mrb[0].mxu0
      %861 = vmatprep.mubr.bf16.mxu0 %v455
      %862 = vmatmul.mubr.bf16.gmra.mrb[0].mxu0 %v454
      %v863 = vpop.f32.mrb[0].mxu0
      %v864 = vadd.f32 %v767, %v863
      %v865 = vpop.f32.mrb[0].mxu0
      %v866 = vpop.f32.mrb[0].mxu0
      %v867 = vadd.f32 %v770, %v866
      %v868 = vpop.f32.mrb[0].mxu0
      %869 = vmatprep.mubr.bf16.mxu0 %v459
      %870 = vmatmul.mubr.bf16.gmra.mrb[0].mxu0 %v458
      %v871 = vpop.f32.mrb[0].mxu0
      %v872 = vadd.f32 %v775, %v871
      %v873 = vpop.f32.mrb[0].mxu0
      %v874 = vpop.f32.mrb[0].mxu0
      %v875 = vadd.f32 %v778, %v874
      %v876 = vpop.f32.mrb[0].mxu0
      %877 = vdwg.mxu0
      %v878 = vmax.f32 %v816, 0.0
      %v879 = vmax.f32 %v819, 0.0
      %v880 = vmax.f32 %v824, 0.0
      %v881 = vmax.f32 %v827, 0.0
      %v882 = vmax.f32 %v832, 0.0
      %v883 = vmax.f32 %v835, 0.0
      %v884 = vmax.f32 %v840, 0.0
      %v885 = vmax.f32 %v843, 0.0
      %v886 = vmax.f32 %v848, 0.0
      %v887 = vmax.f32 %v851, 0.0
      %v888 = vmax.f32 %v856, 0.0
      %v889 = vmax.f32 %v859, 0.0
      %v890 = vmax.f32 %v864, 0.0
      %v891 = vmax.f32 %v867, 0.0
      %v892 = vmax.f32 %v872, 0.0
      %v893 = vmax.f32 %v875, 0.0
      %894 = vst [vmem:[%s226] sm:$0xff] %v878
      %895 = vst [vmem:[%s226 + $0x8] sm:$0xff] %v879
      %896 = vst [vmem:[%s226 + $0x10] sm:$0xff] %v880
      %897 = vst [vmem:[%s226 + $0x18] sm:$0xff] %v881
      %898 = vst [vmem:[%s226 + $0x20] sm:$0xff] %v882
      %899 = vst [vmem:[%s226 + $0x28] sm:$0xff] %v883
      %900 = vst [vmem:[%s226 + $0x30] sm:$0xff] %v884
      %901 = vst [vmem:[%s226 + $0x38] sm:$0xff] %v885
      %902 = vst [vmem:[%s226 + $0x40] sm:$0xff] %v886
      %903 = vst [vmem:[%s226 + $0x48] sm:$0xff] %v887
      %904 = vst [vmem:[%s226 + $0x50] sm:$0xff] %v888
      %905 = vst [vmem:[%s226 + $0x58] sm:$0xff] %v889
      %906 = vst [vmem:[%s226 + $0x60] sm:$0xff] %v890
      %907 = vst [vmem:[%s226 + $0x68] sm:$0xff] %v891
      %908 = vst [vmem:[%s226 + $0x70] sm:$0xff] %v892
      %909 = vst [vmem:[%s226 + $0x78] sm:$0xff] %v893
      %s910 = smul.u32 16, %s18
      %p911 = scmp.lt.s32.totalorder %s910, 95
      %s912 = scalar_select %p911, %s910, 95
      %p913 = scmp.lt.s32.totalorder %s19, 0
      %s914 = scalar_select %p913, %s19, 0
      %s915 = sadd.s32 %s914, %s912
      %s916 = smul.addr %s915, 8
      %s917 = scalar_lea.vmem %s3, %s916
      // Predicated region
      $region33: #{vsnet_forward.12} parent=31 // pred_check
        %p918 = pneg %p124
      $region34: #{vsnet_forward.12} parent=31 // pred_check_branch
        %920 = sbr.rel (%p918) target = $region36
      $region35: #{vsnet_forward.12} parent=31 // pred_region
        %s921 = smul.u32 16, %s18
      $region36: #{vsnet_forward.12} parent=31 // pred_fallthru
        _
    $region32: #{vsnet_forward.12} parent=5 // pred_fallthru
      _
    %p922 = scmp.le.s32.totalorder 2, %s9
    // Predicated region
    $region37: #{vsnet_forward.12} parent=5 // pred_check
      %p923 = pneg %p922
    $region38: #{vsnet_forward.12} parent=5 // pred_check_branch
      %925 = sbr.rel (%p923) target = $region40
    $region39: #{vsnet_forward.12} parent=5 // pred_region
      %s926 = ssub.s32 %s9, 2
      // Predicated region
      $region41: #{vsnet_forward.12} parent=39 // pred_check
        %p927 = pneg %p130
      $region42: #{vsnet_forward.12} parent=39 // pred_check_branch
        %929 = sbr.rel (%p927) target = $region44
      $region43: #{vsnet_forward.12} parent=39 // pred_region
        %s930 = smul.u32 16, %s20
        %p931 = scmp.lt.s32.totalorder %s930, 95
        %s932 = scalar_select %p931, %s930, 95
        %p933 = scmp.lt.s32.totalorder %s21, 0
        %s934 = scalar_select %p933, %s21, 0
        %s935 = sadd.s32 %s934, %s932
        %s936 = smul.addr %s935, 8
        %s937 = scalar_lea.vmem %s3, %s936
      $region44: #{vsnet_forward.12} parent=39 // pred_fallthru
        _
    $region40: #{vsnet_forward.12} parent=5 // pred_fallthru
      _
  $region6: #{vsnet_forward.12} parent=0 // loop_footer
    %s13 = sadd.s32 1, %s9
  $region7: #{vsnet_forward.12} parent=0 // loop_footer_branch
    %8 = sbr.rel target = $region3
  $region8: #{vsnet_forward.12} parent=0 // loop_exit
    _

// kernel: vsnet_forward.13
$region0: #{vsnet_forward.13}
  #allocation0 [shape = 'u32[]', space=smem, size = 0x4, offset = 0x4, fixed_abs, tag = 'smem constant byte address 0x4 - core index']
  #allocation1 [shape = 'u32[144,128]{1,0:T(1,128)}', space=vmem, size = 0x12000, scoped, tag = 'internal scratch']
  %s0 = inlined_call_operand.vmem [shape: f32[4,1120], index: 0, kind: input, shape index: {}]
  %s1 = inlined_call_operand.vmem [shape: f32[4,1120], index: 1, kind: input, shape index: {}]
  %s2 = inlined_call_operand.vmem [shape: f32[4,1120], index: 2, kind: input, shape index: {}]
  %s3 = inlined_call_operand.vmem [shape: f32[4,1120], index: 3, kind: input, shape index: {}]
  %s4 = inlined_call_operand.vmem [shape: f32[4,1120], index: 4, kind: input, shape index: {}]
  %s5 = inlined_call_operand.vmem [shape: f32[4,1120], index: 5, kind: input, shape index: {}]
  %s6 = inlined_call_operand.vmem [shape: f32[4,1120], index: 6, kind: input, shape index: {}]
  %s7 = inlined_call_operand.vmem [shape: f32[4,1120], index: 7, kind: input, shape index: {}]
  %s8 = inlined_call_operand.vmem [shape: f32[4,1120], index: 8, kind: input, shape index: {}]
  %s9 = inlined_call_operand.vmem [shape: f32[4,1120], index: 9, kind: output, shape index: {}]
  %s10 = sld [smem:[#allocation0]]
  $region46: #{vsnet_forward.13} parent=0
    _
  %s12 = ssub.s32 1, %s10
  %s13 = scalar_select 0, %s12, %s10
  // Predicated region
  $region2: #{vsnet_forward.13} parent=0 // pred_check
    _
  $region3: #{vsnet_forward.13} parent=0 // pred_check_branch
    %15 = sbr.rel (0) target = $region5
  $region4: #{vsnet_forward.13} parent=0 // pred_region
    _
  $region5: #{vsnet_forward.13} parent=0 // pred_fallthru
    _
  // Predicated region
  $region6: #{vsnet_forward.13} parent=0 // pred_check
    _
  $region7: #{vsnet_forward.13} parent=0 // pred_check_branch
    %17 = sbr.rel (0) target = $region9
  $region8: #{vsnet_forward.13} parent=0 // pred_region
    _
  $region9: #{vsnet_forward.13} parent=0 // pred_fallthru
    _
  // Predicated region
  $region10: #{vsnet_forward.13} parent=0 // pred_check
    _
  $region11: #{vsnet_forward.13} parent=0 // pred_check_branch
    %19 = sbr.rel (0) target = $region13
  $region12: #{vsnet_forward.13} parent=0 // pred_region
    _
  $region13: #{vsnet_forward.13} parent=0 // pred_fallthru
    _
  // Predicated region
  $region14: #{vsnet_forward.13} parent=0 // pred_check
    _
  $region15: #{vsnet_forward.13} parent=0 // pred_check_branch
    %21 = sbr.rel (0) target = $region17
  $region16: #{vsnet_forward.13} parent=0 // pred_region
    _
  $region17: #{vsnet_forward.13} parent=0 // pred_fallthru
    _
  // Predicated region
  $region18: #{vsnet_forward.13} parent=0 // pred_check
    _
  $region19: #{vsnet_forward.13} parent=0 // pred_check_branch
    %23 = sbr.rel (0) target = $region21
  $region20: #{vsnet_forward.13} parent=0 // pred_region
    _
  $region21: #{vsnet_forward.13} parent=0 // pred_fallthru
    _
  // Predicated region
  $region22: #{vsnet_forward.13} parent=0 // pred_check
    _
  $region23: #{vsnet_forward.13} parent=0 // pred_check_branch
    %25 = sbr.rel (0) target = $region25
  $region24: #{vsnet_forward.13} parent=0 // pred_region
    _
  $region25: #{vsnet_forward.13} parent=0 // pred_fallthru
    _
  // Predicated region
  $region26: #{vsnet_forward.13} parent=0 // pred_check
    _
  $region27: #{vsnet_forward.13} parent=0 // pred_check_branch
    %27 = sbr.rel (0) target = $region29
  $region28: #{vsnet_forward.13} parent=0 // pred_region
    _
  $region29: #{vsnet_forward.13} parent=0 // pred_fallthru
    _
  // Predicated region
  $region30: #{vsnet_forward.13} parent=0 // pred_check
    _
  $region31: #{vsnet_forward.13} parent=0 // pred_check_branch
    %29 = sbr.rel (0) target = $region33
  $region32: #{vsnet_forward.13} parent=0 // pred_region
    _
  $region33: #{vsnet_forward.13} parent=0 // pred_fallthru
    _
  // Predicated region
  $region34: #{vsnet_forward.13} parent=0 // pred_check
    _
  $region35: #{vsnet_forward.13} parent=0 // pred_check_branch
    %31 = sbr.rel (0) target = $region37
  $region36: #{vsnet_forward.13} parent=0 // pred_region
    _
  $region37: #{vsnet_forward.13} parent=0 // pred_fallthru
    _
  %v32 = vld [vmem:[%s0] sm:$0xff]
  %v33 = vld [vmem:[%s0 + $0x8] sm:$0xff]
  %v34 = vld [vmem:[%s0 + $0x10] sm:$0xff]
  %v35 = vld [vmem:[%s0 + $0x18] sm:$0xff]
  %v36 = vld [vmem:[%s0 + $0x20] sm:$0xf]
  %v37 = vld [vmem:[%s1] sm:$0xff]
  %v38 = vld [vmem:[%s1 + $0x8] sm:$0xff]
  %v39 = vld [vmem:[%s1 + $0x10] sm:$0xff]
  %v40 = vld [vmem:[%s1 + $0x18] sm:$0xff]
  %v41 = vld [vmem:[%s1 + $0x20] sm:$0xf]
  %v42 = vmax.f32 %v32, %v37
  %v43 = vmax.f32 %v33, %v38
  %v44 = vmax.f32 %v34, %v39
  %v45 = vmax.f32 %v35, %v40
  %v46 = vmax.f32 %v36, %v41
  %v47 = vld [vmem:[%s2] sm:$0xff]
  %v48 = vld [vmem:[%s2 + $0x8] sm:$0xff]
  %v49 = vld [vmem:[%s2 + $0x10] sm:$0xff]
  %v50 = vld [vmem:[%s2 + $0x18] sm:$0xff]
  %v51 = vld [vmem:[%s2 + $0x20] sm:$0xf]
  %v52 = vmax.f32 %v42, %v47
  %v53 = vmax.f32 %v43, %v48
  %v54 = vmax.f32 %v44, %v49
  %v55 = vmax.f32 %v45, %v50
  %v56 = vmax.f32 %v46, %v51
  %v57 = vld [vmem:[%s3] sm:$0xff]
  %v58 = vld [vmem:[%s3 + $0x8] sm:$0xff]
  %v59 = vld [vmem:[%s3 + $0x10] sm:$0xff]
  %v60 = vld [vmem:[%s3 + $0x18] sm:$0xff]
  %v61 = vld [vmem:[%s3 + $0x20] sm:$0xf]
  %v62 = vmax.f32 %v52, %v57
  %v63 = vmax.f32 %v53, %v58
  %v64 = vmax.f32 %v54, %v59
  %v65 = vmax.f32 %v55, %v60
  %v66 = vmax.f32 %v56, %v61
  %v67 = vld [vmem:[%s4] sm:$0xff]
  %v68 = vld [vmem:[%s4 + $0x8] sm:$0xff]
  %v69 = vld [vmem:[%s4 + $0x10] sm:$0xff]
  %v70 = vld [vmem:[%s4 + $0x18] sm:$0xff]
  %v71 = vld [vmem:[%s4 + $0x20] sm:$0xf]
  %v72 = vmax.f32 %v62, %v67
  %v73 = vmax.f32 %v63, %v68
  %v74 = vmax.f32 %v64, %v69
  %v75 = vmax.f32 %v65, %v70
  %v76 = vmax.f32 %v66, %v71
  %v77 = vld [vmem:[%s5] sm:$0xff]
  %v78 = vld [vmem:[%s5 + $0x8] sm:$0xff]
  %v79 = vld [vmem:[%s5 + $0x10] sm:$0xff]
  %v80 = vld [vmem:[%s5 + $0x18] sm:$0xff]
  %v81 = vld [vmem:[%s5 + $0x20] sm:$0xf]
  %v82 = vmax.f32 %v72, %v77
  %v83 = vmax.f32 %v73, %v78
  %v84 = vmax.f32 %v74, %v79
  %v85 = vmax.f32 %v75, %v80
  %v86 = vmax.f32 %v76, %v81
  %v87 = vld [vmem:[%s6] sm:$0xff]
  %v88 = vld [vmem:[%s6 + $0x8] sm:$0xff]
  %v89 = vld [vmem:[%s6 + $0x10] sm:$0xff]
  %v90 = vld [vmem:[%s6 + $0x18] sm:$0xff]
  %v91 = vld [vmem:[%s6 + $0x20] sm:$0xf]
  %v92 = vmax.f32 %v82, %v87
  %v93 = vmax.f32 %v83, %v88
  %v94 = vmax.f32 %v84, %v89
  %v95 = vmax.f32 %v85, %v90
  %v96 = vmax.f32 %v86, %v91
  %v97 = vld [vmem:[%s7] sm:$0xff]
  %v98 = vld [vmem:[%s7 + $0x8] sm:$0xff]
  %v99 = vld [vmem:[%s7 + $0x10] sm:$0xff]
  %v100 = vld [vmem:[%s7 + $0x18] sm:$0xff]
  %v101 = vld [vmem:[%s7 + $0x20] sm:$0xf]
  %v102 = vmax.f32 %v92, %v97
  %v103 = vmax.f32 %v93, %v98
  %v104 = vmax.f32 %v94, %v99
  %v105 = vmax.f32 %v95, %v100
  %v106 = vmax.f32 %v96, %v101
  %v107 = vld [vmem:[%s8] sm:$0xff]
  %v108 = vld [vmem:[%s8 + $0x8] sm:$0xff]
  %v109 = vld [vmem:[%s8 + $0x10] sm:$0xff]
  %v110 = vld [vmem:[%s8 + $0x18] sm:$0xff]
  %v111 = vld [vmem:[%s8 + $0x20] sm:$0xf]
  %v112 = vmax.f32 %v102, %v107
  %v113 = vmax.f32 %v103, %v108
  %v114 = vmax.f32 %v104, %v109
  %v115 = vmax.f32 %v105, %v110
  %v116 = vmax.f32 %v106, %v111
  %117 = vst [vmem:[%s9] sm:$0xff] %v112
  %118 = vst [vmem:[%s9 + $0x8] sm:$0xff] %v113
  %119 = vst [vmem:[%s9 + $0x10] sm:$0xff] %v114
  %120 = vst [vmem:[%s9 + $0x18] sm:$0xff] %v115
  %vm121 = vcmask 781312
  %122 = vst.msk [vmem:[%s9 + $0x20] sm:$0xf] %vm121, %v116
  // Predicated region
  $region38: #{vsnet_forward.13} parent=0 // pred_check
    _
  $region39: #{vsnet_forward.13} parent=0 // pred_check_branch
    %124 = sbr.rel (0) target = $region41
  $region40: #{vsnet_forward.13} parent=0 // pred_region
    _
  $region41: #{vsnet_forward.13} parent=0 // pred_fallthru
    _
  // Predicated region
  $region42: #{vsnet_forward.13} parent=0 // pred_check
    _
  $region43: #{vsnet_forward.13} parent=0 // pred_check_branch
    %126 = sbr.rel (0) target = $region45
  $region44: #{vsnet_forward.13} parent=0 // pred_region
    _
  $region45: #{vsnet_forward.13} parent=0 // pred_fallthru
    _

// kernel: vsnet_forward.14
$region0: #{vsnet_forward.14}
  #allocation0 [shape = 'u32[]', space=smem, size = 0x4, offset = 0x4, fixed_abs, tag = 'smem constant byte address 0x4 - core index']
  #allocation1 [shape = 'u32[144,128]{1,0:T(1,128)}', space=vmem, size = 0x12000, scoped, tag = 'internal scratch']
  %s0 = inlined_call_operand.vmem [shape: bf16[256,384], index: 0, kind: input, shape index: {}]
  %s1 = inlined_call_operand.vmem [shape: bf16[384,128], index: 1, kind: input, shape index: {}]
  %s2 = inlined_call_operand.vmem [shape: f32[1,128], index: 2, kind: input, shape index: {}]
  %s3 = inlined_call_operand.vmem [shape: f32[256,128], index: 3, kind: output, shape index: {}]
  %s4 = sld [smem:[#allocation0]]
  $region45: #{vsnet_forward.14} parent=0
    _
  %s6 = ssub.s32 1, %s4
  %s7 = scalar_select 0, %s6, %s4
  loop: start=0, step=1, limit=4
  $region2: #{vsnet_forward.14} parent=0 // loop_pre_header
    _
  $region3: #{vsnet_forward.14} parent=0 // loop_header
    %s9 = sphi 0, %s13
    %p10 = scmp.ge.s32.totalorder %s9, 4
    %s16 = sphi 0, %s28
    %s17 = sphi 0, %s24
    %s18 = sphi 0, %s16
    %s19 = sphi 0, %s17
    %s20 = sphi 0, %s18
    %s21 = sphi 0, %s19
    %s31 = sphi 0, %s33
    %s34 = sphi 0, %s31
    %s35 = sphi 0, %s34
    %s51 = sphi 0, %s35
    %s57 = sphi 0, %s59
    %s60 = sphi 0, %s57
    %s61 = sphi 0, %s60
    %s77 = sphi 0, %s61
    %s83 = sphi 0, %s85
    %s86 = sphi 0, %s83
    %s87 = sphi 0, %s86
    %s103 = sphi 0, %s87
    %s111 = sphi 0, %s113
    %s114 = sphi 0, %s111
    %s115 = sphi 0, %s114
    %s131 = sphi 0, %s115
  $region4: #{vsnet_forward.14} parent=0 // loop_header_branch
    %12 = sbr.rel (%p10) target = $region8
  $region5: #{vsnet_forward.14} parent=0 // loop_body
    %s14 = ssub.s32 %s9, 1
    %s15 = ssub.s32 %s9, 2
    %s22 = sadd.s32 1, %s17
    %p23 = scmp.ge.s32.totalorder %s22, 1
    %s24 = scalar_select %p23, 0, %s22
    %s25 = sadd.s32 1, %s16
    %s26 = scalar_select %p23, %s25, %s16
    %p27 = scmp.ge.s32.totalorder %s26, 2
    %s28 = scalar_select %p27, 0, %s26
    %s29 = ssub.s32 %s16, %s28
    %p30 = scmp.eq.s32.totalorder %s29, 0
    %s32 = sadd.s32 %s31, 1
    %s33 = scalar_select %p30, %s31, %s32
    %p36 = pneg %p30
    %p37 = scmp.eq.s32.totalorder %s9, 1
    %p38 = por %p36, %p37
    %p39 = scmp.ne.s32.totalorder %s31, %s34
    %p40 = scmp.eq.s32.totalorder %s9, 0
    %p41 = por %p39, %p40
    %p42 = scmp.ne.s32.totalorder %s31, %s34
    %p43 = scmp.eq.s32.totalorder %s14, 1
    %p44 = por %p42, %p43
    %p45 = scmp.ne.s32.totalorder %s34, %s35
    %p46 = scmp.eq.s32.totalorder %s14, 0
    %p47 = por %p45, %p46
    %p48 = scmp.ne.s32.totalorder %s34, %s35
    %p49 = scmp.eq.s32.totalorder %s15, 1
    %p50 = por %p48, %p49
    %p52 = scmp.ne.s32.totalorder %s35, %s51
    %p53 = scmp.eq.s32.totalorder %s15, 0
    %p54 = por %p52, %p53
    %s55 = ssub.s32 %s17, %s24
    %p56 = scmp.eq.s32.totalorder %s55, 0
    %s58 = sadd.s32 %s57, 1
    %s59 = scalar_select %p56, %s57, %s58
    %p62 = pneg %p56
    %p63 = scmp.eq.s32.totalorder %s9, 1
    %p64 = por %p62, %p63
    %p65 = scmp.ne.s32.totalorder %s57, %s60
    %p66 = scmp.eq.s32.totalorder %s9, 0
    %p67 = por %p65, %p66
    %p68 = scmp.ne.s32.totalorder %s57, %s60
    %p69 = scmp.eq.s32.totalorder %s14, 1
    %p70 = por %p68, %p69
    %p71 = scmp.ne.s32.totalorder %s60, %s61
    %p72 = scmp.eq.s32.totalorder %s14, 0
    %p73 = por %p71, %p72
    %p74 = scmp.ne.s32.totalorder %s60, %s61
    %p75 = scmp.eq.s32.totalorder %s15, 1
    %p76 = por %p74, %p75
    %p78 = scmp.ne.s32.totalorder %s61, %s77
    %p79 = scmp.eq.s32.totalorder %s15, 0
    %p80 = por %p78, %p79
    %s81 = ssub.s32 %s17, %s24
    %p82 = scmp.eq.s32.totalorder %s81, 0
    %s84 = sadd.s32 %s83, 1
    %s85 = scalar_select %p82, %s83, %s84
    %p88 = pneg %p82
    %p89 = scmp.eq.s32.totalorder %s9, 1
    %p90 = por %p88, %p89
    %p91 = scmp.ne.s32.totalorder %s83, %s86
    %p92 = scmp.eq.s32.totalorder %s9, 0
    %p93 = por %p91, %p92
    %p94 = scmp.ne.s32.totalorder %s83, %s86
    %p95 = scmp.eq.s32.totalorder %s14, 1
    %p96 = por %p94, %p95
    %p97 = scmp.ne.s32.totalorder %s86, %s87
    %p98 = scmp.eq.s32.totalorder %s14, 0
    %p99 = por %p97, %p98
    %p100 = scmp.ne.s32.totalorder %s86, %s87
    %p101 = scmp.eq.s32.totalorder %s15, 1
    %p102 = por %p100, %p101
    %p104 = scmp.ne.s32.totalorder %s87, %s103
    %p105 = scmp.eq.s32.totalorder %s15, 0
    %p106 = por %p104, %p105
    %s107 = ssub.s32 %s16, %s28
    %s108 = ssub.s32 %s17, %s24
    %s109 = sor.u32 %s107, %s108
    %p110 = scmp.eq.s32.totalorder %s109, 0
    %s112 = sadd.s32 %s111, 1
    %s113 = scalar_select %p110, %s111, %s112
    %p116 = pneg %p110
    %p117 = scmp.eq.s32.totalorder %s9, 1
    %p118 = por %p116, %p117
    %p119 = scmp.ne.s32.totalorder %s111, %s114
    %p120 = scmp.eq.s32.totalorder %s9, 0
    %p121 = por %p119, %p120
    %p122 = scmp.ne.s32.totalorder %s111, %s114
    %p123 = scmp.eq.s32.totalorder %s14, 1
    %p124 = por %p122, %p123
    %p125 = scmp.ne.s32.totalorder %s114, %s115
    %p126 = scmp.eq.s32.totalorder %s14, 0
    %p127 = por %p125, %p126
    %p128 = scmp.ne.s32.totalorder %s114, %s115
    %p129 = scmp.eq.s32.totalorder %s15, 1
    %p130 = por %p128, %p129
    %p132 = scmp.ne.s32.totalorder %s115, %s131
    %p133 = scmp.eq.s32.totalorder %s15, 0
    %p134 = por %p132, %p133
    %p135 = scmp.le.s32.totalorder 1, %s9
    %p136 = scmp.lt.s32.totalorder %s9, 3
    %p137 = pnand %p135, %p136
    %p138 = pneg %p137
    // Predicated region
    $region9: #{vsnet_forward.14} parent=5 // pred_check
      _
    $region10: #{vsnet_forward.14} parent=5 // pred_check_branch
      %140 = sbr.rel (%p137) target = $region12
    $region11: #{vsnet_forward.14} parent=5 // pred_region
      %s141 = ssub.s32 %s9, 1
      // Predicated region
      $region13: #{vsnet_forward.14} parent=11 // pred_check
        %p142 = pneg %p73
      $region14: #{vsnet_forward.14} parent=11 // pred_check_branch
        %144 = sbr.rel (%p142) target = $region16
      $region15: #{vsnet_forward.14} parent=11 // pred_region
        %p145 = scmp.lt.s32.totalorder %s19, 0
        %s146 = scalar_select %p145, %s19, 0
        %s147 = smul.addr %s146, 4
        %s148 = scalar_lea.vmem %s1, %s147
      $region16: #{vsnet_forward.14} parent=11 // pred_fallthru
        _
      // Predicated region
      $region17: #{vsnet_forward.14} parent=11 // pred_check
        %p149 = pneg %p99
      $region18: #{vsnet_forward.14} parent=11 // pred_check_branch
        %151 = sbr.rel (%p149) target = $region20
      $region19: #{vsnet_forward.14} parent=11 // pred_region
        %p152 = scmp.lt.s32.totalorder %s19, 0
        %s153 = scalar_select %p152, %s19, 0
        %s154 = scalar_lea.vmem %s2, %s153
      $region20: #{vsnet_forward.14} parent=11 // pred_fallthru
        _
    $region12: #{vsnet_forward.14} parent=5 // pred_fallthru
      _
    %p155 = scmp.lt.s32.totalorder %s9, 2
    // Predicated region
    $region21: #{vsnet_forward.14} parent=5 // pred_check
      %p156 = pneg %p155
    $region22: #{vsnet_forward.14} parent=5 // pred_check_branch
      %158 = sbr.rel (%p156) target = $region24
    $region23: #{vsnet_forward.14} parent=5 // pred_region
      // Predicated region
      $region25: #{vsnet_forward.14} parent=23 // pred_check
        %p159 = pneg %p41
      $region26: #{vsnet_forward.14} parent=23 // pred_check_branch
        %161 = sbr.rel (%p159) target = $region28
      $region27: #{vsnet_forward.14} parent=23 // pred_region
        %s162 = smul.u32 16, %s16
        %p163 = scmp.lt.s32.totalorder %s162, 31
        %s164 = scalar_select %p163, %s162, 31
        %s165 = smul.addr %s164, 3
        %s166 = smul.addr %s165, 4
        %s167 = scalar_lea.vmem %s0, %s166
        %s168 = smul.u32 16, %s16
      $region28: #{vsnet_forward.14} parent=23 // pred_fallthru
        _
    $region24: #{vsnet_forward.14} parent=5 // pred_fallthru
      _
    %p169 = scmp.le.s32.totalorder 1, %s9
    %p170 = scmp.lt.s32.totalorder %s9, 3
    %p171 = pnand %p169, %p170
    %p172 = pneg %p171
    // Predicated region
    $region29: #{vsnet_forward.14} parent=5 // pred_check
      _
    $region30: #{vsnet_forward.14} parent=5 // pred_check_branch
      %174 = sbr.rel (%p171) target = $region32
    $region31: #{vsnet_forward.14} parent=5 // pred_region
      %s175 = ssub.s32 %s9, 1
      %s176 = smul.u32 16, %s18
      %p177 = scmp.lt.s32.totalorder %s176, 31
      %s178 = scalar_select %p177, %s176, 31
      %s179 = smul.addr %s178, 3
      %s180 = smul.addr %s179, 4
      %s181 = scalar_lea.vmem %s0, %s180
      %p182 = pneg %p47
      %p183 = pneg %p44
      %p184 = scmp.lt.s32.totalorder %s19, 0
      %s185 = scalar_select %p184, %s19, 0
      %s186 = smul.addr %s185, 4
      %s187 = scalar_lea.vmem %s1, %s186
      %p188 = pneg %p73
      %p189 = pneg %p70
      %p190 = scmp.lt.s32.totalorder %s19, 0
      %s191 = scalar_select %p190, %s19, 0
      %s192 = scalar_lea.vmem %s2, %s191
      %p193 = pneg %p99
      %p194 = pneg %p96
      %p195 = pneg %p127
      %p196 = pneg %p124
      %s197 = smul.u32 16, %s18
      %p198 = scmp.lt.s32.totalorder %s197, 31
      %s199 = scalar_select %p198, %s197, 31
      %p200 = scmp.lt.s32.totalorder %s19, 0
      %s201 = scalar_select %p200, %s19, 0
      %s202 = sadd.s32 %s201, %s199
      %s203 = smul.addr %s202, 8
      %s204 = scalar_lea.vmem %s3, %s203
      %s205 = smul.u32 16, %s18
      %p206 = scmp.lt.s32.totalorder %s205, 31
      %s207 = scalar_select %p206, %s205, 31
      %s208 = smul.addr %s207, 3
      %s209 = smul.addr %s208, 4
      %s210 = scalar_lea.vmem %s0, %s209
      %s211 = smul.u32 16, %s18
      %p212 = scmp.lt.s32.totalorder %s19, 0
      %s213 = scalar_select %p212, %s19, 0
      %s214 = smul.addr %s213, 4
      %s215 = scalar_lea.vmem %s1, %s214
      %p216 = scmp.lt.s32.totalorder %s19, 0
      %s217 = scalar_select %p216, %s19, 0
      %s218 = scalar_lea.vmem %s2, %s217
      %s219 = smul.u32 16, %s18
      %p220 = scmp.lt.s32.totalorder %s219, 31
      %s221 = scalar_select %p220, %s219, 31
      %p222 = scmp.lt.s32.totalorder %s19, 0
      %s223 = scalar_select %p222, %s19, 0
      %s224 = sadd.s32 %s223, %s221
      %s225 = smul.addr %s224, 8
      %s226 = scalar_lea.vmem %s3, %s225
      %s227 = smul.u32 16, %s18
      %v229 = vld [vmem:[%s210] sm:$0xff]
      %v230 = vld [vmem:[%s210 + $0x8] sm:$0xf]
      %v231 = vld [vmem:[%s210 + $0xc] sm:$0xff]
      %v232 = vld [vmem:[%s210 + $0x14] sm:$0xf]
      %v233 = vld [vmem:[%s210 + $0x18] sm:$0xff]
      %v234 = vld [vmem:[%s210 + $0x20] sm:$0xf]
      %v235 = vld [vmem:[%s210 + $0x24] sm:$0xff]
      %v236 = vld [vmem:[%s210 + $0x2c] sm:$0xf]
      %v237 = vld [vmem:[%s210 + $0x30] sm:$0xff]
      %v238 = vld [vmem:[%s210 + $0x38] sm:$0xf]
      %v239 = vld [vmem:[%s210 + $0x3c] sm:$0xff]
      %v240 = vld [vmem:[%s210 + $0x44] sm:$0xf]
      %v241 = vld [vmem:[%s210 + $0x48] sm:$0xff]
      %v242 = vld [vmem:[%s210 + $0x50] sm:$0xf]
      %v243 = vld [vmem:[%s210 + $0x54] sm:$0xff]
      %v244 = vld [vmem:[%s210 + $0x5c] sm:$0xf]
      %v245 = vld [vmem:[%s210 + $0x60] sm:$0xff]
      %v246 = vld [vmem:[%s210 + $0x68] sm:$0xf]
      %v247 = vld [vmem:[%s210 + $0x6c] sm:$0xff]
      %v248 = vld [vmem:[%s210 + $0x74] sm:$0xf]
      %v249 = vld [vmem:[%s210 + $0x78] sm:$0xff]
      %v250 = vld [vmem:[%s210 + $0x80] sm:$0xf]
      %v251 = vld [vmem:[%s210 + $0x84] sm:$0xff]
      %v252 = vld [vmem:[%s210 + $0x8c] sm:$0xf]
      %v253 = vld [vmem:[%s210 + $0x90] sm:$0xff]
      %v254 = vld [vmem:[%s210 + $0x98] sm:$0xf]
      %v255 = vld [vmem:[%s210 + $0x9c] sm:$0xff]
      %v256 = vld [vmem:[%s210 + $0xa4] sm:$0xf]
      %v257 = vld [vmem:[%s210 + $0xa8] sm:$0xff]
      %v258 = vld [vmem:[%s210 + $0xb0] sm:$0xf]
      %v259 = vld [vmem:[%s210 + $0xb4] sm:$0xff]
      %v260 = vld [vmem:[%s210 + $0xbc] sm:$0xf]
      %v261 = vld [vmem:[%s215] sm:$0xf]
      %v262 = vld [vmem:[%s215 + $0x4] sm:$0xf]
      %v263 = vld [vmem:[%s215 + $0x8] sm:$0xf]
      %v264 = vld [vmem:[%s215 + $0xc] sm:$0xf]
      %v265 = vld [vmem:[%s215 + $0x10] sm:$0xf]
      %v266 = vld [vmem:[%s215 + $0x14] sm:$0xf]
      %v267 = vld [vmem:[%s215 + $0x18] sm:$0xf]
      %v268 = vld [vmem:[%s215 + $0x1c] sm:$0xf]
      %v269 = vld [vmem:[%s215 + $0x20] sm:$0xf]
      %v270 = vld [vmem:[%s215 + $0x24] sm:$0xf]
      %v271 = vld [vmem:[%s215 + $0x28] sm:$0xf]
      %v272 = vld [vmem:[%s215 + $0x2c] sm:$0xf]
      %v273 = vld [vmem:[%s215 + $0x30] sm:$0xf]
      %v274 = vld [vmem:[%s215 + $0x34] sm:$0xf]
      %v275 = vld [vmem:[%s215 + $0x38] sm:$0xf]
      %v276 = vld [vmem:[%s215 + $0x3c] sm:$0xf]
      %v277 = vld [vmem:[%s215 + $0x40] sm:$0xf]
      %v278 = vld [vmem:[%s215 + $0x44] sm:$0xf]
      %v279 = vld [vmem:[%s215 + $0x48] sm:$0xf]
      %v280 = vld [vmem:[%s215 + $0x4c] sm:$0xf]
      %v281 = vld [vmem:[%s215 + $0x50] sm:$0xf]
      %v282 = vld [vmem:[%s215 + $0x54] sm:$0xf]
      %v283 = vld [vmem:[%s215 + $0x58] sm:$0xf]
      %v284 = vld [vmem:[%s215 + $0x5c] sm:$0xf]
      %v285 = vld [vmem:[%s215 + $0x60] sm:$0xf]
      %v286 = vld [vmem:[%s215 + $0x64] sm:$0xf]
      %v287 = vld [vmem:[%s215 + $0x68] sm:$0xf]
      %v288 = vld [vmem:[%s215 + $0x6c] sm:$0xf]
      %v289 = vld [vmem:[%s215 + $0x70] sm:$0xf]
      %v290 = vld [vmem:[%s215 + $0x74] sm:$0xf]
      %v291 = vld [vmem:[%s215 + $0x78] sm:$0xf]
      %v292 = vld [vmem:[%s215 + $0x7c] sm:$0xf]
      %v293 = vld [vmem:[%s215 + $0x80] sm:$0xf]
      %v294 = vld [vmem:[%s215 + $0x84] sm:$0xf]
      %v295 = vld [vmem:[%s215 + $0x88] sm:$0xf]
      %v296 = vld [vmem:[%s215 + $0x8c] sm:$0xf]
      %v297 = vld [vmem:[%s215 + $0x90] sm:$0xf]
      %v298 = vld [vmem:[%s215 + $0x94] sm:$0xf]
      %v299 = vld [vmem:[%s215 + $0x98] sm:$0xf]
      %v300 = vld [vmem:[%s215 + $0x9c] sm:$0xf]
      %v301 = vld [vmem:[%s215 + $0xa0] sm:$0xf]
      %v302 = vld [vmem:[%s215 + $0xa4] sm:$0xf]
      %v303 = vld [vmem:[%s215 + $0xa8] sm:$0xf]
      %v304 = vld [vmem:[%s215 + $0xac] sm:$0xf]
      %v305 = vld [vmem:[%s215 + $0xb0] sm:$0xf]
      %v306 = vld [vmem:[%s215 + $0xb4] sm:$0xf]
      %v307 = vld [vmem:[%s215 + $0xb8] sm:$0xf]
      %v308 = vld [vmem:[%s215 + $0xbc] sm:$0xf]
      %v309 = vld [vmem:[%s218] sm:$0x1]
      %v311 = vlaneseq
      %v312 = vshrl.u32 %v311, 7
      %v313 = vsub.s32 0, %v312
      %v314 = vrot.slane %v309, %v313
      %v348 = vunpack.c.l.b16 %v229
      %v349 = vunpack.c.h.b16 %v229
      %v350 = vunpack.c.l.b16 %v230
      %v351 = vunpack.c.l.b16 %v231
      %v352 = vunpack.c.h.b16 %v231
      %v353 = vunpack.c.l.b16 %v232
      %v354 = vunpack.c.l.b16 %v233
      %v355 = vunpack.c.h.b16 %v233
      %v356 = vunpack.c.l.b16 %v234
      %v357 = vunpack.c.l.b16 %v235
      %v358 = vunpack.c.h.b16 %v235
      %v359 = vunpack.c.l.b16 %v236
      %v360 = vunpack.c.l.b16 %v237
      %v361 = vunpack.c.h.b16 %v237
      %v362 = vunpack.c.l.b16 %v238
      %v363 = vunpack.c.l.b16 %v239
      %v364 = vunpack.c.h.b16 %v239
      %v365 = vunpack.c.l.b16 %v240
      %v366 = vunpack.c.l.b16 %v241
      %v367 = vunpack.c.h.b16 %v241
      %v368 = vunpack.c.l.b16 %v242
      %v369 = vunpack.c.l.b16 %v243
      %v370 = vunpack.c.h.b16 %v243
      %v371 = vunpack.c.l.b16 %v244
      %v372 = vunpack.c.l.b16 %v245
      %v373 = vunpack.c.h.b16 %v245
      %v374 = vunpack.c.l.b16 %v246
      %v375 = vunpack.c.l.b16 %v247
      %v376 = vunpack.c.h.b16 %v247
      %v377 = vunpack.c.l.b16 %v248
      %v378 = vunpack.c.l.b16 %v249
      %v379 = vunpack.c.h.b16 %v249
      %v380 = vunpack.c.l.b16 %v250
      %v381 = vunpack.c.l.b16 %v251
      %v382 = vunpack.c.h.b16 %v251
      %v383 = vunpack.c.l.b16 %v252
      %v384 = vunpack.c.l.b16 %v253
      %v385 = vunpack.c.h.b16 %v253
      %v386 = vunpack.c.l.b16 %v254
      %v387 = vunpack.c.l.b16 %v255
      %v388 = vunpack.c.h.b16 %v255
      %v389 = vunpack.c.l.b16 %v256
      %v390 = vunpack.c.l.b16 %v257
      %v391 = vunpack.c.h.b16 %v257
      %v392 = vunpack.c.l.b16 %v258
      %v393 = vunpack.c.l.b16 %v259
      %v394 = vunpack.c.h.b16 %v259
      %v395 = vunpack.c.l.b16 %v260
      %v396 = vpack.c.b16 %v351, %v348
      %v397 = vpack.c.b16 %v352, %v349
      %v398 = vpack.c.b16 %v353, %v350
      %v399 = vpack.c.b16 %v357, %v354
      %v400 = vpack.c.b16 %v358, %v355
      %v401 = vpack.c.b16 %v359, %v356
      %v402 = vpack.c.b16 %v363, %v360
      %v403 = vpack.c.b16 %v364, %v361
      %v404 = vpack.c.b16 %v365, %v362
      %v405 = vpack.c.b16 %v369, %v366
      %v406 = vpack.c.b16 %v370, %v367
      %v407 = vpack.c.b16 %v371, %v368
      %v408 = vpack.c.b16 %v375, %v372
      %v409 = vpack.c.b16 %v376, %v373
      %v410 = vpack.c.b16 %v377, %v374
      %v411 = vpack.c.b16 %v381, %v378
      %v412 = vpack.c.b16 %v382, %v379
      %v413 = vpack.c.b16 %v383, %v380
      %v414 = vpack.c.b16 %v387, %v384
      %v415 = vpack.c.b16 %v388, %v385
      %v416 = vpack.c.b16 %v389, %v386
      %v417 = vpack.c.b16 %v393, %v390
      %v418 = vpack.c.b16 %v394, %v391
      %v419 = vpack.c.b16 %v395, %v392
      %v492 = vunpack.c.l.b16 %v261
      %v493 = vunpack.c.l.b16 %v262
      %v494 = vunpack.c.l.b16 %v263
      %v495 = vunpack.c.l.b16 %v264
      %v496 = vunpack.c.l.b16 %v265
      %v497 = vunpack.c.l.b16 %v266
      %v498 = vunpack.c.l.b16 %v267
      %v499 = vunpack.c.l.b16 %v268
      %v500 = vunpack.c.l.b16 %v269
      %v501 = vunpack.c.l.b16 %v270
      %v502 = vunpack.c.l.b16 %v271
      %v503 = vunpack.c.l.b16 %v272
      %v504 = vunpack.c.l.b16 %v273
      %v505 = vunpack.c.l.b16 %v274
      %v506 = vunpack.c.l.b16 %v275
      %v507 = vunpack.c.l.b16 %v276
      %v508 = vunpack.c.l.b16 %v277
      %v509 = vunpack.c.l.b16 %v278
      %v510 = vunpack.c.l.b16 %v279
      %v511 = vunpack.c.l.b16 %v280
      %v512 = vunpack.c.l.b16 %v281
      %v513 = vunpack.c.l.b16 %v282
      %v514 = vunpack.c.l.b16 %v283
      %v515 = vunpack.c.l.b16 %v284
      %v516 = vunpack.c.l.b16 %v285
      %v517 = vunpack.c.l.b16 %v286
      %v518 = vunpack.c.l.b16 %v287
      %v519 = vunpack.c.l.b16 %v288
      %v520 = vunpack.c.l.b16 %v289
      %v521 = vunpack.c.l.b16 %v290
      %v522 = vunpack.c.l.b16 %v291
      %v523 = vunpack.c.l.b16 %v292
      %v524 = vunpack.c.l.b16 %v293
      %v525 = vunpack.c.l.b16 %v294
      %v526 = vunpack.c.l.b16 %v295
      %v527 = vunpack.c.l.b16 %v296
      %v528 = vunpack.c.l.b16 %v297
      %v529 = vunpack.c.l.b16 %v298
      %v530 = vunpack.c.l.b16 %v299
      %v531 = vunpack.c.l.b16 %v300
      %v532 = vunpack.c.l.b16 %v301
      %v533 = vunpack.c.l.b16 %v302
      %v534 = vunpack.c.l.b16 %v303
      %v535 = vunpack.c.l.b16 %v304
      %v536 = vunpack.c.l.b16 %v305
      %v537 = vunpack.c.l.b16 %v306
      %v538 = vunpack.c.l.b16 %v307
      %v539 = vunpack.c.l.b16 %v308
      %v540 = vpack.c.b16 %v493, %v492
      %v541 = vpack.c.b16 %v495, %v494
      %v542 = vpack.c.b16 %v497, %v496
      %v543 = vpack.c.b16 %v499, %v498
      %v544 = vpack.c.b16 %v501, %v500
      %v545 = vpack.c.b16 %v503, %v502
      %v546 = vpack.c.b16 %v505, %v504
      %v547 = vpack.c.b16 %v507, %v506
      %v548 = vpack.c.b16 %v509, %v508
      %v549 = vpack.c.b16 %v511, %v510
      %v550 = vpack.c.b16 %v513, %v512
      %v551 = vpack.c.b16 %v515, %v514
      %v552 = vpack.c.b16 %v517, %v516
      %v553 = vpack.c.b16 %v519, %v518
      %v554 = vpack.c.b16 %v521, %v520
      %v555 = vpack.c.b16 %v523, %v522
      %v556 = vpack.c.b16 %v525, %v524
      %v557 = vpack.c.b16 %v527, %v526
      %v558 = vpack.c.b16 %v529, %v528
      %v559 = vpack.c.b16 %v531, %v530
      %v560 = vpack.c.b16 %v533, %v532
      %v561 = vpack.c.b16 %v535, %v534
      %v562 = vpack.c.b16 %v537, %v536
      %v563 = vpack.c.b16 %v539, %v538
      %588 = vmatprep.subr.bf16.mxu0 0
      %589 = vmatpush1.bf16.msra.mxu0 %v540
      %590 = vmatprep.subr.bf16.mxu0 0
      %591 = vmatpush1.bf16.msra.mxu0 %v541
      %592 = vmatprep.subr.bf16.mxu0 0
      %593 = vmatpush1.bf16.msra.mxu0 %v542
      %594 = vmatprep.subr.bf16.mxu0 0
      %595 = vmatpush1.bf16.msra.mxu0 %v543
      %596 = vmatprep.subr.bf16.mxu0 0
      %597 = vmatpush1.bf16.msra.mxu0 %v544
      %598 = vmatprep.subr.bf16.mxu0 0
      %599 = vmatpush1.bf16.msra.mxu0 %v545
      %600 = vmatprep.subr.bf16.mxu0 0
      %601 = vmatpush1.bf16.msra.mxu0 %v546
      %602 = vmatprep.subr.bf16.mxu0 0
      %603 = vmatpush1.bf16.msra.mxu0 %v547
      %604 = vmatprep.subr.bf16.mxu0 0
      %605 = vmatpush1.bf16.msra.mxu0 %v548
      %606 = vmatprep.subr.bf16.mxu0 0
      %607 = vmatpush1.bf16.msra.mxu0 %v549
      %608 = vmatprep.subr.bf16.mxu0 0
      %609 = vmatpush1.bf16.msra.mxu0 %v550
      %610 = vmatprep.subr.bf16.mxu0 0
      %611 = vmatpush1.bf16.msra.mxu0 %v551
      %612 = vmatprep.subr.bf16.mxu0 0
      %613 = vmatpush1.bf16.msra.mxu0 %v552
      %614 = vmatprep.subr.bf16.mxu0 0
      %615 = vmatpush1.bf16.msra.mxu0 %v553
      %616 = vmatprep.subr.bf16.mxu0 0
      %617 = vmatpush1.bf16.msra.mxu0 %v554
      %618 = vmatprep.subr.bf16.mxu0 0
      %619 = vmatpush1.bf16.msra.mxu0 %v555
      %620 = vmatprep.mubr.bf16.mxu0 %v397
      %621 = vmatmul.mubr.bf16.gmra.mrb[0].mxu0 %v396
      %v622 = vpop.f32.mrb[0].mxu0
      %v623 = vadd.f32 %v314, %v622
      %v624 = vpop.f32.mrb[0].mxu0
      %v625 = vpop.f32.mrb[0].mxu0
      %v626 = vadd.f32 %v314, %v625
      %v627 = vpop.f32.mrb[0].mxu0
      %628 = vmatprep.mubr.bf16.mxu0 %v400
      %629 = vmatmul.mubr.bf16.gmra.mrb[0].mxu0 %v399
      %v630 = vpop.f32.mrb[0].mxu0
      %v631 = vadd.f32 %v314, %v630
      %v632 = vpop.f32.mrb[0].mxu0
      %v633 = vpop.f32.mrb[0].mxu0
      %v634 = vadd.f32 %v314, %v633
      %v635 = vpop.f32.mrb[0].mxu0
      %636 = vmatprep.mubr.bf16.mxu0 %v403
      %637 = vmatmul.mubr.bf16.gmra.mrb[0].mxu0 %v402
      %v638 = vpop.f32.mrb[0].mxu0
      %v639 = vadd.f32 %v314, %v638
      %v640 = vpop.f32.mrb[0].mxu0
      %v641 = vpop.f32.mrb[0].mxu0
      %v642 = vadd.f32 %v314, %v641
      %v643 = vpop.f32.mrb[0].mxu0
      %644 = vmatprep.mubr.bf16.mxu0 %v406
      %645 = vmatmul.mubr.bf16.gmra.mrb[0].mxu0 %v405
      %v646 = vpop.f32.mrb[0].mxu0
      %v647 = vadd.f32 %v314, %v646
      %v648 = vpop.f32.mrb[0].mxu0
      %v649 = vpop.f32.mrb[0].mxu0
      %v650 = vadd.f32 %v314, %v649
      %v651 = vpop.f32.mrb[0].mxu0
      %652 = vmatprep.mubr.bf16.mxu0 %v409
      %653 = vmatmul.mubr.bf16.gmra.mrb[0].mxu0 %v408
      %v654 = vpop.f32.mrb[0].mxu0
      %v655 = vadd.f32 %v314, %v654
      %v656 = vpop.f32.mrb[0].mxu0
      %v657 = vpop.f32.mrb[0].mxu0
      %v658 = vadd.f32 %v314, %v657
      %v659 = vpop.f32.mrb[0].mxu0
      %660 = vmatprep.mubr.bf16.mxu0 %v412
      %661 = vmatmul.mubr.bf16.gmra.mrb[0].mxu0 %v411
      %v662 = vpop.f32.mrb[0].mxu0
      %v663 = vadd.f32 %v314, %v662
      %v664 = vpop.f32.mrb[0].mxu0
      %v665 = vpop.f32.mrb[0].mxu0
      %v666 = vadd.f32 %v314, %v665
      %v667 = vpop.f32.mrb[0].mxu0
      %668 = vmatprep.mubr.bf16.mxu0 %v415
      %669 = vmatmul.mubr.bf16.gmra.mrb[0].mxu0 %v414
      %v670 = vpop.f32.mrb[0].mxu0
      %v671 = vadd.f32 %v314, %v670
      %v672 = vpop.f32.mrb[0].mxu0
      %v673 = vpop.f32.mrb[0].mxu0
      %v674 = vadd.f32 %v314, %v673
      %v675 = vpop.f32.mrb[0].mxu0
      %676 = vmatprep.mubr.bf16.mxu0 %v418
      %677 = vmatmul.mubr.bf16.gmra.mrb[0].mxu0 %v417
      %v678 = vpop.f32.mrb[0].mxu0
      %v679 = vadd.f32 %v314, %v678
      %v680 = vpop.f32.mrb[0].mxu0
      %v681 = vpop.f32.mrb[0].mxu0
      %v682 = vadd.f32 %v314, %v681
      %v683 = vpop.f32.mrb[0].mxu0
      %684 = vdwg.mxu0
      %685 = vmatprep.subr.bf16.mxu0 0
      %686 = vmatpush1.bf16.msra.mxu0 %v556
      %687 = vmatprep.subr.bf16.mxu0 0
      %688 = vmatpush1.bf16.msra.mxu0 %v557
      %689 = vmatprep.subr.bf16.mxu0 0
      %690 = vmatpush1.bf16.msra.mxu0 %v558
      %691 = vmatprep.subr.bf16.mxu0 0
      %692 = vmatpush1.bf16.msra.mxu0 %v559
      %693 = vmatprep.subr.bf16.mxu0 0
      %694 = vmatpush1.bf16.msra.mxu0 %v560
      %695 = vmatprep.subr.bf16.mxu0 0
      %696 = vmatpush1.bf16.msra.mxu0 %v561
      %697 = vmatprep.subr.bf16.mxu0 0
      %698 = vmatpush1.bf16.msra.mxu0 %v562
      %699 = vmatprep.subr.bf16.mxu0 0
      %700 = vmatpush1.bf16.msra.mxu0 %v563
      %701 = vmatprep.subr.bf16.mxu0 0
      %702 = vmatpush1.bf16.msra.mxu0 0
      %703 = vmatprep.subr.bf16.mxu0 0
      %704 = vmatpush1.bf16.msra.mxu0 0
      %705 = vmatprep.subr.bf16.mxu0 0
      %706 = vmatpush1.bf16.msra.mxu0 0
      %707 = vmatprep.subr.bf16.mxu0 0
      %708 = vmatpush1.bf16.msra.mxu0 0
      %709 = vmatprep.subr.bf16.mxu0 0
      %710 = vmatpush1.bf16.msra.mxu0 0
      %711 = vmatprep.subr.bf16.mxu0 0
      %712 = vmatpush1.bf16.msra.mxu0 0
      %713 = vmatprep.subr.bf16.mxu0 0
      %714 = vmatpush1.bf16.msra.mxu0 0
      %715 = vmatprep.subr.bf16.mxu0 0
      %716 = vmatpush1.bf16.msra.mxu0 0
      %717 = vmatprep.mubr.bf16.mxu0 0
      %718 = vmatmul.mubr.bf16.gmra.mrb[0].mxu0 %v398
      %v719 = vpop.f32.mrb[0].mxu0
      %v720 = vadd.f32 %v623, %v719
      %v721 = vpop.f32.mrb[0].mxu0
      %v722 = vpop.f32.mrb[0].mxu0
      %v723 = vadd.f32 %v626, %v722
      %v724 = vpop.f32.mrb[0].mxu0
      %725 = vmatprep.mubr.bf16.mxu0 0
      %726 = vmatmul.mubr.bf16.gmra.mrb[0].mxu0 %v401
      %v727 = vpop.f32.mrb[0].mxu0
      %v728 = vadd.f32 %v631, %v727
      %v729 = vpop.f32.mrb[0].mxu0
      %v730 = vpop.f32.mrb[0].mxu0
      %v731 = vadd.f32 %v634, %v730
      %v732 = vpop.f32.mrb[0].mxu0
      %733 = vmatprep.mubr.bf16.mxu0 0
      %734 = vmatmul.mubr.bf16.gmra.mrb[0].mxu0 %v404
      %v735 = vpop.f32.mrb[0].mxu0
      %v736 = vadd.f32 %v639, %v735
      %v737 = vpop.f32.mrb[0].mxu0
      %v738 = vpop.f32.mrb[0].mxu0
      %v739 = vadd.f32 %v642, %v738
      %v740 = vpop.f32.mrb[0].mxu0
      %741 = vmatprep.mubr.bf16.mxu0 0
      %742 = vmatmul.mubr.bf16.gmra.mrb[0].mxu0 %v407
      %v743 = vpop.f32.mrb[0].mxu0
      %v744 = vadd.f32 %v647, %v743
      %v745 = vpop.f32.mrb[0].mxu0
      %v746 = vpop.f32.mrb[0].mxu0
      %v747 = vadd.f32 %v650, %v746
      %v748 = vpop.f32.mrb[0].mxu0
      %749 = vmatprep.mubr.bf16.mxu0 0
      %750 = vmatmul.mubr.bf16.gmra.mrb[0].mxu0 %v410
      %v751 = vpop.f32.mrb[0].mxu0
      %v752 = vadd.f32 %v655, %v751
      %v753 = vpop.f32.mrb[0].mxu0
      %v754 = vpop.f32.mrb[0].mxu0
      %v755 = vadd.f32 %v658, %v754
      %v756 = vpop.f32.mrb[0].mxu0
      %757 = vmatprep.mubr.bf16.mxu0 0
      %758 = vmatmul.mubr.bf16.gmra.mrb[0].mxu0 %v413
      %v759 = vpop.f32.mrb[0].mxu0
      %v760 = vadd.f32 %v663, %v759
      %v761 = vpop.f32.mrb[0].mxu0
      %v762 = vpop.f32.mrb[0].mxu0
      %v763 = vadd.f32 %v666, %v762
      %v764 = vpop.f32.mrb[0].mxu0
      %765 = vmatprep.mubr.bf16.mxu0 0
      %766 = vmatmul.mubr.bf16.gmra.mrb[0].mxu0 %v416
      %v767 = vpop.f32.mrb[0].mxu0
      %v768 = vadd.f32 %v671, %v767
      %v769 = vpop.f32.mrb[0].mxu0
      %v770 = vpop.f32.mrb[0].mxu0
      %v771 = vadd.f32 %v674, %v770
      %v772 = vpop.f32.mrb[0].mxu0
      %773 = vmatprep.mubr.bf16.mxu0 0
      %774 = vmatmul.mubr.bf16.gmra.mrb[0].mxu0 %v419
      %v775 = vpop.f32.mrb[0].mxu0
      %v776 = vadd.f32 %v679, %v775
      %v777 = vpop.f32.mrb[0].mxu0
      %v778 = vpop.f32.mrb[0].mxu0
      %v779 = vadd.f32 %v682, %v778
      %v780 = vpop.f32.mrb[0].mxu0
      %781 = vdwg.mxu0
      %v782 = vmax.f32 %v720, 0.0
      %v783 = vmax.f32 %v723, 0.0
      %v784 = vmax.f32 %v728, 0.0
      %v785 = vmax.f32 %v731, 0.0
      %v786 = vmax.f32 %v736, 0.0
      %v787 = vmax.f32 %v739, 0.0
      %v788 = vmax.f32 %v744, 0.0
      %v789 = vmax.f32 %v747, 0.0
      %v790 = vmax.f32 %v752, 0.0
      %v791 = vmax.f32 %v755, 0.0
      %v792 = vmax.f32 %v760, 0.0
      %v793 = vmax.f32 %v763, 0.0
      %v794 = vmax.f32 %v768, 0.0
      %v795 = vmax.f32 %v771, 0.0
      %v796 = vmax.f32 %v776, 0.0
      %v797 = vmax.f32 %v779, 0.0
      %798 = vst [vmem:[%s226] sm:$0xff] %v782
      %799 = vst [vmem:[%s226 + $0x8] sm:$0xff] %v783
      %800 = vst [vmem:[%s226 + $0x10] sm:$0xff] %v784
      %801 = vst [vmem:[%s226 + $0x18] sm:$0xff] %v785
      %802 = vst [vmem:[%s226 + $0x20] sm:$0xff] %v786
      %803 = vst [vmem:[%s226 + $0x28] sm:$0xff] %v787
      %804 = vst [vmem:[%s226 + $0x30] sm:$0xff] %v788
      %805 = vst [vmem:[%s226 + $0x38] sm:$0xff] %v789
      %806 = vst [vmem:[%s226 + $0x40] sm:$0xff] %v790
      %807 = vst [vmem:[%s226 + $0x48] sm:$0xff] %v791
      %808 = vst [vmem:[%s226 + $0x50] sm:$0xff] %v792
      %809 = vst [vmem:[%s226 + $0x58] sm:$0xff] %v793
      %810 = vst [vmem:[%s226 + $0x60] sm:$0xff] %v794
      %811 = vst [vmem:[%s226 + $0x68] sm:$0xff] %v795
      %812 = vst [vmem:[%s226 + $0x70] sm:$0xff] %v796
      %813 = vst [vmem:[%s226 + $0x78] sm:$0xff] %v797
      %s814 = smul.u32 16, %s18
      %p815 = scmp.lt.s32.totalorder %s814, 31
      %s816 = scalar_select %p815, %s814, 31
      %p817 = scmp.lt.s32.totalorder %s19, 0
      %s818 = scalar_select %p817, %s19, 0
      %s819 = sadd.s32 %s818, %s816
      %s820 = smul.addr %s819, 8
      %s821 = scalar_lea.vmem %s3, %s820
      // Predicated region
      $region33: #{vsnet_forward.14} parent=31 // pred_check
        %p822 = pneg %p124
      $region34: #{vsnet_forward.14} parent=31 // pred_check_branch
        %824 = sbr.rel (%p822) target = $region36
      $region35: #{vsnet_forward.14} parent=31 // pred_region
        %s825 = smul.u32 16, %s18
      $region36: #{vsnet_forward.14} parent=31 // pred_fallthru
        _
    $region32: #{vsnet_forward.14} parent=5 // pred_fallthru
      _
    %p826 = scmp.le.s32.totalorder 2, %s9
    // Predicated region
    $region37: #{vsnet_forward.14} parent=5 // pred_check
      %p827 = pneg %p826
    $region38: #{vsnet_forward.14} parent=5 // pred_check_branch
      %829 = sbr.rel (%p827) target = $region40
    $region39: #{vsnet_forward.14} parent=5 // pred_region
      %s830 = ssub.s32 %s9, 2
      // Predicated region
      $region41: #{vsnet_forward.14} parent=39 // pred_check
        %p831 = pneg %p130
      $region42: #{vsnet_forward.14} parent=39 // pred_check_branch
        %833 = sbr.rel (%p831) target = $region44
      $region43: #{vsnet_forward.14} parent=39 // pred_region
        %s834 = smul.u32 16, %s20
        %p835 = scmp.lt.s32.totalorder %s834, 31
        %s836 = scalar_select %p835, %s834, 31
        %p837 = scmp.lt.s32.totalorder %s21, 0
        %s838 = scalar_select %p837, %s21, 0
        %s839 = sadd.s32 %s838, %s836
        %s840 = smul.addr %s839, 8
        %s841 = scalar_lea.vmem %s3, %s840
      $region44: #{vsnet_forward.14} parent=39 // pred_fallthru
        _
    $region40: #{vsnet_forward.14} parent=5 // pred_fallthru
      _
  $region6: #{vsnet_forward.14} parent=0 // loop_footer
    %s13 = sadd.s32 1, %s9
  $region7: #{vsnet_forward.14} parent=0 // loop_footer_branch
    %8 = sbr.rel target = $region3
  $region8: #{vsnet_forward.14} parent=0 // loop_exit
    _

// kernel: vsnet_forward.15
$region0: #{vsnet_forward.15}
  #allocation0 [shape = 'u32[]', space=smem, size = 0x4, offset = 0x4, fixed_abs, tag = 'smem constant byte address 0x4 - core index']
  #allocation1 [shape = 'u32[144,128]{1,0:T(1,128)}', space=vmem, size = 0x12000, scoped, tag = 'internal scratch']
  %s0 = inlined_call_operand.vmem [shape: bf16[256,512], index: 0, kind: input, shape index: {}]
  %s1 = inlined_call_operand.vmem [shape: bf16[512,128], index: 1, kind: input, shape index: {}]
  %s2 = inlined_call_operand.vmem [shape: f32[1,128], index: 2, kind: input, shape index: {}]
  %s3 = inlined_call_operand.vmem [shape: f32[256,128], index: 3, kind: output, shape index: {}]
  %s4 = sld [smem:[#allocation0]]
  $region45: #{vsnet_forward.15} parent=0
    _
  %s6 = ssub.s32 1, %s4
  %s7 = scalar_select 0, %s6, %s4
  loop: start=0, step=1, limit=4
  $region2: #{vsnet_forward.15} parent=0 // loop_pre_header
    _
  $region3: #{vsnet_forward.15} parent=0 // loop_header
    %s9 = sphi 0, %s13
    %p10 = scmp.ge.s32.totalorder %s9, 4
    %s16 = sphi 0, %s28
    %s17 = sphi 0, %s24
    %s18 = sphi 0, %s16
    %s19 = sphi 0, %s17
    %s20 = sphi 0, %s18
    %s21 = sphi 0, %s19
    %s31 = sphi 0, %s33
    %s34 = sphi 0, %s31
    %s35 = sphi 0, %s34
    %s51 = sphi 0, %s35
    %s57 = sphi 0, %s59
    %s60 = sphi 0, %s57
    %s61 = sphi 0, %s60
    %s77 = sphi 0, %s61
    %s83 = sphi 0, %s85
    %s86 = sphi 0, %s83
    %s87 = sphi 0, %s86
    %s103 = sphi 0, %s87
    %s111 = sphi 0, %s113
    %s114 = sphi 0, %s111
    %s115 = sphi 0, %s114
    %s131 = sphi 0, %s115
  $region4: #{vsnet_forward.15} parent=0 // loop_header_branch
    %12 = sbr.rel (%p10) target = $region8
  $region5: #{vsnet_forward.15} parent=0 // loop_body
    %s14 = ssub.s32 %s9, 1
    %s15 = ssub.s32 %s9, 2
    %s22 = sadd.s32 1, %s17
    %p23 = scmp.ge.s32.totalorder %s22, 1
    %s24 = scalar_select %p23, 0, %s22
    %s25 = sadd.s32 1, %s16
    %s26 = scalar_select %p23, %s25, %s16
    %p27 = scmp.ge.s32.totalorder %s26, 2
    %s28 = scalar_select %p27, 0, %s26
    %s29 = ssub.s32 %s16, %s28
    %p30 = scmp.eq.s32.totalorder %s29, 0
    %s32 = sadd.s32 %s31, 1
    %s33 = scalar_select %p30, %s31, %s32
    %p36 = pneg %p30
    %p37 = scmp.eq.s32.totalorder %s9, 1
    %p38 = por %p36, %p37
    %p39 = scmp.ne.s32.totalorder %s31, %s34
    %p40 = scmp.eq.s32.totalorder %s9, 0
    %p41 = por %p39, %p40
    %p42 = scmp.ne.s32.totalorder %s31, %s34
    %p43 = scmp.eq.s32.totalorder %s14, 1
    %p44 = por %p42, %p43
    %p45 = scmp.ne.s32.totalorder %s34, %s35
    %p46 = scmp.eq.s32.totalorder %s14, 0
    %p47 = por %p45, %p46
    %p48 = scmp.ne.s32.totalorder %s34, %s35
    %p49 = scmp.eq.s32.totalorder %s15, 1
    %p50 = por %p48, %p49
    %p52 = scmp.ne.s32.totalorder %s35, %s51
    %p53 = scmp.eq.s32.totalorder %s15, 0
    %p54 = por %p52, %p53
    %s55 = ssub.s32 %s17, %s24
    %p56 = scmp.eq.s32.totalorder %s55, 0
    %s58 = sadd.s32 %s57, 1
    %s59 = scalar_select %p56, %s57, %s58
    %p62 = pneg %p56
    %p63 = scmp.eq.s32.totalorder %s9, 1
    %p64 = por %p62, %p63
    %p65 = scmp.ne.s32.totalorder %s57, %s60
    %p66 = scmp.eq.s32.totalorder %s9, 0
    %p67 = por %p65, %p66
    %p68 = scmp.ne.s32.totalorder %s57, %s60
    %p69 = scmp.eq.s32.totalorder %s14, 1
    %p70 = por %p68, %p69
    %p71 = scmp.ne.s32.totalorder %s60, %s61
    %p72 = scmp.eq.s32.totalorder %s14, 0
    %p73 = por %p71, %p72
    %p74 = scmp.ne.s32.totalorder %s60, %s61
    %p75 = scmp.eq.s32.totalorder %s15, 1
    %p76 = por %p74, %p75
    %p78 = scmp.ne.s32.totalorder %s61, %s77
    %p79 = scmp.eq.s32.totalorder %s15, 0
    %p80 = por %p78, %p79
    %s81 = ssub.s32 %s17, %s24
    %p82 = scmp.eq.s32.totalorder %s81, 0
    %s84 = sadd.s32 %s83, 1
    %s85 = scalar_select %p82, %s83, %s84
    %p88 = pneg %p82
    %p89 = scmp.eq.s32.totalorder %s9, 1
    %p90 = por %p88, %p89
    %p91 = scmp.ne.s32.totalorder %s83, %s86
    %p92 = scmp.eq.s32.totalorder %s9, 0
    %p93 = por %p91, %p92
    %p94 = scmp.ne.s32.totalorder %s83, %s86
    %p95 = scmp.eq.s32.totalorder %s14, 1
    %p96 = por %p94, %p95
    %p97 = scmp.ne.s32.totalorder %s86, %s87
    %p98 = scmp.eq.s32.totalorder %s14, 0
    %p99 = por %p97, %p98
    %p100 = scmp.ne.s32.totalorder %s86, %s87
    %p101 = scmp.eq.s32.totalorder %s15, 1
    %p102 = por %p100, %p101
    %p104 = scmp.ne.s32.totalorder %s87, %s103
    %p105 = scmp.eq.s32.totalorder %s15, 0
    %p106 = por %p104, %p105
    %s107 = ssub.s32 %s16, %s28
    %s108 = ssub.s32 %s17, %s24
    %s109 = sor.u32 %s107, %s108
    %p110 = scmp.eq.s32.totalorder %s109, 0
    %s112 = sadd.s32 %s111, 1
    %s113 = scalar_select %p110, %s111, %s112
    %p116 = pneg %p110
    %p117 = scmp.eq.s32.totalorder %s9, 1
    %p118 = por %p116, %p117
    %p119 = scmp.ne.s32.totalorder %s111, %s114
    %p120 = scmp.eq.s32.totalorder %s9, 0
    %p121 = por %p119, %p120
    %p122 = scmp.ne.s32.totalorder %s111, %s114
    %p123 = scmp.eq.s32.totalorder %s14, 1
    %p124 = por %p122, %p123
    %p125 = scmp.ne.s32.totalorder %s114, %s115
    %p126 = scmp.eq.s32.totalorder %s14, 0
    %p127 = por %p125, %p126
    %p128 = scmp.ne.s32.totalorder %s114, %s115
    %p129 = scmp.eq.s32.totalorder %s15, 1
    %p130 = por %p128, %p129
    %p132 = scmp.ne.s32.totalorder %s115, %s131
    %p133 = scmp.eq.s32.totalorder %s15, 0
    %p134 = por %p132, %p133
    %p135 = scmp.le.s32.totalorder 1, %s9
    %p136 = scmp.lt.s32.totalorder %s9, 3
    %p137 = pnand %p135, %p136
    %p138 = pneg %p137
    // Predicated region
    $region9: #{vsnet_forward.15} parent=5 // pred_check
      _
    $region10: #{vsnet_forward.15} parent=5 // pred_check_branch
      %140 = sbr.rel (%p137) target = $region12
    $region11: #{vsnet_forward.15} parent=5 // pred_region
      %s141 = ssub.s32 %s9, 1
      // Predicated region
      $region13: #{vsnet_forward.15} parent=11 // pred_check
        %p142 = pneg %p73
      $region14: #{vsnet_forward.15} parent=11 // pred_check_branch
        %144 = sbr.rel (%p142) target = $region16
      $region15: #{vsnet_forward.15} parent=11 // pred_region
        %p145 = scmp.lt.s32.totalorder %s19, 0
        %s146 = scalar_select %p145, %s19, 0
        %s147 = smul.addr %s146, 4
        %s148 = scalar_lea.vmem %s1, %s147
      $region16: #{vsnet_forward.15} parent=11 // pred_fallthru
        _
      // Predicated region
      $region17: #{vsnet_forward.15} parent=11 // pred_check
        %p149 = pneg %p99
      $region18: #{vsnet_forward.15} parent=11 // pred_check_branch
        %151 = sbr.rel (%p149) target = $region20
      $region19: #{vsnet_forward.15} parent=11 // pred_region
        %p152 = scmp.lt.s32.totalorder %s19, 0
        %s153 = scalar_select %p152, %s19, 0
        %s154 = scalar_lea.vmem %s2, %s153
      $region20: #{vsnet_forward.15} parent=11 // pred_fallthru
        _
    $region12: #{vsnet_forward.15} parent=5 // pred_fallthru
      _
    %p155 = scmp.lt.s32.totalorder %s9, 2
    // Predicated region
    $region21: #{vsnet_forward.15} parent=5 // pred_check
      %p156 = pneg %p155
    $region22: #{vsnet_forward.15} parent=5 // pred_check_branch
      %158 = sbr.rel (%p156) target = $region24
    $region23: #{vsnet_forward.15} parent=5 // pred_region
      // Predicated region
      $region25: #{vsnet_forward.15} parent=23 // pred_check
        %p159 = pneg %p41
      $region26: #{vsnet_forward.15} parent=23 // pred_check_branch
        %161 = sbr.rel (%p159) target = $region28
      $region27: #{vsnet_forward.15} parent=23 // pred_region
        %s162 = smul.u32 16, %s16
        %p163 = scmp.lt.s32.totalorder %s162, 31
        %s164 = scalar_select %p163, %s162, 31
        %s165 = smul.addr %s164, 4
        %s166 = smul.addr %s165, 4
        %s167 = scalar_lea.vmem %s0, %s166
        %s168 = smul.u32 16, %s16
      $region28: #{vsnet_forward.15} parent=23 // pred_fallthru
        _
    $region24: #{vsnet_forward.15} parent=5 // pred_fallthru
      _
    %p169 = scmp.le.s32.totalorder 1, %s9
    %p170 = scmp.lt.s32.totalorder %s9, 3
    %p171 = pnand %p169, %p170
    %p172 = pneg %p171
    // Predicated region
    $region29: #{vsnet_forward.15} parent=5 // pred_check
      _
    $region30: #{vsnet_forward.15} parent=5 // pred_check_branch
      %174 = sbr.rel (%p171) target = $region32
    $region31: #{vsnet_forward.15} parent=5 // pred_region
      %s175 = ssub.s32 %s9, 1
      %s176 = smul.u32 16, %s18
      %p177 = scmp.lt.s32.totalorder %s176, 31
      %s178 = scalar_select %p177, %s176, 31
      %s179 = smul.addr %s178, 4
      %s180 = smul.addr %s179, 4
      %s181 = scalar_lea.vmem %s0, %s180
      %p182 = pneg %p47
      %p183 = pneg %p44
      %p184 = scmp.lt.s32.totalorder %s19, 0
      %s185 = scalar_select %p184, %s19, 0
      %s186 = smul.addr %s185, 4
      %s187 = scalar_lea.vmem %s1, %s186
      %p188 = pneg %p73
      %p189 = pneg %p70
      %p190 = scmp.lt.s32.totalorder %s19, 0
      %s191 = scalar_select %p190, %s19, 0
      %s192 = scalar_lea.vmem %s2, %s191
      %p193 = pneg %p99
      %p194 = pneg %p96
      %p195 = pneg %p127
      %p196 = pneg %p124
      %s197 = smul.u32 16, %s18
      %p198 = scmp.lt.s32.totalorder %s197, 31
      %s199 = scalar_select %p198, %s197, 31
      %p200 = scmp.lt.s32.totalorder %s19, 0
      %s201 = scalar_select %p200, %s19, 0
      %s202 = sadd.s32 %s201, %s199
      %s203 = smul.addr %s202, 8
      %s204 = scalar_lea.vmem %s3, %s203
      %s205 = smul.u32 16, %s18
      %p206 = scmp.lt.s32.totalorder %s205, 31
      %s207 = scalar_select %p206, %s205, 31
      %s208 = smul.addr %s207, 4
      %s209 = smul.addr %s208, 4
      %s210 = scalar_lea.vmem %s0, %s209
      %s211 = smul.u32 16, %s18
      %p212 = scmp.lt.s32.totalorder %s19, 0
      %s213 = scalar_select %p212, %s19, 0
      %s214 = smul.addr %s213, 4
      %s215 = scalar_lea.vmem %s1, %s214
      %p216 = scmp.lt.s32.totalorder %s19, 0
      %s217 = scalar_select %p216, %s19, 0
      %s218 = scalar_lea.vmem %s2, %s217
      %s219 = smul.u32 16, %s18
      %p220 = scmp.lt.s32.totalorder %s219, 31
      %s221 = scalar_select %p220, %s219, 31
      %p222 = scmp.lt.s32.totalorder %s19, 0
      %s223 = scalar_select %p222, %s19, 0
      %s224 = sadd.s32 %s223, %s221
      %s225 = smul.addr %s224, 8
      %s226 = scalar_lea.vmem %s3, %s225
      %s227 = smul.u32 16, %s18
      %v229 = vld [vmem:[%s210] sm:$0xff]
      %v230 = vld [vmem:[%s210 + $0x8] sm:$0xff]
      %v231 = vld [vmem:[%s210 + $0x10] sm:$0xff]
      %v232 = vld [vmem:[%s210 + $0x18] sm:$0xff]
      %v233 = vld [vmem:[%s210 + $0x20] sm:$0xff]
      %v234 = vld [vmem:[%s210 + $0x28] sm:$0xff]
      %v235 = vld [vmem:[%s210 + $0x30] sm:$0xff]
      %v236 = vld [vmem:[%s210 + $0x38] sm:$0xff]
      %v237 = vld [vmem:[%s210 + $0x40] sm:$0xff]
      %v238 = vld [vmem:[%s210 + $0x48] sm:$0xff]
      %v239 = vld [vmem:[%s210 + $0x50] sm:$0xff]
      %v240 = vld [vmem:[%s210 + $0x58] sm:$0xff]
      %v241 = vld [vmem:[%s210 + $0x60] sm:$0xff]
      %v242 = vld [vmem:[%s210 + $0x68] sm:$0xff]
      %v243 = vld [vmem:[%s210 + $0x70] sm:$0xff]
      %v244 = vld [vmem:[%s210 + $0x78] sm:$0xff]
      %v245 = vld [vmem:[%s210 + $0x80] sm:$0xff]
      %v246 = vld [vmem:[%s210 + $0x88] sm:$0xff]
      %v247 = vld [vmem:[%s210 + $0x90] sm:$0xff]
      %v248 = vld [vmem:[%s210 + $0x98] sm:$0xff]
      %v249 = vld [vmem:[%s210 + $0xa0] sm:$0xff]
      %v250 = vld [vmem:[%s210 + $0xa8] sm:$0xff]
      %v251 = vld [vmem:[%s210 + $0xb0] sm:$0xff]
      %v252 = vld [vmem:[%s210 + $0xb8] sm:$0xff]
      %v253 = vld [vmem:[%s210 + $0xc0] sm:$0xff]
      %v254 = vld [vmem:[%s210 + $0xc8] sm:$0xff]
      %v255 = vld [vmem:[%s210 + $0xd0] sm:$0xff]
      %v256 = vld [vmem:[%s210 + $0xd8] sm:$0xff]
      %v257 = vld [vmem:[%s210 + $0xe0] sm:$0xff]
      %v258 = vld [vmem:[%s210 + $0xe8] sm:$0xff]
      %v259 = vld [vmem:[%s210 + $0xf0] sm:$0xff]
      %v260 = vld [vmem:[%s210 + $0xf8] sm:$0xff]
      %v261 = vld [vmem:[%s215] sm:$0xf]
      %v262 = vld [vmem:[%s215 + $0x4] sm:$0xf]
      %v263 = vld [vmem:[%s215 + $0x8] sm:$0xf]
      %v264 = vld [vmem:[%s215 + $0xc] sm:$0xf]
      %v265 = vld [vmem:[%s215 + $0x10] sm:$0xf]
      %v266 = vld [vmem:[%s215 + $0x14] sm:$0xf]
      %v267 = vld [vmem:[%s215 + $0x18] sm:$0xf]
      %v268 = vld [vmem:[%s215 + $0x1c] sm:$0xf]
      %v269 = vld [vmem:[%s215 + $0x20] sm:$0xf]
      %v270 = vld [vmem:[%s215 + $0x24] sm:$0xf]
      %v271 = vld [vmem:[%s215 + $0x28] sm:$0xf]
      %v272 = vld [vmem:[%s215 + $0x2c] sm:$0xf]
      %v273 = vld [vmem:[%s215 + $0x30] sm:$0xf]
      %v274 = vld [vmem:[%s215 + $0x34] sm:$0xf]
      %v275 = vld [vmem:[%s215 + $0x38] sm:$0xf]
      %v276 = vld [vmem:[%s215 + $0x3c] sm:$0xf]
      %v277 = vld [vmem:[%s215 + $0x40] sm:$0xf]
      %v278 = vld [vmem:[%s215 + $0x44] sm:$0xf]
      %v279 = vld [vmem:[%s215 + $0x48] sm:$0xf]
      %v280 = vld [vmem:[%s215 + $0x4c] sm:$0xf]
      %v281 = vld [vmem:[%s215 + $0x50] sm:$0xf]
      %v282 = vld [vmem:[%s215 + $0x54] sm:$0xf]
      %v283 = vld [vmem:[%s215 + $0x58] sm:$0xf]
      %v284 = vld [vmem:[%s215 + $0x5c] sm:$0xf]
      %v285 = vld [vmem:[%s215 + $0x60] sm:$0xf]
      %v286 = vld [vmem:[%s215 + $0x64] sm:$0xf]
      %v287 = vld [vmem:[%s215 + $0x68] sm:$0xf]
      %v288 = vld [vmem:[%s215 + $0x6c] sm:$0xf]
      %v289 = vld [vmem:[%s215 + $0x70] sm:$0xf]
      %v290 = vld [vmem:[%s215 + $0x74] sm:$0xf]
      %v291 = vld [vmem:[%s215 + $0x78] sm:$0xf]
      %v292 = vld [vmem:[%s215 + $0x7c] sm:$0xf]
      %v293 = vld [vmem:[%s215 + $0x80] sm:$0xf]
      %v294 = vld [vmem:[%s215 + $0x84] sm:$0xf]
      %v295 = vld [vmem:[%s215 + $0x88] sm:$0xf]
      %v296 = vld [vmem:[%s215 + $0x8c] sm:$0xf]
      %v297 = vld [vmem:[%s215 + $0x90] sm:$0xf]
      %v298 = vld [vmem:[%s215 + $0x94] sm:$0xf]
      %v299 = vld [vmem:[%s215 + $0x98] sm:$0xf]
      %v300 = vld [vmem:[%s215 + $0x9c] sm:$0xf]
      %v301 = vld [vmem:[%s215 + $0xa0] sm:$0xf]
      %v302 = vld [vmem:[%s215 + $0xa4] sm:$0xf]
      %v303 = vld [vmem:[%s215 + $0xa8] sm:$0xf]
      %v304 = vld [vmem:[%s215 + $0xac] sm:$0xf]
      %v305 = vld [vmem:[%s215 + $0xb0] sm:$0xf]
      %v306 = vld [vmem:[%s215 + $0xb4] sm:$0xf]
      %v307 = vld [vmem:[%s215 + $0xb8] sm:$0xf]
      %v308 = vld [vmem:[%s215 + $0xbc] sm:$0xf]
      %v309 = vld [vmem:[%s215 + $0xc0] sm:$0xf]
      %v310 = vld [vmem:[%s215 + $0xc4] sm:$0xf]
      %v311 = vld [vmem:[%s215 + $0xc8] sm:$0xf]
      %v312 = vld [vmem:[%s215 + $0xcc] sm:$0xf]
      %v313 = vld [vmem:[%s215 + $0xd0] sm:$0xf]
      %v314 = vld [vmem:[%s215 + $0xd4] sm:$0xf]
      %v315 = vld [vmem:[%s215 + $0xd8] sm:$0xf]
      %v316 = vld [vmem:[%s215 + $0xdc] sm:$0xf]
      %v317 = vld [vmem:[%s215 + $0xe0] sm:$0xf]
      %v318 = vld [vmem:[%s215 + $0xe4] sm:$0xf]
      %v319 = vld [vmem:[%s215 + $0xe8] sm:$0xf]
      %v320 = vld [vmem:[%s215 + $0xec] sm:$0xf]
      %v321 = vld [vmem:[%s215 + $0xf0] sm:$0xf]
      %v322 = vld [vmem:[%s215 + $0xf4] sm:$0xf]
      %v323 = vld [vmem:[%s215 + $0xf8] sm:$0xf]
      %v324 = vld [vmem:[%s215 + $0xfc] sm:$0xf]
      %v325 = vld [vmem:[%s218] sm:$0x1]
      %v327 = vlaneseq
      %v328 = vshrl.u32 %v327, 7
      %v329 = vsub.s32 0, %v328
      %v330 = vrot.slane %v325, %v329
      %v364 = vunpack.c.l.b16 %v229
      %v365 = vunpack.c.h.b16 %v229
      %v366 = vunpack.c.l.b16 %v230
      %v367 = vunpack.c.h.b16 %v230
      %v368 = vunpack.c.l.b16 %v231
      %v369 = vunpack.c.h.b16 %v231
      %v370 = vunpack.c.l.b16 %v232
      %v371 = vunpack.c.h.b16 %v232
      %v372 = vunpack.c.l.b16 %v233
      %v373 = vunpack.c.h.b16 %v233
      %v374 = vunpack.c.l.b16 %v234
      %v375 = vunpack.c.h.b16 %v234
      %v376 = vunpack.c.l.b16 %v235
      %v377 = vunpack.c.h.b16 %v235
      %v378 = vunpack.c.l.b16 %v236
      %v379 = vunpack.c.h.b16 %v236
      %v380 = vunpack.c.l.b16 %v237
      %v381 = vunpack.c.h.b16 %v237
      %v382 = vunpack.c.l.b16 %v238
      %v383 = vunpack.c.h.b16 %v238
      %v384 = vunpack.c.l.b16 %v239
      %v385 = vunpack.c.h.b16 %v239
      %v386 = vunpack.c.l.b16 %v240
      %v387 = vunpack.c.h.b16 %v240
      %v388 = vunpack.c.l.b16 %v241
      %v389 = vunpack.c.h.b16 %v241
      %v390 = vunpack.c.l.b16 %v242
      %v391 = vunpack.c.h.b16 %v242
      %v392 = vunpack.c.l.b16 %v243
      %v393 = vunpack.c.h.b16 %v243
      %v394 = vunpack.c.l.b16 %v244
      %v395 = vunpack.c.h.b16 %v244
      %v396 = vunpack.c.l.b16 %v245
      %v397 = vunpack.c.h.b16 %v245
      %v398 = vunpack.c.l.b16 %v246
      %v399 = vunpack.c.h.b16 %v246
      %v400 = vunpack.c.l.b16 %v247
      %v401 = vunpack.c.h.b16 %v247
      %v402 = vunpack.c.l.b16 %v248
      %v403 = vunpack.c.h.b16 %v248
      %v404 = vunpack.c.l.b16 %v249
      %v405 = vunpack.c.h.b16 %v249
      %v406 = vunpack.c.l.b16 %v250
      %v407 = vunpack.c.h.b16 %v250
      %v408 = vunpack.c.l.b16 %v251
      %v409 = vunpack.c.h.b16 %v251
      %v410 = vunpack.c.l.b16 %v252
      %v411 = vunpack.c.h.b16 %v252
      %v412 = vunpack.c.l.b16 %v253
      %v413 = vunpack.c.h.b16 %v253
      %v414 = vunpack.c.l.b16 %v254
      %v415 = vunpack.c.h.b16 %v254
      %v416 = vunpack.c.l.b16 %v255
      %v417 = vunpack.c.h.b16 %v255
      %v418 = vunpack.c.l.b16 %v256
      %v419 = vunpack.c.h.b16 %v256
      %v420 = vunpack.c.l.b16 %v257
      %v421 = vunpack.c.h.b16 %v257
      %v422 = vunpack.c.l.b16 %v258
      %v423 = vunpack.c.h.b16 %v258
      %v424 = vunpack.c.l.b16 %v259
      %v425 = vunpack.c.h.b16 %v259
      %v426 = vunpack.c.l.b16 %v260
      %v427 = vunpack.c.h.b16 %v260
      %v428 = vpack.c.b16 %v368, %v364
      %v429 = vpack.c.b16 %v369, %v365
      %v430 = vpack.c.b16 %v370, %v366
      %v431 = vpack.c.b16 %v371, %v367
      %v432 = vpack.c.b16 %v376, %v372
      %v433 = vpack.c.b16 %v377, %v373
      %v434 = vpack.c.b16 %v378, %v374
      %v435 = vpack.c.b16 %v379, %v375
      %v436 = vpack.c.b16 %v384, %v380
      %v437 = vpack.c.b16 %v385, %v381
      %v438 = vpack.c.b16 %v386, %v382
      %v439 = vpack.c.b16 %v387, %v383
      %v440 = vpack.c.b16 %v392, %v388
      %v441 = vpack.c.b16 %v393, %v389
      %v442 = vpack.c.b16 %v394, %v390
      %v443 = vpack.c.b16 %v395, %v391
      %v444 = vpack.c.b16 %v400, %v396
      %v445 = vpack.c.b16 %v401, %v397
      %v446 = vpack.c.b16 %v402, %v398
      %v447 = vpack.c.b16 %v403, %v399
      %v448 = vpack.c.b16 %v408, %v404
      %v449 = vpack.c.b16 %v409, %v405
      %v450 = vpack.c.b16 %v410, %v406
      %v451 = vpack.c.b16 %v411, %v407
      %v452 = vpack.c.b16 %v416, %v412
      %v453 = vpack.c.b16 %v417, %v413
      %v454 = vpack.c.b16 %v418, %v414
      %v455 = vpack.c.b16 %v419, %v415
      %v456 = vpack.c.b16 %v424, %v420
      %v457 = vpack.c.b16 %v425, %v421
      %v458 = vpack.c.b16 %v426, %v422
      %v459 = vpack.c.b16 %v427, %v423
      %v556 = vunpack.c.l.b16 %v261
      %v557 = vunpack.c.l.b16 %v262
      %v558 = vunpack.c.l.b16 %v263
      %v559 = vunpack.c.l.b16 %v264
      %v560 = vunpack.c.l.b16 %v265
      %v561 = vunpack.c.l.b16 %v266
      %v562 = vunpack.c.l.b16 %v267
      %v563 = vunpack.c.l.b16 %v268
      %v564 = vunpack.c.l.b16 %v269
      %v565 = vunpack.c.l.b16 %v270
      %v566 = vunpack.c.l.b16 %v271
      %v567 = vunpack.c.l.b16 %v272
      %v568 = vunpack.c.l.b16 %v273
      %v569 = vunpack.c.l.b16 %v274
      %v570 = vunpack.c.l.b16 %v275
      %v571 = vunpack.c.l.b16 %v276
      %v572 = vunpack.c.l.b16 %v277
      %v573 = vunpack.c.l.b16 %v278
      %v574 = vunpack.c.l.b16 %v279
      %v575 = vunpack.c.l.b16 %v280
      %v576 = vunpack.c.l.b16 %v281
      %v577 = vunpack.c.l.b16 %v282
      %v578 = vunpack.c.l.b16 %v283
      %v579 = vunpack.c.l.b16 %v284
      %v580 = vunpack.c.l.b16 %v285
      %v581 = vunpack.c.l.b16 %v286
      %v582 = vunpack.c.l.b16 %v287
      %v583 = vunpack.c.l.b16 %v288
      %v584 = vunpack.c.l.b16 %v289
      %v585 = vunpack.c.l.b16 %v290
      %v586 = vunpack.c.l.b16 %v291
      %v587 = vunpack.c.l.b16 %v292
      %v588 = vunpack.c.l.b16 %v293
      %v589 = vunpack.c.l.b16 %v294
      %v590 = vunpack.c.l.b16 %v295
      %v591 = vunpack.c.l.b16 %v296
      %v592 = vunpack.c.l.b16 %v297
      %v593 = vunpack.c.l.b16 %v298
      %v594 = vunpack.c.l.b16 %v299
      %v595 = vunpack.c.l.b16 %v300
      %v596 = vunpack.c.l.b16 %v301
      %v597 = vunpack.c.l.b16 %v302
      %v598 = vunpack.c.l.b16 %v303
      %v599 = vunpack.c.l.b16 %v304
      %v600 = vunpack.c.l.b16 %v305
      %v601 = vunpack.c.l.b16 %v306
      %v602 = vunpack.c.l.b16 %v307
      %v603 = vunpack.c.l.b16 %v308
      %v604 = vunpack.c.l.b16 %v309
      %v605 = vunpack.c.l.b16 %v310
      %v606 = vunpack.c.l.b16 %v311
      %v607 = vunpack.c.l.b16 %v312
      %v608 = vunpack.c.l.b16 %v313
      %v609 = vunpack.c.l.b16 %v314
      %v610 = vunpack.c.l.b16 %v315
      %v611 = vunpack.c.l.b16 %v316
      %v612 = vunpack.c.l.b16 %v317
      %v613 = vunpack.c.l.b16 %v318
      %v614 = vunpack.c.l.b16 %v319
      %v615 = vunpack.c.l.b16 %v320
      %v616 = vunpack.c.l.b16 %v321
      %v617 = vunpack.c.l.b16 %v322
      %v618 = vunpack.c.l.b16 %v323
      %v619 = vunpack.c.l.b16 %v324
      %v620 = vpack.c.b16 %v557, %v556
      %v621 = vpack.c.b16 %v559, %v558
      %v622 = vpack.c.b16 %v561, %v560
      %v623 = vpack.c.b16 %v563, %v562
      %v624 = vpack.c.b16 %v565, %v564
      %v625 = vpack.c.b16 %v567, %v566
      %v626 = vpack.c.b16 %v569, %v568
      %v627 = vpack.c.b16 %v571, %v570
      %v628 = vpack.c.b16 %v573, %v572
      %v629 = vpack.c.b16 %v575, %v574
      %v630 = vpack.c.b16 %v577, %v576
      %v631 = vpack.c.b16 %v579, %v578
      %v632 = vpack.c.b16 %v581, %v580
      %v633 = vpack.c.b16 %v583, %v582
      %v634 = vpack.c.b16 %v585, %v584
      %v635 = vpack.c.b16 %v587, %v586
      %v636 = vpack.c.b16 %v589, %v588
      %v637 = vpack.c.b16 %v591, %v590
      %v638 = vpack.c.b16 %v593, %v592
      %v639 = vpack.c.b16 %v595, %v594
      %v640 = vpack.c.b16 %v597, %v596
      %v641 = vpack.c.b16 %v599, %v598
      %v642 = vpack.c.b16 %v601, %v600
      %v643 = vpack.c.b16 %v603, %v602
      %v644 = vpack.c.b16 %v605, %v604
      %v645 = vpack.c.b16 %v607, %v606
      %v646 = vpack.c.b16 %v609, %v608
      %v647 = vpack.c.b16 %v611, %v610
      %v648 = vpack.c.b16 %v613, %v612
      %v649 = vpack.c.b16 %v615, %v614
      %v650 = vpack.c.b16 %v617, %v616
      %v651 = vpack.c.b16 %v619, %v618
      %684 = vmatprep.subr.bf16.mxu0 0
      %685 = vmatpush1.bf16.msra.mxu0 %v620
      %686 = vmatprep.subr.bf16.mxu0 0
      %687 = vmatpush1.bf16.msra.mxu0 %v621
      %688 = vmatprep.subr.bf16.mxu0 0
      %689 = vmatpush1.bf16.msra.mxu0 %v622
      %690 = vmatprep.subr.bf16.mxu0 0
      %691 = vmatpush1.bf16.msra.mxu0 %v623
      %692 = vmatprep.subr.bf16.mxu0 0
      %693 = vmatpush1.bf16.msra.mxu0 %v624
      %694 = vmatprep.subr.bf16.mxu0 0
      %695 = vmatpush1.bf16.msra.mxu0 %v625
      %696 = vmatprep.subr.bf16.mxu0 0
      %697 = vmatpush1.bf16.msra.mxu0 %v626
      %698 = vmatprep.subr.bf16.mxu0 0
      %699 = vmatpush1.bf16.msra.mxu0 %v627
      %700 = vmatprep.subr.bf16.mxu0 0
      %701 = vmatpush1.bf16.msra.mxu0 %v628
      %702 = vmatprep.subr.bf16.mxu0 0
      %703 = vmatpush1.bf16.msra.mxu0 %v629
      %704 = vmatprep.subr.bf16.mxu0 0
      %705 = vmatpush1.bf16.msra.mxu0 %v630
      %706 = vmatprep.subr.bf16.mxu0 0
      %707 = vmatpush1.bf16.msra.mxu0 %v631
      %708 = vmatprep.subr.bf16.mxu0 0
      %709 = vmatpush1.bf16.msra.mxu0 %v632
      %710 = vmatprep.subr.bf16.mxu0 0
      %711 = vmatpush1.bf16.msra.mxu0 %v633
      %712 = vmatprep.subr.bf16.mxu0 0
      %713 = vmatpush1.bf16.msra.mxu0 %v634
      %714 = vmatprep.subr.bf16.mxu0 0
      %715 = vmatpush1.bf16.msra.mxu0 %v635
      %716 = vmatprep.mubr.bf16.mxu0 %v429
      %717 = vmatmul.mubr.bf16.gmra.mrb[0].mxu0 %v428
      %v718 = vpop.f32.mrb[0].mxu0
      %v719 = vadd.f32 %v330, %v718
      %v720 = vpop.f32.mrb[0].mxu0
      %v721 = vpop.f32.mrb[0].mxu0
      %v722 = vadd.f32 %v330, %v721
      %v723 = vpop.f32.mrb[0].mxu0
      %724 = vmatprep.mubr.bf16.mxu0 %v433
      %725 = vmatmul.mubr.bf16.gmra.mrb[0].mxu0 %v432
      %v726 = vpop.f32.mrb[0].mxu0
      %v727 = vadd.f32 %v330, %v726
      %v728 = vpop.f32.mrb[0].mxu0
      %v729 = vpop.f32.mrb[0].mxu0
      %v730 = vadd.f32 %v330, %v729
      %v731 = vpop.f32.mrb[0].mxu0
      %732 = vmatprep.mubr.bf16.mxu0 %v437
      %733 = vmatmul.mubr.bf16.gmra.mrb[0].mxu0 %v436
      %v734 = vpop.f32.mrb[0].mxu0
      %v735 = vadd.f32 %v330, %v734
      %v736 = vpop.f32.mrb[0].mxu0
      %v737 = vpop.f32.mrb[0].mxu0
      %v738 = vadd.f32 %v330, %v737
      %v739 = vpop.f32.mrb[0].mxu0
      %740 = vmatprep.mubr.bf16.mxu0 %v441
      %741 = vmatmul.mubr.bf16.gmra.mrb[0].mxu0 %v440
      %v742 = vpop.f32.mrb[0].mxu0
      %v743 = vadd.f32 %v330, %v742
      %v744 = vpop.f32.mrb[0].mxu0
      %v745 = vpop.f32.mrb[0].mxu0
      %v746 = vadd.f32 %v330, %v745
      %v747 = vpop.f32.mrb[0].mxu0
      %748 = vmatprep.mubr.bf16.mxu0 %v445
      %749 = vmatmul.mubr.bf16.gmra.mrb[0].mxu0 %v444
      %v750 = vpop.f32.mrb[0].mxu0
      %v751 = vadd.f32 %v330, %v750
      %v752 = vpop.f32.mrb[0].mxu0
      %v753 = vpop.f32.mrb[0].mxu0
      %v754 = vadd.f32 %v330, %v753
      %v755 = vpop.f32.mrb[0].mxu0
      %756 = vmatprep.mubr.bf16.mxu0 %v449
      %757 = vmatmul.mubr.bf16.gmra.mrb[0].mxu0 %v448
      %v758 = vpop.f32.mrb[0].mxu0
      %v759 = vadd.f32 %v330, %v758
      %v760 = vpop.f32.mrb[0].mxu0
      %v761 = vpop.f32.mrb[0].mxu0
      %v762 = vadd.f32 %v330, %v761
      %v763 = vpop.f32.mrb[0].mxu0
      %764 = vmatprep.mubr.bf16.mxu0 %v453
      %765 = vmatmul.mubr.bf16.gmra.mrb[0].mxu0 %v452
      %v766 = vpop.f32.mrb[0].mxu0
      %v767 = vadd.f32 %v330, %v766
      %v768 = vpop.f32.mrb[0].mxu0
      %v769 = vpop.f32.mrb[0].mxu0
      %v770 = vadd.f32 %v330, %v769
      %v771 = vpop.f32.mrb[0].mxu0
      %772 = vmatprep.mubr.bf16.mxu0 %v457
      %773 = vmatmul.mubr.bf16.gmra.mrb[0].mxu0 %v456
      %v774 = vpop.f32.mrb[0].mxu0
      %v775 = vadd.f32 %v330, %v774
      %v776 = vpop.f32.mrb[0].mxu0
      %v777 = vpop.f32.mrb[0].mxu0
      %v778 = vadd.f32 %v330, %v777
      %v779 = vpop.f32.mrb[0].mxu0
      %780 = vdwg.mxu0
      %781 = vmatprep.subr.bf16.mxu0 0
      %782 = vmatpush1.bf16.msra.mxu0 %v636
      %783 = vmatprep.subr.bf16.mxu0 0
      %784 = vmatpush1.bf16.msra.mxu0 %v637
      %785 = vmatprep.subr.bf16.mxu0 0
      %786 = vmatpush1.bf16.msra.mxu0 %v638
      %787 = vmatprep.subr.bf16.mxu0 0
      %788 = vmatpush1.bf16.msra.mxu0 %v639
      %789 = vmatprep.subr.bf16.mxu0 0
      %790 = vmatpush1.bf16.msra.mxu0 %v640
      %791 = vmatprep.subr.bf16.mxu0 0
      %792 = vmatpush1.bf16.msra.mxu0 %v641
      %793 = vmatprep.subr.bf16.mxu0 0
      %794 = vmatpush1.bf16.msra.mxu0 %v642
      %795 = vmatprep.subr.bf16.mxu0 0
      %796 = vmatpush1.bf16.msra.mxu0 %v643
      %797 = vmatprep.subr.bf16.mxu0 0
      %798 = vmatpush1.bf16.msra.mxu0 %v644
      %799 = vmatprep.subr.bf16.mxu0 0
      %800 = vmatpush1.bf16.msra.mxu0 %v645
      %801 = vmatprep.subr.bf16.mxu0 0
      %802 = vmatpush1.bf16.msra.mxu0 %v646
      %803 = vmatprep.subr.bf16.mxu0 0
      %804 = vmatpush1.bf16.msra.mxu0 %v647
      %805 = vmatprep.subr.bf16.mxu0 0
      %806 = vmatpush1.bf16.msra.mxu0 %v648
      %807 = vmatprep.subr.bf16.mxu0 0
      %808 = vmatpush1.bf16.msra.mxu0 %v649
      %809 = vmatprep.subr.bf16.mxu0 0
      %810 = vmatpush1.bf16.msra.mxu0 %v650
      %811 = vmatprep.subr.bf16.mxu0 0
      %812 = vmatpush1.bf16.msra.mxu0 %v651
      %813 = vmatprep.mubr.bf16.mxu0 %v431
      %814 = vmatmul.mubr.bf16.gmra.mrb[0].mxu0 %v430
      %v815 = vpop.f32.mrb[0].mxu0
      %v816 = vadd.f32 %v719, %v815
      %v817 = vpop.f32.mrb[0].mxu0
      %v818 = vpop.f32.mrb[0].mxu0
      %v819 = vadd.f32 %v722, %v818
      %v820 = vpop.f32.mrb[0].mxu0
      %821 = vmatprep.mubr.bf16.mxu0 %v435
      %822 = vmatmul.mubr.bf16.gmra.mrb[0].mxu0 %v434
      %v823 = vpop.f32.mrb[0].mxu0
      %v824 = vadd.f32 %v727, %v823
      %v825 = vpop.f32.mrb[0].mxu0
      %v826 = vpop.f32.mrb[0].mxu0
      %v827 = vadd.f32 %v730, %v826
      %v828 = vpop.f32.mrb[0].mxu0
      %829 = vmatprep.mubr.bf16.mxu0 %v439
      %830 = vmatmul.mubr.bf16.gmra.mrb[0].mxu0 %v438
      %v831 = vpop.f32.mrb[0].mxu0
      %v832 = vadd.f32 %v735, %v831
      %v833 = vpop.f32.mrb[0].mxu0
      %v834 = vpop.f32.mrb[0].mxu0
      %v835 = vadd.f32 %v738, %v834
      %v836 = vpop.f32.mrb[0].mxu0
      %837 = vmatprep.mubr.bf16.mxu0 %v443
      %838 = vmatmul.mubr.bf16.gmra.mrb[0].mxu0 %v442
      %v839 = vpop.f32.mrb[0].mxu0
      %v840 = vadd.f32 %v743, %v839
      %v841 = vpop.f32.mrb[0].mxu0
      %v842 = vpop.f32.mrb[0].mxu0
      %v843 = vadd.f32 %v746, %v842
      %v844 = vpop.f32.mrb[0].mxu0
      %845 = vmatprep.mubr.bf16.mxu0 %v447
      %846 = vmatmul.mubr.bf16.gmra.mrb[0].mxu0 %v446
      %v847 = vpop.f32.mrb[0].mxu0
      %v848 = vadd.f32 %v751, %v847
      %v849 = vpop.f32.mrb[0].mxu0
      %v850 = vpop.f32.mrb[0].mxu0
      %v851 = vadd.f32 %v754, %v850
      %v852 = vpop.f32.mrb[0].mxu0
      %853 = vmatprep.mubr.bf16.mxu0 %v451
      %854 = vmatmul.mubr.bf16.gmra.mrb[0].mxu0 %v450
      %v855 = vpop.f32.mrb[0].mxu0
      %v856 = vadd.f32 %v759, %v855
      %v857 = vpop.f32.mrb[0].mxu0
      %v858 = vpop.f32.mrb[0].mxu0
      %v859 = vadd.f32 %v762, %v858
      %v860 = vpop.f32.mrb[0].mxu0
      %861 = vmatprep.mubr.bf16.mxu0 %v455
      %862 = vmatmul.mubr.bf16.gmra.mrb[0].mxu0 %v454
      %v863 = vpop.f32.mrb[0].mxu0
      %v864 = vadd.f32 %v767, %v863
      %v865 = vpop.f32.mrb[0].mxu0
      %v866 = vpop.f32.mrb[0].mxu0
      %v867 = vadd.f32 %v770, %v866
      %v868 = vpop.f32.mrb[0].mxu0
      %869 = vmatprep.mubr.bf16.mxu0 %v459
      %870 = vmatmul.mubr.bf16.gmra.mrb[0].mxu0 %v458
      %v871 = vpop.f32.mrb[0].mxu0
      %v872 = vadd.f32 %v775, %v871
      %v873 = vpop.f32.mrb[0].mxu0
      %v874 = vpop.f32.mrb[0].mxu0
      %v875 = vadd.f32 %v778, %v874
      %v876 = vpop.f32.mrb[0].mxu0
      %877 = vdwg.mxu0
      %v878 = vmax.f32 %v816, 0.0
      %v879 = vmax.f32 %v819, 0.0
      %v880 = vmax.f32 %v824, 0.0
      %v881 = vmax.f32 %v827, 0.0
      %v882 = vmax.f32 %v832, 0.0
      %v883 = vmax.f32 %v835, 0.0
      %v884 = vmax.f32 %v840, 0.0
      %v885 = vmax.f32 %v843, 0.0
      %v886 = vmax.f32 %v848, 0.0
      %v887 = vmax.f32 %v851, 0.0
      %v888 = vmax.f32 %v856, 0.0
      %v889 = vmax.f32 %v859, 0.0
      %v890 = vmax.f32 %v864, 0.0
      %v891 = vmax.f32 %v867, 0.0
      %v892 = vmax.f32 %v872, 0.0
      %v893 = vmax.f32 %v875, 0.0
      %894 = vst [vmem:[%s226] sm:$0xff] %v878
      %895 = vst [vmem:[%s226 + $0x8] sm:$0xff] %v879
      %896 = vst [vmem:[%s226 + $0x10] sm:$0xff] %v880
      %897 = vst [vmem:[%s226 + $0x18] sm:$0xff] %v881
      %898 = vst [vmem:[%s226 + $0x20] sm:$0xff] %v882
      %899 = vst [vmem:[%s226 + $0x28] sm:$0xff] %v883
      %900 = vst [vmem:[%s226 + $0x30] sm:$0xff] %v884
      %901 = vst [vmem:[%s226 + $0x38] sm:$0xff] %v885
      %902 = vst [vmem:[%s226 + $0x40] sm:$0xff] %v886
      %903 = vst [vmem:[%s226 + $0x48] sm:$0xff] %v887
      %904 = vst [vmem:[%s226 + $0x50] sm:$0xff] %v888
      %905 = vst [vmem:[%s226 + $0x58] sm:$0xff] %v889
      %906 = vst [vmem:[%s226 + $0x60] sm:$0xff] %v890
      %907 = vst [vmem:[%s226 + $0x68] sm:$0xff] %v891
      %908 = vst [vmem:[%s226 + $0x70] sm:$0xff] %v892
      %909 = vst [vmem:[%s226 + $0x78] sm:$0xff] %v893
      %s910 = smul.u32 16, %s18
      %p911 = scmp.lt.s32.totalorder %s910, 31
      %s912 = scalar_select %p911, %s910, 31
      %p913 = scmp.lt.s32.totalorder %s19, 0
      %s914 = scalar_select %p913, %s19, 0
      %s915 = sadd.s32 %s914, %s912
      %s916 = smul.addr %s915, 8
      %s917 = scalar_lea.vmem %s3, %s916
      // Predicated region
      $region33: #{vsnet_forward.15} parent=31 // pred_check
        %p918 = pneg %p124
      $region34: #{vsnet_forward.15} parent=31 // pred_check_branch
        %920 = sbr.rel (%p918) target = $region36
      $region35: #{vsnet_forward.15} parent=31 // pred_region
        %s921 = smul.u32 16, %s18
      $region36: #{vsnet_forward.15} parent=31 // pred_fallthru
        _
    $region32: #{vsnet_forward.15} parent=5 // pred_fallthru
      _
    %p922 = scmp.le.s32.totalorder 2, %s9
    // Predicated region
    $region37: #{vsnet_forward.15} parent=5 // pred_check
      %p923 = pneg %p922
    $region38: #{vsnet_forward.15} parent=5 // pred_check_branch
      %925 = sbr.rel (%p923) target = $region40
    $region39: #{vsnet_forward.15} parent=5 // pred_region
      %s926 = ssub.s32 %s9, 2
      // Predicated region
      $region41: #{vsnet_forward.15} parent=39 // pred_check
        %p927 = pneg %p130
      $region42: #{vsnet_forward.15} parent=39 // pred_check_branch
        %929 = sbr.rel (%p927) target = $region44
      $region43: #{vsnet_forward.15} parent=39 // pred_region
        %s930 = smul.u32 16, %s20
        %p931 = scmp.lt.s32.totalorder %s930, 31
        %s932 = scalar_select %p931, %s930, 31
        %p933 = scmp.lt.s32.totalorder %s21, 0
        %s934 = scalar_select %p933, %s21, 0
        %s935 = sadd.s32 %s934, %s932
        %s936 = smul.addr %s935, 8
        %s937 = scalar_lea.vmem %s3, %s936
      $region44: #{vsnet_forward.15} parent=39 // pred_fallthru
        _
    $region40: #{vsnet_forward.15} parent=5 // pred_fallthru
      _
  $region6: #{vsnet_forward.15} parent=0 // loop_footer
    %s13 = sadd.s32 1, %s9
  $region7: #{vsnet_forward.15} parent=0 // loop_footer_branch
    %8 = sbr.rel target = $region3
  $region8: #{vsnet_forward.15} parent=0 // loop_exit
    _

// kernel: vsnet_forward.17
$region0: #{vsnet_forward.17}
  #allocation0 [shape = 'u32[]', space=smem, size = 0x4, offset = 0x4, fixed_abs, tag = 'smem constant byte address 0x4 - core index']
  #allocation1 [shape = 'u32[144,128]{1,0:T(1,128)}', space=vmem, size = 0x12000, scoped, tag = 'internal scratch']
  %s0 = inlined_call_operand.vmem [shape: f32[4,192], index: 0, kind: input, shape index: {}]
  %s1 = inlined_call_operand.vmem [shape: f32[4,192], index: 1, kind: input, shape index: {}]
  %s2 = inlined_call_operand.vmem [shape: f32[4,192], index: 2, kind: input, shape index: {}]
  %s3 = inlined_call_operand.vmem [shape: f32[4,192], index: 3, kind: input, shape index: {}]
  %s4 = inlined_call_operand.vmem [shape: f32[4,192], index: 4, kind: input, shape index: {}]
  %s5 = inlined_call_operand.vmem [shape: f32[4,192], index: 5, kind: input, shape index: {}]
  %s6 = inlined_call_operand.vmem [shape: f32[4,192], index: 6, kind: input, shape index: {}]
  %s7 = inlined_call_operand.vmem [shape: f32[4,192], index: 7, kind: input, shape index: {}]
  %s8 = inlined_call_operand.vmem [shape: f32[4,192], index: 8, kind: input, shape index: {}]
  %s9 = inlined_call_operand.vmem [shape: f32[4,192], index: 9, kind: output, shape index: {}]
  %s10 = sld [smem:[#allocation0]]
  $region46: #{vsnet_forward.17} parent=0
    _
  %s12 = ssub.s32 1, %s10
  %s13 = scalar_select 0, %s12, %s10
  // Predicated region
  $region2: #{vsnet_forward.17} parent=0 // pred_check
    _
  $region3: #{vsnet_forward.17} parent=0 // pred_check_branch
    %15 = sbr.rel (0) target = $region5
  $region4: #{vsnet_forward.17} parent=0 // pred_region
    _
  $region5: #{vsnet_forward.17} parent=0 // pred_fallthru
    _
  // Predicated region
  $region6: #{vsnet_forward.17} parent=0 // pred_check
    _
  $region7: #{vsnet_forward.17} parent=0 // pred_check_branch
    %17 = sbr.rel (0) target = $region9
  $region8: #{vsnet_forward.17} parent=0 // pred_region
    _
  $region9: #{vsnet_forward.17} parent=0 // pred_fallthru
    _
  // Predicated region
  $region10: #{vsnet_forward.17} parent=0 // pred_check
    _
  $region11: #{vsnet_forward.17} parent=0 // pred_check_branch
    %19 = sbr.rel (0) target = $region13
  $region12: #{vsnet_forward.17} parent=0 // pred_region
    _
  $region13: #{vsnet_forward.17} parent=0 // pred_fallthru
    _
  // Predicated region
  $region14: #{vsnet_forward.17} parent=0 // pred_check
    _
  $region15: #{vsnet_forward.17} parent=0 // pred_check_branch
    %21 = sbr.rel (0) target = $region17
  $region16: #{vsnet_forward.17} parent=0 // pred_region
    _
  $region17: #{vsnet_forward.17} parent=0 // pred_fallthru
    _
  // Predicated region
  $region18: #{vsnet_forward.17} parent=0 // pred_check
    _
  $region19: #{vsnet_forward.17} parent=0 // pred_check_branch
    %23 = sbr.rel (0) target = $region21
  $region20: #{vsnet_forward.17} parent=0 // pred_region
    _
  $region21: #{vsnet_forward.17} parent=0 // pred_fallthru
    _
  // Predicated region
  $region22: #{vsnet_forward.17} parent=0 // pred_check
    _
  $region23: #{vsnet_forward.17} parent=0 // pred_check_branch
    %25 = sbr.rel (0) target = $region25
  $region24: #{vsnet_forward.17} parent=0 // pred_region
    _
  $region25: #{vsnet_forward.17} parent=0 // pred_fallthru
    _
  // Predicated region
  $region26: #{vsnet_forward.17} parent=0 // pred_check
    _
  $region27: #{vsnet_forward.17} parent=0 // pred_check_branch
    %27 = sbr.rel (0) target = $region29
  $region28: #{vsnet_forward.17} parent=0 // pred_region
    _
  $region29: #{vsnet_forward.17} parent=0 // pred_fallthru
    _
  // Predicated region
  $region30: #{vsnet_forward.17} parent=0 // pred_check
    _
  $region31: #{vsnet_forward.17} parent=0 // pred_check_branch
    %29 = sbr.rel (0) target = $region33
  $region32: #{vsnet_forward.17} parent=0 // pred_region
    _
  $region33: #{vsnet_forward.17} parent=0 // pred_fallthru
    _
  // Predicated region
  $region34: #{vsnet_forward.17} parent=0 // pred_check
    _
  $region35: #{vsnet_forward.17} parent=0 // pred_check_branch
    %31 = sbr.rel (0) target = $region37
  $region36: #{vsnet_forward.17} parent=0 // pred_region
    _
  $region37: #{vsnet_forward.17} parent=0 // pred_fallthru
    _
  %v32 = vld [vmem:[%s0] sm:$0xff]
  %v33 = vld [vmem:[%s1] sm:$0xff]
  %v34 = vmax.f32 %v32, %v33
  %v35 = vld [vmem:[%s2] sm:$0xff]
  %v36 = vmax.f32 %v34, %v35
  %v37 = vld [vmem:[%s3] sm:$0xff]
  %v38 = vmax.f32 %v36, %v37
  %v39 = vld [vmem:[%s4] sm:$0xff]
  %v40 = vmax.f32 %v38, %v39
  %v41 = vld [vmem:[%s5] sm:$0xff]
  %v42 = vmax.f32 %v40, %v41
  %v43 = vld [vmem:[%s6] sm:$0xff]
  %v44 = vmax.f32 %v42, %v43
  %v45 = vld [vmem:[%s7] sm:$0xff]
  %v46 = vmax.f32 %v44, %v45
  %v47 = vld [vmem:[%s8] sm:$0xff]
  %v48 = vmax.f32 %v46, %v47
  %vm49 = vcmask 1043456
  %vm50 = vcmask 523268
  %vm51 = vmor %vm50, %vm49
  %52 = vst.msk [vmem:[%s9] sm:$0xff] %vm51, %v48
  // Predicated region
  $region38: #{vsnet_forward.17} parent=0 // pred_check
    _
  $region39: #{vsnet_forward.17} parent=0 // pred_check_branch
    %54 = sbr.rel (0) target = $region41
  $region40: #{vsnet_forward.17} parent=0 // pred_region
    _
  $region41: #{vsnet_forward.17} parent=0 // pred_fallthru
    _
  // Predicated region
  $region42: #{vsnet_forward.17} parent=0 // pred_check
    _
  $region43: #{vsnet_forward.17} parent=0 // pred_check_branch
    %56 = sbr.rel (0) target = $region45
  $region44: #{vsnet_forward.17} parent=0 // pred_region
    _
  $region45: #{vsnet_forward.17} parent=0 // pred_fallthru
    _

// kernel: vsnet_forward.18
$region0: #{vsnet_forward.18}
  #allocation0 [shape = 'u32[]', space=smem, size = 0x4, offset = 0x4, fixed_abs, tag = 'smem constant byte address 0x4 - core index']
  #allocation1 [shape = 'u32[144,128]{1,0:T(1,128)}', space=vmem, size = 0x12000, scoped, tag = 'internal scratch']
  %s0 = inlined_call_operand.vmem [shape: bf16[128,128], index: 0, kind: input, shape index: {}]
  %s1 = inlined_call_operand.vmem [shape: bf16[128,128], index: 1, kind: input, shape index: {}]
  %s2 = inlined_call_operand.vmem [shape: f32[1,128], index: 2, kind: input, shape index: {}]
  %s3 = inlined_call_operand.vmem [shape: f32[128,128], index: 3, kind: output, shape index: {}]
  %s4 = sld [smem:[#allocation0]]
  $region22: #{vsnet_forward.18} parent=0
    _
  %s6 = ssub.s32 1, %s4
  %s7 = scalar_select 0, %s6, %s4
  // Predicated region
  $region2: #{vsnet_forward.18} parent=0 // pred_check
    _
  $region3: #{vsnet_forward.18} parent=0 // pred_check_branch
    %9 = sbr.rel (0) target = $region5
  $region4: #{vsnet_forward.18} parent=0 // pred_region
    _
  $region5: #{vsnet_forward.18} parent=0 // pred_fallthru
    _
  // Predicated region
  $region6: #{vsnet_forward.18} parent=0 // pred_check
    _
  $region7: #{vsnet_forward.18} parent=0 // pred_check_branch
    %11 = sbr.rel (0) target = $region9
  $region8: #{vsnet_forward.18} parent=0 // pred_region
    _
  $region9: #{vsnet_forward.18} parent=0 // pred_fallthru
    _
  // Predicated region
  $region10: #{vsnet_forward.18} parent=0 // pred_check
    _
  $region11: #{vsnet_forward.18} parent=0 // pred_check_branch
    %13 = sbr.rel (0) target = $region13
  $region12: #{vsnet_forward.18} parent=0 // pred_region
    _
  $region13: #{vsnet_forward.18} parent=0 // pred_fallthru
    _
  %v15 = vld [vmem:[%s0] sm:$0xf]
  %v16 = vld [vmem:[%s0 + $0x4] sm:$0xf]
  %v17 = vld [vmem:[%s0 + $0x8] sm:$0xf]
  %v18 = vld [vmem:[%s0 + $0xc] sm:$0xf]
  %v19 = vld [vmem:[%s0 + $0x10] sm:$0xf]
  %v20 = vld [vmem:[%s0 + $0x14] sm:$0xf]
  %v21 = vld [vmem:[%s0 + $0x18] sm:$0xf]
  %v22 = vld [vmem:[%s0 + $0x1c] sm:$0xf]
  %v23 = vld [vmem:[%s0 + $0x20] sm:$0xf]
  %v24 = vld [vmem:[%s0 + $0x24] sm:$0xf]
  %v25 = vld [vmem:[%s0 + $0x28] sm:$0xf]
  %v26 = vld [vmem:[%s0 + $0x2c] sm:$0xf]
  %v27 = vld [vmem:[%s0 + $0x30] sm:$0xf]
  %v28 = vld [vmem:[%s0 + $0x34] sm:$0xf]
  %v29 = vld [vmem:[%s0 + $0x38] sm:$0xf]
  %v30 = vld [vmem:[%s0 + $0x3c] sm:$0xf]
  %v31 = vld [vmem:[%s1] sm:$0xf]
  %v32 = vld [vmem:[%s1 + $0x4] sm:$0xf]
  %v33 = vld [vmem:[%s1 + $0x8] sm:$0xf]
  %v34 = vld [vmem:[%s1 + $0xc] sm:$0xf]
  %v35 = vld [vmem:[%s1 + $0x10] sm:$0xf]
  %v36 = vld [vmem:[%s1 + $0x14] sm:$0xf]
  %v37 = vld [vmem:[%s1 + $0x18] sm:$0xf]
  %v38 = vld [vmem:[%s1 + $0x1c] sm:$0xf]
  %v39 = vld [vmem:[%s1 + $0x20] sm:$0xf]
  %v40 = vld [vmem:[%s1 + $0x24] sm:$0xf]
  %v41 = vld [vmem:[%s1 + $0x28] sm:$0xf]
  %v42 = vld [vmem:[%s1 + $0x2c] sm:$0xf]
  %v43 = vld [vmem:[%s1 + $0x30] sm:$0xf]
  %v44 = vld [vmem:[%s1 + $0x34] sm:$0xf]
  %v45 = vld [vmem:[%s1 + $0x38] sm:$0xf]
  %v46 = vld [vmem:[%s1 + $0x3c] sm:$0xf]
  %v47 = vld [vmem:[%s2] sm:$0x1]
  %v49 = vlaneseq
  %v50 = vshrl.u32 %v49, 7
  %v51 = vsub.s32 0, %v50
  %v52 = vrot.slane %v47, %v51
  %v70 = vunpack.c.l.b16 %v15
  %v71 = vunpack.c.l.b16 %v16
  %v72 = vunpack.c.l.b16 %v17
  %v73 = vunpack.c.l.b16 %v18
  %v74 = vunpack.c.l.b16 %v19
  %v75 = vunpack.c.l.b16 %v20
  %v76 = vunpack.c.l.b16 %v21
  %v77 = vunpack.c.l.b16 %v22
  %v78 = vunpack.c.l.b16 %v23
  %v79 = vunpack.c.l.b16 %v24
  %v80 = vunpack.c.l.b16 %v25
  %v81 = vunpack.c.l.b16 %v26
  %v82 = vunpack.c.l.b16 %v27
  %v83 = vunpack.c.l.b16 %v28
  %v84 = vunpack.c.l.b16 %v29
  %v85 = vunpack.c.l.b16 %v30
  %v86 = vpack.c.b16 %v71, %v70
  %v87 = vpack.c.b16 %v73, %v72
  %v88 = vpack.c.b16 %v75, %v74
  %v89 = vpack.c.b16 %v77, %v76
  %v90 = vpack.c.b16 %v79, %v78
  %v91 = vpack.c.b16 %v81, %v80
  %v92 = vpack.c.b16 %v83, %v82
  %v93 = vpack.c.b16 %v85, %v84
  %v118 = vunpack.c.l.b16 %v31
  %v119 = vunpack.c.l.b16 %v32
  %v120 = vunpack.c.l.b16 %v33
  %v121 = vunpack.c.l.b16 %v34
  %v122 = vunpack.c.l.b16 %v35
  %v123 = vunpack.c.l.b16 %v36
  %v124 = vunpack.c.l.b16 %v37
  %v125 = vunpack.c.l.b16 %v38
  %v126 = vunpack.c.l.b16 %v39
  %v127 = vunpack.c.l.b16 %v40
  %v128 = vunpack.c.l.b16 %v41
  %v129 = vunpack.c.l.b16 %v42
  %v130 = vunpack.c.l.b16 %v43
  %v131 = vunpack.c.l.b16 %v44
  %v132 = vunpack.c.l.b16 %v45
  %v133 = vunpack.c.l.b16 %v46
  %v134 = vpack.c.b16 %v119, %v118
  %v135 = vpack.c.b16 %v121, %v120
  %v136 = vpack.c.b16 %v123, %v122
  %v137 = vpack.c.b16 %v125, %v124
  %v138 = vpack.c.b16 %v127, %v126
  %v139 = vpack.c.b16 %v129, %v128
  %v140 = vpack.c.b16 %v131, %v130
  %v141 = vpack.c.b16 %v133, %v132
  %150 = vmatprep.subr.bf16.mxu0 0
  %151 = vmatpush1.bf16.msra.mxu0 %v134
  %152 = vmatprep.subr.bf16.mxu0 0
  %153 = vmatpush1.bf16.msra.mxu0 %v135
  %154 = vmatprep.subr.bf16.mxu0 0
  %155 = vmatpush1.bf16.msra.mxu0 %v136
  %156 = vmatprep.subr.bf16.mxu0 0
  %157 = vmatpush1.bf16.msra.mxu0 %v137
  %158 = vmatprep.subr.bf16.mxu0 0
  %159 = vmatpush1.bf16.msra.mxu0 %v138
  %160 = vmatprep.subr.bf16.mxu0 0
  %161 = vmatpush1.bf16.msra.mxu0 %v139
  %162 = vmatprep.subr.bf16.mxu0 0
  %163 = vmatpush1.bf16.msra.mxu0 %v140
  %164 = vmatprep.subr.bf16.mxu0 0
  %165 = vmatpush1.bf16.msra.mxu0 %v141
  %166 = vmatprep.subr.bf16.mxu0 0
  %167 = vmatpush1.bf16.msra.mxu0 0
  %168 = vmatprep.subr.bf16.mxu0 0
  %169 = vmatpush1.bf16.msra.mxu0 0
  %170 = vmatprep.subr.bf16.mxu0 0
  %171 = vmatpush1.bf16.msra.mxu0 0
  %172 = vmatprep.subr.bf16.mxu0 0
  %173 = vmatpush1.bf16.msra.mxu0 0
  %174 = vmatprep.subr.bf16.mxu0 0
  %175 = vmatpush1.bf16.msra.mxu0 0
  %176 = vmatprep.subr.bf16.mxu0 0
  %177 = vmatpush1.bf16.msra.mxu0 0
  %178 = vmatprep.subr.bf16.mxu0 0
  %179 = vmatpush1.bf16.msra.mxu0 0
  %180 = vmatprep.subr.bf16.mxu0 0
  %181 = vmatpush1.bf16.msra.mxu0 0
  %182 = vmatprep.mubr.bf16.mxu0 0
  %183 = vmatmul.mubr.bf16.gmra.mrb[0].mxu0 %v86
  %v184 = vpop.f32.mrb[0].mxu0
  %v185 = vadd.f32 %v52, %v184
  %v186 = vpop.f32.mrb[0].mxu0
  %v187 = vpop.f32.mrb[0].mxu0
  %v188 = vadd.f32 %v52, %v187
  %v189 = vpop.f32.mrb[0].mxu0
  %190 = vmatprep.mubr.bf16.mxu0 0
  %191 = vmatmul.mubr.bf16.gmra.mrb[0].mxu0 %v87
  %v192 = vpop.f32.mrb[0].mxu0
  %v193 = vadd.f32 %v52, %v192
  %v194 = vpop.f32.mrb[0].mxu0
  %v195 = vpop.f32.mrb[0].mxu0
  %v196 = vadd.f32 %v52, %v195
  %v197 = vpop.f32.mrb[0].mxu0
  %198 = vmatprep.mubr.bf16.mxu0 0
  %199 = vmatmul.mubr.bf16.gmra.mrb[0].mxu0 %v88
  %v200 = vpop.f32.mrb[0].mxu0
  %v201 = vadd.f32 %v52, %v200
  %v202 = vpop.f32.mrb[0].mxu0
  %v203 = vpop.f32.mrb[0].mxu0
  %v204 = vadd.f32 %v52, %v203
  %v205 = vpop.f32.mrb[0].mxu0
  %206 = vmatprep.mubr.bf16.mxu0 0
  %207 = vmatmul.mubr.bf16.gmra.mrb[0].mxu0 %v89
  %v208 = vpop.f32.mrb[0].mxu0
  %v209 = vadd.f32 %v52, %v208
  %v210 = vpop.f32.mrb[0].mxu0
  %v211 = vpop.f32.mrb[0].mxu0
  %v212 = vadd.f32 %v52, %v211
  %v213 = vpop.f32.mrb[0].mxu0
  %214 = vmatprep.mubr.bf16.mxu0 0
  %215 = vmatmul.mubr.bf16.gmra.mrb[0].mxu0 %v90
  %v216 = vpop.f32.mrb[0].mxu0
  %v217 = vadd.f32 %v52, %v216
  %v218 = vpop.f32.mrb[0].mxu0
  %v219 = vpop.f32.mrb[0].mxu0
  %v220 = vadd.f32 %v52, %v219
  %v221 = vpop.f32.mrb[0].mxu0
  %222 = vmatprep.mubr.bf16.mxu0 0
  %223 = vmatmul.mubr.bf16.gmra.mrb[0].mxu0 %v91
  %v224 = vpop.f32.mrb[0].mxu0
  %v225 = vadd.f32 %v52, %v224
  %v226 = vpop.f32.mrb[0].mxu0
  %v227 = vpop.f32.mrb[0].mxu0
  %v228 = vadd.f32 %v52, %v227
  %v229 = vpop.f32.mrb[0].mxu0
  %230 = vmatprep.mubr.bf16.mxu0 0
  %231 = vmatmul.mubr.bf16.gmra.mrb[0].mxu0 %v92
  %v232 = vpop.f32.mrb[0].mxu0
  %v233 = vadd.f32 %v52, %v232
  %v234 = vpop.f32.mrb[0].mxu0
  %v235 = vpop.f32.mrb[0].mxu0
  %v236 = vadd.f32 %v52, %v235
  %v237 = vpop.f32.mrb[0].mxu0
  %238 = vmatprep.mubr.bf16.mxu0 0
  %239 = vmatmul.mubr.bf16.gmra.mrb[0].mxu0 %v93
  %v240 = vpop.f32.mrb[0].mxu0
  %v241 = vadd.f32 %v52, %v240
  %v242 = vpop.f32.mrb[0].mxu0
  %v243 = vpop.f32.mrb[0].mxu0
  %v244 = vadd.f32 %v52, %v243
  %v245 = vpop.f32.mrb[0].mxu0
  %246 = vdwg.mxu0
  %247 = vst [vmem:[%s3] sm:$0xff] %v185
  %248 = vst [vmem:[%s3 + $0x8] sm:$0xff] %v188
  %249 = vst [vmem:[%s3 + $0x10] sm:$0xff] %v193
  %250 = vst [vmem:[%s3 + $0x18] sm:$0xff] %v196
  %251 = vst [vmem:[%s3 + $0x20] sm:$0xff] %v201
  %252 = vst [vmem:[%s3 + $0x28] sm:$0xff] %v204
  %253 = vst [vmem:[%s3 + $0x30] sm:$0xff] %v209
  %254 = vst [vmem:[%s3 + $0x38] sm:$0xff] %v212
  %255 = vst [vmem:[%s3 + $0x40] sm:$0xff] %v217
  %256 = vst [vmem:[%s3 + $0x48] sm:$0xff] %v220
  %257 = vst [vmem:[%s3 + $0x50] sm:$0xff] %v225
  %258 = vst [vmem:[%s3 + $0x58] sm:$0xff] %v228
  %259 = vst [vmem:[%s3 + $0x60] sm:$0xff] %v233
  %260 = vst [vmem:[%s3 + $0x68] sm:$0xff] %v236
  %261 = vst [vmem:[%s3 + $0x70] sm:$0xff] %v241
  %262 = vst [vmem:[%s3 + $0x78] sm:$0xff] %v244
  // Predicated region
  $region14: #{vsnet_forward.18} parent=0 // pred_check
    _
  $region15: #{vsnet_forward.18} parent=0 // pred_check_branch
    %264 = sbr.rel (0) target = $region17
  $region16: #{vsnet_forward.18} parent=0 // pred_region
    _
  $region17: #{vsnet_forward.18} parent=0 // pred_fallthru
    _
  // Predicated region
  $region18: #{vsnet_forward.18} parent=0 // pred_check
    _
  $region19: #{vsnet_forward.18} parent=0 // pred_check_branch
    %266 = sbr.rel (0) target = $region21
  $region20: #{vsnet_forward.18} parent=0 // pred_region
    _
  $region21: #{vsnet_forward.18} parent=0 // pred_fallthru
    _

// kernel: vsnet_forward.19
$region0: #{vsnet_forward.19}
  #allocation0 [shape = 'u32[]', space=smem, size = 0x4, offset = 0x4, fixed_abs, tag = 'smem constant byte address 0x4 - core index']
  #allocation1 [shape = 'u32[144,128]{1,0:T(1,128)}', space=vmem, size = 0x12000, scoped, tag = 'internal scratch']
  %s0 = inlined_call_operand.vmem [shape: f32[8,256], index: 0, kind: input, shape index: {}]
  %s1 = inlined_call_operand.vmem [shape: bf16[8,256,256], index: 1, kind: input, shape index: {}]
  %s2 = inlined_call_operand.vmem [shape: f32[8,1,256], index: 2, kind: input, shape index: {}]
  %s3 = inlined_call_operand.vmem [shape: f32[8,256], index: 3, kind: output, shape index: {}]
  %s4 = sld [smem:[#allocation0]]
  $region22: #{vsnet_forward.19} parent=0
    _
  %s6 = ssub.s32 1, %s4
  %s7 = scalar_select 0, %s6, %s4
  // Predicated region
  $region2: #{vsnet_forward.19} parent=0 // pred_check
    _
  $region3: #{vsnet_forward.19} parent=0 // pred_check_branch
    %9 = sbr.rel (0) target = $region5
  $region4: #{vsnet_forward.19} parent=0 // pred_region
    _
  $region5: #{vsnet_forward.19} parent=0 // pred_fallthru
    _
  // Predicated region
  $region6: #{vsnet_forward.19} parent=0 // pred_check
    _
  $region7: #{vsnet_forward.19} parent=0 // pred_check_branch
    %11 = sbr.rel (0) target = $region9
  $region8: #{vsnet_forward.19} parent=0 // pred_region
    _
  $region9: #{vsnet_forward.19} parent=0 // pred_fallthru
    _
  // Predicated region
  $region10: #{vsnet_forward.19} parent=0 // pred_check
    _
  $region11: #{vsnet_forward.19} parent=0 // pred_check_branch
    %13 = sbr.rel (0) target = $region13
  $region12: #{vsnet_forward.19} parent=0 // pred_region
    _
  $region13: #{vsnet_forward.19} parent=0 // pred_fallthru
    _
  %v14 = vld [vmem:[%s0] sm:$0xff]
  %v15 = vld [vmem:[%s0 + $0x8] sm:$0xff]
  %v16 = vpack.c.bf16 %v14, %v14
  %v17 = vpack.c.bf16 %v15, %v15
  %v18 = vld [vmem:[%s1] sm:$0xff]
  %v19 = vld [vmem:[%s1 + $0x8] sm:$0xff]
  %v20 = vld [vmem:[%s1 + $0x10] sm:$0xff]
  %v21 = vld [vmem:[%s1 + $0x18] sm:$0xff]
  %v22 = vld [vmem:[%s1 + $0x20] sm:$0xff]
  %v23 = vld [vmem:[%s1 + $0x28] sm:$0xff]
  %v24 = vld [vmem:[%s1 + $0x30] sm:$0xff]
  %v25 = vld [vmem:[%s1 + $0x38] sm:$0xff]
  %v26 = vld [vmem:[%s1 + $0x40] sm:$0xff]
  %v27 = vld [vmem:[%s1 + $0x48] sm:$0xff]
  %v28 = vld [vmem:[%s1 + $0x50] sm:$0xff]
  %v29 = vld [vmem:[%s1 + $0x58] sm:$0xff]
  %v30 = vld [vmem:[%s1 + $0x60] sm:$0xff]
  %v31 = vld [vmem:[%s1 + $0x68] sm:$0xff]
  %v32 = vld [vmem:[%s1 + $0x70] sm:$0xff]
  %v33 = vld [vmem:[%s1 + $0x78] sm:$0xff]
  %v34 = vld [vmem:[%s1 + $0x80] sm:$0xff]
  %v35 = vld [vmem:[%s1 + $0x88] sm:$0xff]
  %v36 = vld [vmem:[%s1 + $0x90] sm:$0xff]
  %v37 = vld [vmem:[%s1 + $0x98] sm:$0xff]
  %v38 = vld [vmem:[%s1 + $0xa0] sm:$0xff]
  %v39 = vld [vmem:[%s1 + $0xa8] sm:$0xff]
  %v40 = vld [vmem:[%s1 + $0xb0] sm:$0xff]
  %v41 = vld [vmem:[%s1 + $0xb8] sm:$0xff]
  %v42 = vld [vmem:[%s1 + $0xc0] sm:$0xff]
  %v43 = vld [vmem:[%s1 + $0xc8] sm:$0xff]
  %v44 = vld [vmem:[%s1 + $0xd0] sm:$0xff]
  %v45 = vld [vmem:[%s1 + $0xd8] sm:$0xff]
  %v46 = vld [vmem:[%s1 + $0xe0] sm:$0xff]
  %v47 = vld [vmem:[%s1 + $0xe8] sm:$0xff]
  %v48 = vld [vmem:[%s1 + $0xf0] sm:$0xff]
  %v49 = vld [vmem:[%s1 + $0xf8] sm:$0xff]
  %v50 = vld [vmem:[%s2] sm:$0x3]
  %v52 = vlaneseq
  %v53 = vshrl.u32 %v52, 7
  %v54 = vsub.s32 0, %v53
  %v55 = vrot.slane %v50, %v54
  %v56 = vlaneseq
  %v57 = vshrl.u32 %v56, 7
  %v58 = vsub.s32 1, %v57
  %v59 = vrot.slane %v50, %v58
  %v94 = vunpack.c.l.b16 %v18
  %v95 = vunpack.c.h.b16 %v18
  %v96 = vunpack.c.l.b16 %v19
  %v97 = vunpack.c.h.b16 %v19
  %v98 = vunpack.c.l.b16 %v20
  %v99 = vunpack.c.h.b16 %v20
  %v100 = vunpack.c.l.b16 %v21
  %v101 = vunpack.c.h.b16 %v21
  %v102 = vunpack.c.l.b16 %v22
  %v103 = vunpack.c.h.b16 %v22
  %v104 = vunpack.c.l.b16 %v23
  %v105 = vunpack.c.h.b16 %v23
  %v106 = vunpack.c.l.b16 %v24
  %v107 = vunpack.c.h.b16 %v24
  %v108 = vunpack.c.l.b16 %v25
  %v109 = vunpack.c.h.b16 %v25
  %v110 = vunpack.c.l.b16 %v26
  %v111 = vunpack.c.h.b16 %v26
  %v112 = vunpack.c.l.b16 %v27
  %v113 = vunpack.c.h.b16 %v27
  %v114 = vunpack.c.l.b16 %v28
  %v115 = vunpack.c.h.b16 %v28
  %v116 = vunpack.c.l.b16 %v29
  %v117 = vunpack.c.h.b16 %v29
  %v118 = vunpack.c.l.b16 %v30
  %v119 = vunpack.c.h.b16 %v30
  %v120 = vunpack.c.l.b16 %v31
  %v121 = vunpack.c.h.b16 %v31
  %v122 = vunpack.c.l.b16 %v32
  %v123 = vunpack.c.h.b16 %v32
  %v124 = vunpack.c.l.b16 %v33
  %v125 = vunpack.c.h.b16 %v33
  %v126 = vunpack.c.l.b16 %v34
  %v127 = vunpack.c.h.b16 %v34
  %v128 = vunpack.c.l.b16 %v35
  %v129 = vunpack.c.h.b16 %v35
  %v130 = vunpack.c.l.b16 %v36
  %v131 = vunpack.c.h.b16 %v36
  %v132 = vunpack.c.l.b16 %v37
  %v133 = vunpack.c.h.b16 %v37
  %v134 = vunpack.c.l.b16 %v38
  %v135 = vunpack.c.h.b16 %v38
  %v136 = vunpack.c.l.b16 %v39
  %v137 = vunpack.c.h.b16 %v39
  %v138 = vunpack.c.l.b16 %v40
  %v139 = vunpack.c.h.b16 %v40
  %v140 = vunpack.c.l.b16 %v41
  %v141 = vunpack.c.h.b16 %v41
  %v142 = vunpack.c.l.b16 %v42
  %v143 = vunpack.c.h.b16 %v42
  %v144 = vunpack.c.l.b16 %v43
  %v145 = vunpack.c.h.b16 %v43
  %v146 = vunpack.c.l.b16 %v44
  %v147 = vunpack.c.h.b16 %v44
  %v148 = vunpack.c.l.b16 %v45
  %v149 = vunpack.c.h.b16 %v45
  %v150 = vunpack.c.l.b16 %v46
  %v151 = vunpack.c.h.b16 %v46
  %v152 = vunpack.c.l.b16 %v47
  %v153 = vunpack.c.h.b16 %v47
  %v154 = vunpack.c.l.b16 %v48
  %v155 = vunpack.c.h.b16 %v48
  %v156 = vunpack.c.l.b16 %v49
  %v157 = vunpack.c.h.b16 %v49
  %v158 = vpack.c.b16 %v96, %v94
  %v159 = vpack.c.b16 %v97, %v95
  %v160 = vpack.c.b16 %v100, %v98
  %v161 = vpack.c.b16 %v101, %v99
  %v162 = vpack.c.b16 %v104, %v102
  %v163 = vpack.c.b16 %v105, %v103
  %v164 = vpack.c.b16 %v108, %v106
  %v165 = vpack.c.b16 %v109, %v107
  %v166 = vpack.c.b16 %v112, %v110
  %v167 = vpack.c.b16 %v113, %v111
  %v168 = vpack.c.b16 %v116, %v114
  %v169 = vpack.c.b16 %v117, %v115
  %v170 = vpack.c.b16 %v120, %v118
  %v171 = vpack.c.b16 %v121, %v119
  %v172 = vpack.c.b16 %v124, %v122
  %v173 = vpack.c.b16 %v125, %v123
  %v174 = vpack.c.b16 %v128, %v126
  %v175 = vpack.c.b16 %v129, %v127
  %v176 = vpack.c.b16 %v132, %v130
  %v177 = vpack.c.b16 %v133, %v131
  %v178 = vpack.c.b16 %v136, %v134
  %v179 = vpack.c.b16 %v137, %v135
  %v180 = vpack.c.b16 %v140, %v138
  %v181 = vpack.c.b16 %v141, %v139
  %v182 = vpack.c.b16 %v144, %v142
  %v183 = vpack.c.b16 %v145, %v143
  %v184 = vpack.c.b16 %v148, %v146
  %v185 = vpack.c.b16 %v149, %v147
  %v186 = vpack.c.b16 %v152, %v150
  %v187 = vpack.c.b16 %v153, %v151
  %v188 = vpack.c.b16 %v156, %v154
  %v189 = vpack.c.b16 %v157, %v155
  %222 = vmatprep.subr.bf16.mxu0 %v159
  %223 = vmatpush1.bf16.msra.mxu0 %v158
  %224 = vmatprep.subr.bf16.mxu0 %v161
  %225 = vmatpush1.bf16.msra.mxu0 %v160
  %226 = vmatprep.subr.bf16.mxu0 %v163
  %227 = vmatpush1.bf16.msra.mxu0 %v162
  %228 = vmatprep.subr.bf16.mxu0 %v165
  %229 = vmatpush1.bf16.msra.mxu0 %v164
  %230 = vmatprep.subr.bf16.mxu0 %v167
  %231 = vmatpush1.bf16.msra.mxu0 %v166
  %232 = vmatprep.subr.bf16.mxu0 %v169
  %233 = vmatpush1.bf16.msra.mxu0 %v168
  %234 = vmatprep.subr.bf16.mxu0 %v171
  %235 = vmatpush1.bf16.msra.mxu0 %v170
  %236 = vmatprep.subr.bf16.mxu0 %v173
  %237 = vmatpush1.bf16.msra.mxu0 %v172
  %238 = vmatprep.subr.bf16.mxu0 %v175
  %239 = vmatpush1.bf16.msra.mxu0 %v174
  %240 = vmatprep.subr.bf16.mxu0 %v177
  %241 = vmatpush1.bf16.msra.mxu0 %v176
  %242 = vmatprep.subr.bf16.mxu0 %v179
  %243 = vmatpush1.bf16.msra.mxu0 %v178
  %244 = vmatprep.subr.bf16.mxu0 %v181
  %245 = vmatpush1.bf16.msra.mxu0 %v180
  %246 = vmatprep.subr.bf16.mxu0 %v183
  %247 = vmatpush1.bf16.msra.mxu0 %v182
  %248 = vmatprep.subr.bf16.mxu0 %v185
  %249 = vmatpush1.bf16.msra.mxu0 %v184
  %250 = vmatprep.subr.bf16.mxu0 %v187
  %251 = vmatpush1.bf16.msra.mxu0 %v186
  %252 = vmatprep.subr.bf16.mxu0 %v189
  %253 = vmatpush1.bf16.msra.mxu0 %v188
  %254 = vmatprep.mubr.bf16.mxu0 %v17
  %255 = vmatmul.mubr.bf16.gmra.mrb[0].mxu0 %v16
  %v256 = vpop.f32.mrb[0].mxu0
  %v257 = vadd.f32 %v55, %v256
  %v258 = vpop.f32.mrb[0].mxu0
  %v259 = vadd.f32 %v59, %v258
  %v260 = vpop.f32.mrb[0].mxu0
  %v261 = vpop.f32.mrb[0].mxu0
  %262 = vdwg.mxu0
  %v263 = vmax.f32 %v257, 0.0
  %v264 = vmax.f32 %v259, 0.0
  %v265 = vpack.c.bf16 %v263, %v263
  %v266 = vpack.c.bf16 %v264, %v264
  %s267 = scalar_lea.vmem %s1, 256
  %v268 = vld [vmem:[%s267] sm:$0xff]
  %v269 = vld [vmem:[%s267 + $0x8] sm:$0xff]
  %v270 = vld [vmem:[%s267 + $0x10] sm:$0xff]
  %v271 = vld [vmem:[%s267 + $0x18] sm:$0xff]
  %v272 = vld [vmem:[%s267 + $0x20] sm:$0xff]
  %v273 = vld [vmem:[%s267 + $0x28] sm:$0xff]
  %v274 = vld [vmem:[%s267 + $0x30] sm:$0xff]
  %v275 = vld [vmem:[%s267 + $0x38] sm:$0xff]
  %v276 = vld [vmem:[%s267 + $0x40] sm:$0xff]
  %v277 = vld [vmem:[%s267 + $0x48] sm:$0xff]
  %v278 = vld [vmem:[%s267 + $0x50] sm:$0xff]
  %v279 = vld [vmem:[%s267 + $0x58] sm:$0xff]
  %v280 = vld [vmem:[%s267 + $0x60] sm:$0xff]
  %v281 = vld [vmem:[%s267 + $0x68] sm:$0xff]
  %v282 = vld [vmem:[%s267 + $0x70] sm:$0xff]
  %v283 = vld [vmem:[%s267 + $0x78] sm:$0xff]
  %v284 = vld [vmem:[%s267 + $0x80] sm:$0xff]
  %v285 = vld [vmem:[%s267 + $0x88] sm:$0xff]
  %v286 = vld [vmem:[%s267 + $0x90] sm:$0xff]
  %v287 = vld [vmem:[%s267 + $0x98] sm:$0xff]
  %v288 = vld [vmem:[%s267 + $0xa0] sm:$0xff]
  %v289 = vld [vmem:[%s267 + $0xa8] sm:$0xff]
  %v290 = vld [vmem:[%s267 + $0xb0] sm:$0xff]
  %v291 = vld [vmem:[%s267 + $0xb8] sm:$0xff]
  %v292 = vld [vmem:[%s267 + $0xc0] sm:$0xff]
  %v293 = vld [vmem:[%s267 + $0xc8] sm:$0xff]
  %v294 = vld [vmem:[%s267 + $0xd0] sm:$0xff]
  %v295 = vld [vmem:[%s267 + $0xd8] sm:$0xff]
  %v296 = vld [vmem:[%s267 + $0xe0] sm:$0xff]
  %v297 = vld [vmem:[%s267 + $0xe8] sm:$0xff]
  %v298 = vld [vmem:[%s267 + $0xf0] sm:$0xff]
  %v299 = vld [vmem:[%s267 + $0xf8] sm:$0xff]
  %s300 = scalar_lea.vmem %s2, 2
  %v301 = vld [vmem:[%s300] sm:$0x3]
  %v303 = vlaneseq
  %v304 = vshrl.u32 %v303, 7
  %v305 = vsub.s32 0, %v304
  %v306 = vrot.slane %v301, %v305
  %v307 = vlaneseq
  %v308 = vshrl.u32 %v307, 7
  %v309 = vsub.s32 1, %v308
  %v310 = vrot.slane %v301, %v309
  %v345 = vunpack.c.l.b16 %v268
  %v346 = vunpack.c.h.b16 %v268
  %v347 = vunpack.c.l.b16 %v269
  %v348 = vunpack.c.h.b16 %v269
  %v349 = vunpack.c.l.b16 %v270
  %v350 = vunpack.c.h.b16 %v270
  %v351 = vunpack.c.l.b16 %v271
  %v352 = vunpack.c.h.b16 %v271
  %v353 = vunpack.c.l.b16 %v272
  %v354 = vunpack.c.h.b16 %v272
  %v355 = vunpack.c.l.b16 %v273
  %v356 = vunpack.c.h.b16 %v273
  %v357 = vunpack.c.l.b16 %v274
  %v358 = vunpack.c.h.b16 %v274
  %v359 = vunpack.c.l.b16 %v275
  %v360 = vunpack.c.h.b16 %v275
  %v361 = vunpack.c.l.b16 %v276
  %v362 = vunpack.c.h.b16 %v276
  %v363 = vunpack.c.l.b16 %v277
  %v364 = vunpack.c.h.b16 %v277
  %v365 = vunpack.c.l.b16 %v278
  %v366 = vunpack.c.h.b16 %v278
  %v367 = vunpack.c.l.b16 %v279
  %v368 = vunpack.c.h.b16 %v279
  %v369 = vunpack.c.l.b16 %v280
  %v370 = vunpack.c.h.b16 %v280
  %v371 = vunpack.c.l.b16 %v281
  %v372 = vunpack.c.h.b16 %v281
  %v373 = vunpack.c.l.b16 %v282
  %v374 = vunpack.c.h.b16 %v282
  %v375 = vunpack.c.l.b16 %v283
  %v376 = vunpack.c.h.b16 %v283
  %v377 = vunpack.c.l.b16 %v284
  %v378 = vunpack.c.h.b16 %v284
  %v379 = vunpack.c.l.b16 %v285
  %v380 = vunpack.c.h.b16 %v285
  %v381 = vunpack.c.l.b16 %v286
  %v382 = vunpack.c.h.b16 %v286
  %v383 = vunpack.c.l.b16 %v287
  %v384 = vunpack.c.h.b16 %v287
  %v385 = vunpack.c.l.b16 %v288
  %v386 = vunpack.c.h.b16 %v288
  %v387 = vunpack.c.l.b16 %v289
  %v388 = vunpack.c.h.b16 %v289
  %v389 = vunpack.c.l.b16 %v290
  %v390 = vunpack.c.h.b16 %v290
  %v391 = vunpack.c.l.b16 %v291
  %v392 = vunpack.c.h.b16 %v291
  %v393 = vunpack.c.l.b16 %v292
  %v394 = vunpack.c.h.b16 %v292
  %v395 = vunpack.c.l.b16 %v293
  %v396 = vunpack.c.h.b16 %v293
  %v397 = vunpack.c.l.b16 %v294
  %v398 = vunpack.c.h.b16 %v294
  %v399 = vunpack.c.l.b16 %v295
  %v400 = vunpack.c.h.b16 %v295
  %v401 = vunpack.c.l.b16 %v296
  %v402 = vunpack.c.h.b16 %v296
  %v403 = vunpack.c.l.b16 %v297
  %v404 = vunpack.c.h.b16 %v297
  %v405 = vunpack.c.l.b16 %v298
  %v406 = vunpack.c.h.b16 %v298
  %v407 = vunpack.c.l.b16 %v299
  %v408 = vunpack.c.h.b16 %v299
  %v409 = vpack.c.b16 %v347, %v345
  %v410 = vpack.c.b16 %v348, %v346
  %v411 = vpack.c.b16 %v351, %v349
  %v412 = vpack.c.b16 %v352, %v350
  %v413 = vpack.c.b16 %v355, %v353
  %v414 = vpack.c.b16 %v356, %v354
  %v415 = vpack.c.b16 %v359, %v357
  %v416 = vpack.c.b16 %v360, %v358
  %v417 = vpack.c.b16 %v363, %v361
  %v418 = vpack.c.b16 %v364, %v362
  %v419 = vpack.c.b16 %v367, %v365
  %v420 = vpack.c.b16 %v368, %v366
  %v421 = vpack.c.b16 %v371, %v369
  %v422 = vpack.c.b16 %v372, %v370
  %v423 = vpack.c.b16 %v375, %v373
  %v424 = vpack.c.b16 %v376, %v374
  %v425 = vpack.c.b16 %v379, %v377
  %v426 = vpack.c.b16 %v380, %v378
  %v427 = vpack.c.b16 %v383, %v381
  %v428 = vpack.c.b16 %v384, %v382
  %v429 = vpack.c.b16 %v387, %v385
  %v430 = vpack.c.b16 %v388, %v386
  %v431 = vpack.c.b16 %v391, %v389
  %v432 = vpack.c.b16 %v392, %v390
  %v433 = vpack.c.b16 %v395, %v393
  %v434 = vpack.c.b16 %v396, %v394
  %v435 = vpack.c.b16 %v399, %v397
  %v436 = vpack.c.b16 %v400, %v398
  %v437 = vpack.c.b16 %v403, %v401
  %v438 = vpack.c.b16 %v404, %v402
  %v439 = vpack.c.b16 %v407, %v405
  %v440 = vpack.c.b16 %v408, %v406
  %473 = vmatprep.subr.bf16.mxu0 %v410
  %474 = vmatpush1.bf16.msra.mxu0 %v409
  %475 = vmatprep.subr.bf16.mxu0 %v412
  %476 = vmatpush1.bf16.msra.mxu0 %v411
  %477 = vmatprep.subr.bf16.mxu0 %v414
  %478 = vmatpush1.bf16.msra.mxu0 %v413
  %479 = vmatprep.subr.bf16.mxu0 %v416
  %480 = vmatpush1.bf16.msra.mxu0 %v415
  %481 = vmatprep.subr.bf16.mxu0 %v418
  %482 = vmatpush1.bf16.msra.mxu0 %v417
  %483 = vmatprep.subr.bf16.mxu0 %v420
  %484 = vmatpush1.bf16.msra.mxu0 %v419
  %485 = vmatprep.subr.bf16.mxu0 %v422
  %486 = vmatpush1.bf16.msra.mxu0 %v421
  %487 = vmatprep.subr.bf16.mxu0 %v424
  %488 = vmatpush1.bf16.msra.mxu0 %v423
  %489 = vmatprep.subr.bf16.mxu0 %v426
  %490 = vmatpush1.bf16.msra.mxu0 %v425
  %491 = vmatprep.subr.bf16.mxu0 %v428
  %492 = vmatpush1.bf16.msra.mxu0 %v427
  %493 = vmatprep.subr.bf16.mxu0 %v430
  %494 = vmatpush1.bf16.msra.mxu0 %v429
  %495 = vmatprep.subr.bf16.mxu0 %v432
  %496 = vmatpush1.bf16.msra.mxu0 %v431
  %497 = vmatprep.subr.bf16.mxu0 %v434
  %498 = vmatpush1.bf16.msra.mxu0 %v433
  %499 = vmatprep.subr.bf16.mxu0 %v436
  %500 = vmatpush1.bf16.msra.mxu0 %v435
  %501 = vmatprep.subr.bf16.mxu0 %v438
  %502 = vmatpush1.bf16.msra.mxu0 %v437
  %503 = vmatprep.subr.bf16.mxu0 %v440
  %504 = vmatpush1.bf16.msra.mxu0 %v439
  %505 = vmatprep.mubr.bf16.mxu0 %v266
  %506 = vmatmul.mubr.bf16.gmra.mrb[0].mxu0 %v265
  %v507 = vpop.f32.mrb[0].mxu0
  %v508 = vadd.f32 %v306, %v507
  %v509 = vpop.f32.mrb[0].mxu0
  %v510 = vadd.f32 %v310, %v509
  %v511 = vpop.f32.mrb[0].mxu0
  %v512 = vpop.f32.mrb[0].mxu0
  %513 = vdwg.mxu0
  %v514 = vmax.f32 %v508, 0.0
  %v515 = vmax.f32 %v510, 0.0
  %v516 = vpack.c.bf16 %v514, %v514
  %v517 = vpack.c.bf16 %v515, %v515
  %s518 = scalar_lea.vmem %s1, 512
  %v519 = vld [vmem:[%s518] sm:$0xff]
  %v520 = vld [vmem:[%s518 + $0x8] sm:$0xff]
  %v521 = vld [vmem:[%s518 + $0x10] sm:$0xff]
  %v522 = vld [vmem:[%s518 + $0x18] sm:$0xff]
  %v523 = vld [vmem:[%s518 + $0x20] sm:$0xff]
  %v524 = vld [vmem:[%s518 + $0x28] sm:$0xff]
  %v525 = vld [vmem:[%s518 + $0x30] sm:$0xff]
  %v526 = vld [vmem:[%s518 + $0x38] sm:$0xff]
  %v527 = vld [vmem:[%s518 + $0x40] sm:$0xff]
  %v528 = vld [vmem:[%s518 + $0x48] sm:$0xff]
  %v529 = vld [vmem:[%s518 + $0x50] sm:$0xff]
  %v530 = vld [vmem:[%s518 + $0x58] sm:$0xff]
  %v531 = vld [vmem:[%s518 + $0x60] sm:$0xff]
  %v532 = vld [vmem:[%s518 + $0x68] sm:$0xff]
  %v533 = vld [vmem:[%s518 + $0x70] sm:$0xff]
  %v534 = vld [vmem:[%s518 + $0x78] sm:$0xff]
  %v535 = vld [vmem:[%s518 + $0x80] sm:$0xff]
  %v536 = vld [vmem:[%s518 + $0x88] sm:$0xff]
  %v537 = vld [vmem:[%s518 + $0x90] sm:$0xff]
  %v538 = vld [vmem:[%s518 + $0x98] sm:$0xff]
  %v539 = vld [vmem:[%s518 + $0xa0] sm:$0xff]
  %v540 = vld [vmem:[%s518 + $0xa8] sm:$0xff]
  %v541 = vld [vmem:[%s518 + $0xb0] sm:$0xff]
  %v542 = vld [vmem:[%s518 + $0xb8] sm:$0xff]
  %v543 = vld [vmem:[%s518 + $0xc0] sm:$0xff]
  %v544 = vld [vmem:[%s518 + $0xc8] sm:$0xff]
  %v545 = vld [vmem:[%s518 + $0xd0] sm:$0xff]
  %v546 = vld [vmem:[%s518 + $0xd8] sm:$0xff]
  %v547 = vld [vmem:[%s518 + $0xe0] sm:$0xff]
  %v548 = vld [vmem:[%s518 + $0xe8] sm:$0xff]
  %v549 = vld [vmem:[%s518 + $0xf0] sm:$0xff]
  %v550 = vld [vmem:[%s518 + $0xf8] sm:$0xff]
  %s551 = scalar_lea.vmem %s2, 4
  %v552 = vld [vmem:[%s551] sm:$0x3]
  %v554 = vlaneseq
  %v555 = vshrl.u32 %v554, 7
  %v556 = vsub.s32 0, %v555
  %v557 = vrot.slane %v552, %v556
  %v558 = vlaneseq
  %v559 = vshrl.u32 %v558, 7
  %v560 = vsub.s32 1, %v559
  %v561 = vrot.slane %v552, %v560
  %v596 = vunpack.c.l.b16 %v519
  %v597 = vunpack.c.h.b16 %v519
  %v598 = vunpack.c.l.b16 %v520
  %v599 = vunpack.c.h.b16 %v520
  %v600 = vunpack.c.l.b16 %v521
  %v601 = vunpack.c.h.b16 %v521
  %v602 = vunpack.c.l.b16 %v522
  %v603 = vunpack.c.h.b16 %v522
  %v604 = vunpack.c.l.b16 %v523
  %v605 = vunpack.c.h.b16 %v523
  %v606 = vunpack.c.l.b16 %v524
  %v607 = vunpack.c.h.b16 %v524
  %v608 = vunpack.c.l.b16 %v525
  %v609 = vunpack.c.h.b16 %v525
  %v610 = vunpack.c.l.b16 %v526
  %v611 = vunpack.c.h.b16 %v526
  %v612 = vunpack.c.l.b16 %v527
  %v613 = vunpack.c.h.b16 %v527
  %v614 = vunpack.c.l.b16 %v528
  %v615 = vunpack.c.h.b16 %v528
  %v616 = vunpack.c.l.b16 %v529
  %v617 = vunpack.c.h.b16 %v529
  %v618 = vunpack.c.l.b16 %v530
  %v619 = vunpack.c.h.b16 %v530
  %v620 = vunpack.c.l.b16 %v531
  %v621 = vunpack.c.h.b16 %v531
  %v622 = vunpack.c.l.b16 %v532
  %v623 = vunpack.c.h.b16 %v532
  %v624 = vunpack.c.l.b16 %v533
  %v625 = vunpack.c.h.b16 %v533
  %v626 = vunpack.c.l.b16 %v534
  %v627 = vunpack.c.h.b16 %v534
  %v628 = vunpack.c.l.b16 %v535
  %v629 = vunpack.c.h.b16 %v535
  %v630 = vunpack.c.l.b16 %v536
  %v631 = vunpack.c.h.b16 %v536
  %v632 = vunpack.c.l.b16 %v537
  %v633 = vunpack.c.h.b16 %v537
  %v634 = vunpack.c.l.b16 %v538
  %v635 = vunpack.c.h.b16 %v538
  %v636 = vunpack.c.l.b16 %v539
  %v637 = vunpack.c.h.b16 %v539
  %v638 = vunpack.c.l.b16 %v540
  %v639 = vunpack.c.h.b16 %v540
  %v640 = vunpack.c.l.b16 %v541
  %v641 = vunpack.c.h.b16 %v541
  %v642 = vunpack.c.l.b16 %v542
  %v643 = vunpack.c.h.b16 %v542
  %v644 = vunpack.c.l.b16 %v543
  %v645 = vunpack.c.h.b16 %v543
  %v646 = vunpack.c.l.b16 %v544
  %v647 = vunpack.c.h.b16 %v544
  %v648 = vunpack.c.l.b16 %v545
  %v649 = vunpack.c.h.b16 %v545
  %v650 = vunpack.c.l.b16 %v546
  %v651 = vunpack.c.h.b16 %v546
  %v652 = vunpack.c.l.b16 %v547
  %v653 = vunpack.c.h.b16 %v547
  %v654 = vunpack.c.l.b16 %v548
  %v655 = vunpack.c.h.b16 %v548
  %v656 = vunpack.c.l.b16 %v549
  %v657 = vunpack.c.h.b16 %v549
  %v658 = vunpack.c.l.b16 %v550
  %v659 = vunpack.c.h.b16 %v550
  %v660 = vpack.c.b16 %v598, %v596
  %v661 = vpack.c.b16 %v599, %v597
  %v662 = vpack.c.b16 %v602, %v600
  %v663 = vpack.c.b16 %v603, %v601
  %v664 = vpack.c.b16 %v606, %v604
  %v665 = vpack.c.b16 %v607, %v605
  %v666 = vpack.c.b16 %v610, %v608
  %v667 = vpack.c.b16 %v611, %v609
  %v668 = vpack.c.b16 %v614, %v612
  %v669 = vpack.c.b16 %v615, %v613
  %v670 = vpack.c.b16 %v618, %v616
  %v671 = vpack.c.b16 %v619, %v617
  %v672 = vpack.c.b16 %v622, %v620
  %v673 = vpack.c.b16 %v623, %v621
  %v674 = vpack.c.b16 %v626, %v624
  %v675 = vpack.c.b16 %v627, %v625
  %v676 = vpack.c.b16 %v630, %v628
  %v677 = vpack.c.b16 %v631, %v629
  %v678 = vpack.c.b16 %v634, %v632
  %v679 = vpack.c.b16 %v635, %v633
  %v680 = vpack.c.b16 %v638, %v636
  %v681 = vpack.c.b16 %v639, %v637
  %v682 = vpack.c.b16 %v642, %v640
  %v683 = vpack.c.b16 %v643, %v641
  %v684 = vpack.c.b16 %v646, %v644
  %v685 = vpack.c.b16 %v647, %v645
  %v686 = vpack.c.b16 %v650, %v648
  %v687 = vpack.c.b16 %v651, %v649
  %v688 = vpack.c.b16 %v654, %v652
  %v689 = vpack.c.b16 %v655, %v653
  %v690 = vpack.c.b16 %v658, %v656
  %v691 = vpack.c.b16 %v659, %v657
  %724 = vmatprep.subr.bf16.mxu0 %v661
  %725 = vmatpush1.bf16.msra.mxu0 %v660
  %726 = vmatprep.subr.bf16.mxu0 %v663
  %727 = vmatpush1.bf16.msra.mxu0 %v662
  %728 = vmatprep.subr.bf16.mxu0 %v665
  %729 = vmatpush1.bf16.msra.mxu0 %v664
  %730 = vmatprep.subr.bf16.mxu0 %v667
  %731 = vmatpush1.bf16.msra.mxu0 %v666
  %732 = vmatprep.subr.bf16.mxu0 %v669
  %733 = vmatpush1.bf16.msra.mxu0 %v668
  %734 = vmatprep.subr.bf16.mxu0 %v671
  %735 = vmatpush1.bf16.msra.mxu0 %v670
  %736 = vmatprep.subr.bf16.mxu0 %v673
  %737 = vmatpush1.bf16.msra.mxu0 %v672
  %738 = vmatprep.subr.bf16.mxu0 %v675
  %739 = vmatpush1.bf16.msra.mxu0 %v674
  %740 = vmatprep.subr.bf16.mxu0 %v677
  %741 = vmatpush1.bf16.msra.mxu0 %v676
  %742 = vmatprep.subr.bf16.mxu0 %v679
  %743 = vmatpush1.bf16.msra.mxu0 %v678
  %744 = vmatprep.subr.bf16.mxu0 %v681
  %745 = vmatpush1.bf16.msra.mxu0 %v680
  %746 = vmatprep.subr.bf16.mxu0 %v683
  %747 = vmatpush1.bf16.msra.mxu0 %v682
  %748 = vmatprep.subr.bf16.mxu0 %v685
  %749 = vmatpush1.bf16.msra.mxu0 %v684
  %750 = vmatprep.subr.bf16.mxu0 %v687
  %751 = vmatpush1.bf16.msra.mxu0 %v686
  %752 = vmatprep.subr.bf16.mxu0 %v689
  %753 = vmatpush1.bf16.msra.mxu0 %v688
  %754 = vmatprep.subr.bf16.mxu0 %v691
  %755 = vmatpush1.bf16.msra.mxu0 %v690
  %756 = vmatprep.mubr.bf16.mxu0 %v517
  %757 = vmatmul.mubr.bf16.gmra.mrb[0].mxu0 %v516
  %v758 = vpop.f32.mrb[0].mxu0
  %v759 = vadd.f32 %v557, %v758
  %v760 = vpop.f32.mrb[0].mxu0
  %v761 = vadd.f32 %v561, %v760
  %v762 = vpop.f32.mrb[0].mxu0
  %v763 = vpop.f32.mrb[0].mxu0
  %764 = vdwg.mxu0
  %v765 = vpack.c.bf16 %v759, %v759
  %v766 = vpack.c.bf16 %v761, %v761
  %s767 = scalar_lea.vmem %s1, 768
  %v768 = vld [vmem:[%s767] sm:$0xff]
  %v769 = vld [vmem:[%s767 + $0x8] sm:$0xff]
  %v770 = vld [vmem:[%s767 + $0x10] sm:$0xff]
  %v771 = vld [vmem:[%s767 + $0x18] sm:$0xff]
  %v772 = vld [vmem:[%s767 + $0x20] sm:$0xff]
  %v773 = vld [vmem:[%s767 + $0x28] sm:$0xff]
  %v774 = vld [vmem:[%s767 + $0x30] sm:$0xff]
  %v775 = vld [vmem:[%s767 + $0x38] sm:$0xff]
  %v776 = vld [vmem:[%s767 + $0x40] sm:$0xff]
  %v777 = vld [vmem:[%s767 + $0x48] sm:$0xff]
  %v778 = vld [vmem:[%s767 + $0x50] sm:$0xff]
  %v779 = vld [vmem:[%s767 + $0x58] sm:$0xff]
  %v780 = vld [vmem:[%s767 + $0x60] sm:$0xff]
  %v781 = vld [vmem:[%s767 + $0x68] sm:$0xff]
  %v782 = vld [vmem:[%s767 + $0x70] sm:$0xff]
  %v783 = vld [vmem:[%s767 + $0x78] sm:$0xff]
  %v784 = vld [vmem:[%s767 + $0x80] sm:$0xff]
  %v785 = vld [vmem:[%s767 + $0x88] sm:$0xff]
  %v786 = vld [vmem:[%s767 + $0x90] sm:$0xff]
  %v787 = vld [vmem:[%s767 + $0x98] sm:$0xff]
  %v788 = vld [vmem:[%s767 + $0xa0] sm:$0xff]
  %v789 = vld [vmem:[%s767 + $0xa8] sm:$0xff]
  %v790 = vld [vmem:[%s767 + $0xb0] sm:$0xff]
  %v791 = vld [vmem:[%s767 + $0xb8] sm:$0xff]
  %v792 = vld [vmem:[%s767 + $0xc0] sm:$0xff]
  %v793 = vld [vmem:[%s767 + $0xc8] sm:$0xff]
  %v794 = vld [vmem:[%s767 + $0xd0] sm:$0xff]
  %v795 = vld [vmem:[%s767 + $0xd8] sm:$0xff]
  %v796 = vld [vmem:[%s767 + $0xe0] sm:$0xff]
  %v797 = vld [vmem:[%s767 + $0xe8] sm:$0xff]
  %v798 = vld [vmem:[%s767 + $0xf0] sm:$0xff]
  %v799 = vld [vmem:[%s767 + $0xf8] sm:$0xff]
  %s800 = scalar_lea.vmem %s2, 6
  %v801 = vld [vmem:[%s800] sm:$0x3]
  %v803 = vlaneseq
  %v804 = vshrl.u32 %v803, 7
  %v805 = vsub.s32 0, %v804
  %v806 = vrot.slane %v801, %v805
  %v807 = vlaneseq
  %v808 = vshrl.u32 %v807, 7
  %v809 = vsub.s32 1, %v808
  %v810 = vrot.slane %v801, %v809
  %v845 = vunpack.c.l.b16 %v768
  %v846 = vunpack.c.h.b16 %v768
  %v847 = vunpack.c.l.b16 %v769
  %v848 = vunpack.c.h.b16 %v769
  %v849 = vunpack.c.l.b16 %v770
  %v850 = vunpack.c.h.b16 %v770
  %v851 = vunpack.c.l.b16 %v771
  %v852 = vunpack.c.h.b16 %v771
  %v853 = vunpack.c.l.b16 %v772
  %v854 = vunpack.c.h.b16 %v772
  %v855 = vunpack.c.l.b16 %v773
  %v856 = vunpack.c.h.b16 %v773
  %v857 = vunpack.c.l.b16 %v774
  %v858 = vunpack.c.h.b16 %v774
  %v859 = vunpack.c.l.b16 %v775
  %v860 = vunpack.c.h.b16 %v775
  %v861 = vunpack.c.l.b16 %v776
  %v862 = vunpack.c.h.b16 %v776
  %v863 = vunpack.c.l.b16 %v777
  %v864 = vunpack.c.h.b16 %v777
  %v865 = vunpack.c.l.b16 %v778
  %v866 = vunpack.c.h.b16 %v778
  %v867 = vunpack.c.l.b16 %v779
  %v868 = vunpack.c.h.b16 %v779
  %v869 = vunpack.c.l.b16 %v780
  %v870 = vunpack.c.h.b16 %v780
  %v871 = vunpack.c.l.b16 %v781
  %v872 = vunpack.c.h.b16 %v781
  %v873 = vunpack.c.l.b16 %v782
  %v874 = vunpack.c.h.b16 %v782
  %v875 = vunpack.c.l.b16 %v783
  %v876 = vunpack.c.h.b16 %v783
  %v877 = vunpack.c.l.b16 %v784
  %v878 = vunpack.c.h.b16 %v784
  %v879 = vunpack.c.l.b16 %v785
  %v880 = vunpack.c.h.b16 %v785
  %v881 = vunpack.c.l.b16 %v786
  %v882 = vunpack.c.h.b16 %v786
  %v883 = vunpack.c.l.b16 %v787
  %v884 = vunpack.c.h.b16 %v787
  %v885 = vunpack.c.l.b16 %v788
  %v886 = vunpack.c.h.b16 %v788
  %v887 = vunpack.c.l.b16 %v789
  %v888 = vunpack.c.h.b16 %v789
  %v889 = vunpack.c.l.b16 %v790
  %v890 = vunpack.c.h.b16 %v790
  %v891 = vunpack.c.l.b16 %v791
  %v892 = vunpack.c.h.b16 %v791
  %v893 = vunpack.c.l.b16 %v792
  %v894 = vunpack.c.h.b16 %v792
  %v895 = vunpack.c.l.b16 %v793
  %v896 = vunpack.c.h.b16 %v793
  %v897 = vunpack.c.l.b16 %v794
  %v898 = vunpack.c.h.b16 %v794
  %v899 = vunpack.c.l.b16 %v795
  %v900 = vunpack.c.h.b16 %v795
  %v901 = vunpack.c.l.b16 %v796
  %v902 = vunpack.c.h.b16 %v796
  %v903 = vunpack.c.l.b16 %v797
  %v904 = vunpack.c.h.b16 %v797
  %v905 = vunpack.c.l.b16 %v798
  %v906 = vunpack.c.h.b16 %v798
  %v907 = vunpack.c.l.b16 %v799
  %v908 = vunpack.c.h.b16 %v799
  %v909 = vpack.c.b16 %v847, %v845
  %v910 = vpack.c.b16 %v848, %v846
  %v911 = vpack.c.b16 %v851, %v849
  %v912 = vpack.c.b16 %v852, %v850
  %v913 = vpack.c.b16 %v855, %v853
  %v914 = vpack.c.b16 %v856, %v854
  %v915 = vpack.c.b16 %v859, %v857
  %v916 = vpack.c.b16 %v860, %v858
  %v917 = vpack.c.b16 %v863, %v861
  %v918 = vpack.c.b16 %v864, %v862
  %v919 = vpack.c.b16 %v867, %v865
  %v920 = vpack.c.b16 %v868, %v866
  %v921 = vpack.c.b16 %v871, %v869
  %v922 = vpack.c.b16 %v872, %v870
  %v923 = vpack.c.b16 %v875, %v873
  %v924 = vpack.c.b16 %v876, %v874
  %v925 = vpack.c.b16 %v879, %v877
  %v926 = vpack.c.b16 %v880, %v878
  %v927 = vpack.c.b16 %v883, %v881
  %v928 = vpack.c.b16 %v884, %v882
  %v929 = vpack.c.b16 %v887, %v885
  %v930 = vpack.c.b16 %v888, %v886
  %v931 = vpack.c.b16 %v891, %v889
  %v932 = vpack.c.b16 %v892, %v890
  %v933 = vpack.c.b16 %v895, %v893
  %v934 = vpack.c.b16 %v896, %v894
  %v935 = vpack.c.b16 %v899, %v897
  %v936 = vpack.c.b16 %v900, %v898
  %v937 = vpack.c.b16 %v903, %v901
  %v938 = vpack.c.b16 %v904, %v902
  %v939 = vpack.c.b16 %v907, %v905
  %v940 = vpack.c.b16 %v908, %v906
  %973 = vmatprep.subr.bf16.mxu0 %v910
  %974 = vmatpush1.bf16.msra.mxu0 %v909
  %975 = vmatprep.subr.bf16.mxu0 %v912
  %976 = vmatpush1.bf16.msra.mxu0 %v911
  %977 = vmatprep.subr.bf16.mxu0 %v914
  %978 = vmatpush1.bf16.msra.mxu0 %v913
  %979 = vmatprep.subr.bf16.mxu0 %v916
  %980 = vmatpush1.bf16.msra.mxu0 %v915
  %981 = vmatprep.subr.bf16.mxu0 %v918
  %982 = vmatpush1.bf16.msra.mxu0 %v917
  %983 = vmatprep.subr.bf16.mxu0 %v920
  %984 = vmatpush1.bf16.msra.mxu0 %v919
  %985 = vmatprep.subr.bf16.mxu0 %v922
  %986 = vmatpush1.bf16.msra.mxu0 %v921
  %987 = vmatprep.subr.bf16.mxu0 %v924
  %988 = vmatpush1.bf16.msra.mxu0 %v923
  %989 = vmatprep.subr.bf16.mxu0 %v926
  %990 = vmatpush1.bf16.msra.mxu0 %v925
  %991 = vmatprep.subr.bf16.mxu0 %v928
  %992 = vmatpush1.bf16.msra.mxu0 %v927
  %993 = vmatprep.subr.bf16.mxu0 %v930
  %994 = vmatpush1.bf16.msra.mxu0 %v929
  %995 = vmatprep.subr.bf16.mxu0 %v932
  %996 = vmatpush1.bf16.msra.mxu0 %v931
  %997 = vmatprep.subr.bf16.mxu0 %v934
  %998 = vmatpush1.bf16.msra.mxu0 %v933
  %999 = vmatprep.subr.bf16.mxu0 %v936
  %1000 = vmatpush1.bf16.msra.mxu0 %v935
  %1001 = vmatprep.subr.bf16.mxu0 %v938
  %1002 = vmatpush1.bf16.msra.mxu0 %v937
  %1003 = vmatprep.subr.bf16.mxu0 %v940
  %1004 = vmatpush1.bf16.msra.mxu0 %v939
  %1005 = vmatprep.mubr.bf16.mxu0 %v766
  %1006 = vmatmul.mubr.bf16.gmra.mrb[0].mxu0 %v765
  %v1007 = vpop.f32.mrb[0].mxu0
  %v1008 = vadd.f32 %v806, %v1007
  %v1009 = vpop.f32.mrb[0].mxu0
  %v1010 = vadd.f32 %v810, %v1009
  %v1011 = vpop.f32.mrb[0].mxu0
  %v1012 = vpop.f32.mrb[0].mxu0
  %1013 = vdwg.mxu0
  %v1014 = vpack.c.bf16 %v1008, %v1008
  %v1015 = vpack.c.bf16 %v1010, %v1010
  %s1016 = scalar_lea.vmem %s1, 1024
  %v1017 = vld [vmem:[%s1016] sm:$0xff]
  %v1018 = vld [vmem:[%s1016 + $0x8] sm:$0xff]
  %v1019 = vld [vmem:[%s1016 + $0x10] sm:$0xff]
  %v1020 = vld [vmem:[%s1016 + $0x18] sm:$0xff]
  %v1021 = vld [vmem:[%s1016 + $0x20] sm:$0xff]
  %v1022 = vld [vmem:[%s1016 + $0x28] sm:$0xff]
  %v1023 = vld [vmem:[%s1016 + $0x30] sm:$0xff]
  %v1024 = vld [vmem:[%s1016 + $0x38] sm:$0xff]
  %v1025 = vld [vmem:[%s1016 + $0x40] sm:$0xff]
  %v1026 = vld [vmem:[%s1016 + $0x48] sm:$0xff]
  %v1027 = vld [vmem:[%s1016 + $0x50] sm:$0xff]
  %v1028 = vld [vmem:[%s1016 + $0x58] sm:$0xff]
  %v1029 = vld [vmem:[%s1016 + $0x60] sm:$0xff]
  %v1030 = vld [vmem:[%s1016 + $0x68] sm:$0xff]
  %v1031 = vld [vmem:[%s1016 + $0x70] sm:$0xff]
  %v1032 = vld [vmem:[%s1016 + $0x78] sm:$0xff]
  %v1033 = vld [vmem:[%s1016 + $0x80] sm:$0xff]
  %v1034 = vld [vmem:[%s1016 + $0x88] sm:$0xff]
  %v1035 = vld [vmem:[%s1016 + $0x90] sm:$0xff]
  %v1036 = vld [vmem:[%s1016 + $0x98] sm:$0xff]
  %v1037 = vld [vmem:[%s1016 + $0xa0] sm:$0xff]
  %v1038 = vld [vmem:[%s1016 + $0xa8] sm:$0xff]
  %v1039 = vld [vmem:[%s1016 + $0xb0] sm:$0xff]
  %v1040 = vld [vmem:[%s1016 + $0xb8] sm:$0xff]
  %v1041 = vld [vmem:[%s1016 + $0xc0] sm:$0xff]
  %v1042 = vld [vmem:[%s1016 + $0xc8] sm:$0xff]
  %v1043 = vld [vmem:[%s1016 + $0xd0] sm:$0xff]
  %v1044 = vld [vmem:[%s1016 + $0xd8] sm:$0xff]
  %v1045 = vld [vmem:[%s1016 + $0xe0] sm:$0xff]
  %v1046 = vld [vmem:[%s1016 + $0xe8] sm:$0xff]
  %v1047 = vld [vmem:[%s1016 + $0xf0] sm:$0xff]
  %v1048 = vld [vmem:[%s1016 + $0xf8] sm:$0xff]
  %s1049 = scalar_lea.vmem %s2, 8
  %v1050 = vld [vmem:[%s1049] sm:$0x3]
  %v1052 = vlaneseq
  %v1053 = vshrl.u32 %v1052, 7
  %v1054 = vsub.s32 0, %v1053
  %v1055 = vrot.slane %v1050, %v1054
  %v1056 = vlaneseq
  %v1057 = vshrl.u32 %v1056, 7
  %v1058 = vsub.s32 1, %v1057
  %v1059 = vrot.slane %v1050, %v1058
  %v1094 = vunpack.c.l.b16 %v1017
  %v1095 = vunpack.c.h.b16 %v1017
  %v1096 = vunpack.c.l.b16 %v1018
  %v1097 = vunpack.c.h.b16 %v1018
  %v1098 = vunpack.c.l.b16 %v1019
  %v1099 = vunpack.c.h.b16 %v1019
  %v1100 = vunpack.c.l.b16 %v1020
  %v1101 = vunpack.c.h.b16 %v1020
  %v1102 = vunpack.c.l.b16 %v1021
  %v1103 = vunpack.c.h.b16 %v1021
  %v1104 = vunpack.c.l.b16 %v1022
  %v1105 = vunpack.c.h.b16 %v1022
  %v1106 = vunpack.c.l.b16 %v1023
  %v1107 = vunpack.c.h.b16 %v1023
  %v1108 = vunpack.c.l.b16 %v1024
  %v1109 = vunpack.c.h.b16 %v1024
  %v1110 = vunpack.c.l.b16 %v1025
  %v1111 = vunpack.c.h.b16 %v1025
  %v1112 = vunpack.c.l.b16 %v1026
  %v1113 = vunpack.c.h.b16 %v1026
  %v1114 = vunpack.c.l.b16 %v1027
  %v1115 = vunpack.c.h.b16 %v1027
  %v1116 = vunpack.c.l.b16 %v1028
  %v1117 = vunpack.c.h.b16 %v1028
  %v1118 = vunpack.c.l.b16 %v1029
  %v1119 = vunpack.c.h.b16 %v1029
  %v1120 = vunpack.c.l.b16 %v1030
  %v1121 = vunpack.c.h.b16 %v1030
  %v1122 = vunpack.c.l.b16 %v1031
  %v1123 = vunpack.c.h.b16 %v1031
  %v1124 = vunpack.c.l.b16 %v1032
  %v1125 = vunpack.c.h.b16 %v1032
  %v1126 = vunpack.c.l.b16 %v1033
  %v1127 = vunpack.c.h.b16 %v1033
  %v1128 = vunpack.c.l.b16 %v1034
  %v1129 = vunpack.c.h.b16 %v1034
  %v1130 = vunpack.c.l.b16 %v1035
  %v1131 = vunpack.c.h.b16 %v1035
  %v1132 = vunpack.c.l.b16 %v1036
  %v1133 = vunpack.c.h.b16 %v1036
  %v1134 = vunpack.c.l.b16 %v1037
  %v1135 = vunpack.c.h.b16 %v1037
  %v1136 = vunpack.c.l.b16 %v1038
  %v1137 = vunpack.c.h.b16 %v1038
  %v1138 = vunpack.c.l.b16 %v1039
  %v1139 = vunpack.c.h.b16 %v1039
  %v1140 = vunpack.c.l.b16 %v1040
  %v1141 = vunpack.c.h.b16 %v1040
  %v1142 = vunpack.c.l.b16 %v1041
  %v1143 = vunpack.c.h.b16 %v1041
  %v1144 = vunpack.c.l.b16 %v1042
  %v1145 = vunpack.c.h.b16 %v1042
  %v1146 = vunpack.c.l.b16 %v1043
  %v1147 = vunpack.c.h.b16 %v1043
  %v1148 = vunpack.c.l.b16 %v1044
  %v1149 = vunpack.c.h.b16 %v1044
  %v1150 = vunpack.c.l.b16 %v1045
  %v1151 = vunpack.c.h.b16 %v1045
  %v1152 = vunpack.c.l.b16 %v1046
  %v1153 = vunpack.c.h.b16 %v1046
  %v1154 = vunpack.c.l.b16 %v1047
  %v1155 = vunpack.c.h.b16 %v1047
  %v1156 = vunpack.c.l.b16 %v1048
  %v1157 = vunpack.c.h.b16 %v1048
  %v1158 = vpack.c.b16 %v1096, %v1094
  %v1159 = vpack.c.b16 %v1097, %v1095
  %v1160 = vpack.c.b16 %v1100, %v1098
  %v1161 = vpack.c.b16 %v1101, %v1099
  %v1162 = vpack.c.b16 %v1104, %v1102
  %v1163 = vpack.c.b16 %v1105, %v1103
  %v1164 = vpack.c.b16 %v1108, %v1106
  %v1165 = vpack.c.b16 %v1109, %v1107
  %v1166 = vpack.c.b16 %v1112, %v1110
  %v1167 = vpack.c.b16 %v1113, %v1111
  %v1168 = vpack.c.b16 %v1116, %v1114
  %v1169 = vpack.c.b16 %v1117, %v1115
  %v1170 = vpack.c.b16 %v1120, %v1118
  %v1171 = vpack.c.b16 %v1121, %v1119
  %v1172 = vpack.c.b16 %v1124, %v1122
  %v1173 = vpack.c.b16 %v1125, %v1123
  %v1174 = vpack.c.b16 %v1128, %v1126
  %v1175 = vpack.c.b16 %v1129, %v1127
  %v1176 = vpack.c.b16 %v1132, %v1130
  %v1177 = vpack.c.b16 %v1133, %v1131
  %v1178 = vpack.c.b16 %v1136, %v1134
  %v1179 = vpack.c.b16 %v1137, %v1135
  %v1180 = vpack.c.b16 %v1140, %v1138
  %v1181 = vpack.c.b16 %v1141, %v1139
  %v1182 = vpack.c.b16 %v1144, %v1142
  %v1183 = vpack.c.b16 %v1145, %v1143
  %v1184 = vpack.c.b16 %v1148, %v1146
  %v1185 = vpack.c.b16 %v1149, %v1147
  %v1186 = vpack.c.b16 %v1152, %v1150
  %v1187 = vpack.c.b16 %v1153, %v1151
  %v1188 = vpack.c.b16 %v1156, %v1154
  %v1189 = vpack.c.b16 %v1157, %v1155
  %1222 = vmatprep.subr.bf16.mxu0 %v1159
  %1223 = vmatpush1.bf16.msra.mxu0 %v1158
  %1224 = vmatprep.subr.bf16.mxu0 %v1161
  %1225 = vmatpush1.bf16.msra.mxu0 %v1160
  %1226 = vmatprep.subr.bf16.mxu0 %v1163
  %1227 = vmatpush1.bf16.msra.mxu0 %v1162
  %1228 = vmatprep.subr.bf16.mxu0 %v1165
  %1229 = vmatpush1.bf16.msra.mxu0 %v1164
  %1230 = vmatprep.subr.bf16.mxu0 %v1167
  %1231 = vmatpush1.bf16.msra.mxu0 %v1166
  %1232 = vmatprep.subr.bf16.mxu0 %v1169
  %1233 = vmatpush1.bf16.msra.mxu0 %v1168
  %1234 = vmatprep.subr.bf16.mxu0 %v1171
  %1235 = vmatpush1.bf16.msra.mxu0 %v1170
  %1236 = vmatprep.subr.bf16.mxu0 %v1173
  %1237 = vmatpush1.bf16.msra.mxu0 %v1172
  %1238 = vmatprep.subr.bf16.mxu0 %v1175
  %1239 = vmatpush1.bf16.msra.mxu0 %v1174
  %1240 = vmatprep.subr.bf16.mxu0 %v1177
  %1241 = vmatpush1.bf16.msra.mxu0 %v1176
  %1242 = vmatprep.subr.bf16.mxu0 %v1179
  %1243 = vmatpush1.bf16.msra.mxu0 %v1178
  %1244 = vmatprep.subr.bf16.mxu0 %v1181
  %1245 = vmatpush1.bf16.msra.mxu0 %v1180
  %1246 = vmatprep.subr.bf16.mxu0 %v1183
  %1247 = vmatpush1.bf16.msra.mxu0 %v1182
  %1248 = vmatprep.subr.bf16.mxu0 %v1185
  %1249 = vmatpush1.bf16.msra.mxu0 %v1184
  %1250 = vmatprep.subr.bf16.mxu0 %v1187
  %1251 = vmatpush1.bf16.msra.mxu0 %v1186
  %1252 = vmatprep.subr.bf16.mxu0 %v1189
  %1253 = vmatpush1.bf16.msra.mxu0 %v1188
  %1254 = vmatprep.mubr.bf16.mxu0 %v1015
  %1255 = vmatmul.mubr.bf16.gmra.mrb[0].mxu0 %v1014
  %v1256 = vpop.f32.mrb[0].mxu0
  %v1257 = vadd.f32 %v1055, %v1256
  %v1258 = vpop.f32.mrb[0].mxu0
  %v1259 = vadd.f32 %v1059, %v1258
  %v1260 = vpop.f32.mrb[0].mxu0
  %v1261 = vpop.f32.mrb[0].mxu0
  %1262 = vdwg.mxu0
  %v1263 = vpack.c.bf16 %v1257, %v1257
  %v1264 = vpack.c.bf16 %v1259, %v1259
  %s1265 = scalar_lea.vmem %s1, 1280
  %v1266 = vld [vmem:[%s1265] sm:$0xff]
  %v1267 = vld [vmem:[%s1265 + $0x8] sm:$0xff]
  %v1268 = vld [vmem:[%s1265 + $0x10] sm:$0xff]
  %v1269 = vld [vmem:[%s1265 + $0x18] sm:$0xff]
  %v1270 = vld [vmem:[%s1265 + $0x20] sm:$0xff]
  %v1271 = vld [vmem:[%s1265 + $0x28] sm:$0xff]
  %v1272 = vld [vmem:[%s1265 + $0x30] sm:$0xff]
  %v1273 = vld [vmem:[%s1265 + $0x38] sm:$0xff]
  %v1274 = vld [vmem:[%s1265 + $0x40] sm:$0xff]
  %v1275 = vld [vmem:[%s1265 + $0x48] sm:$0xff]
  %v1276 = vld [vmem:[%s1265 + $0x50] sm:$0xff]
  %v1277 = vld [vmem:[%s1265 + $0x58] sm:$0xff]
  %v1278 = vld [vmem:[%s1265 + $0x60] sm:$0xff]
  %v1279 = vld [vmem:[%s1265 + $0x68] sm:$0xff]
  %v1280 = vld [vmem:[%s1265 + $0x70] sm:$0xff]
  %v1281 = vld [vmem:[%s1265 + $0x78] sm:$0xff]
  %v1282 = vld [vmem:[%s1265 + $0x80] sm:$0xff]
  %v1283 = vld [vmem:[%s1265 + $0x88] sm:$0xff]
  %v1284 = vld [vmem:[%s1265 + $0x90] sm:$0xff]
  %v1285 = vld [vmem:[%s1265 + $0x98] sm:$0xff]
  %v1286 = vld [vmem:[%s1265 + $0xa0] sm:$0xff]
  %v1287 = vld [vmem:[%s1265 + $0xa8] sm:$0xff]
  %v1288 = vld [vmem:[%s1265 + $0xb0] sm:$0xff]
  %v1289 = vld [vmem:[%s1265 + $0xb8] sm:$0xff]
  %v1290 = vld [vmem:[%s1265 + $0xc0] sm:$0xff]
  %v1291 = vld [vmem:[%s1265 + $0xc8] sm:$0xff]
  %v1292 = vld [vmem:[%s1265 + $0xd0] sm:$0xff]
  %v1293 = vld [vmem:[%s1265 + $0xd8] sm:$0xff]
  %v1294 = vld [vmem:[%s1265 + $0xe0] sm:$0xff]
  %v1295 = vld [vmem:[%s1265 + $0xe8] sm:$0xff]
  %v1296 = vld [vmem:[%s1265 + $0xf0] sm:$0xff]
  %v1297 = vld [vmem:[%s1265 + $0xf8] sm:$0xff]
  %s1298 = scalar_lea.vmem %s2, 10
  %v1299 = vld [vmem:[%s1298] sm:$0x3]
  %v1301 = vlaneseq
  %v1302 = vshrl.u32 %v1301, 7
  %v1303 = vsub.s32 0, %v1302
  %v1304 = vrot.slane %v1299, %v1303
  %v1305 = vlaneseq
  %v1306 = vshrl.u32 %v1305, 7
  %v1307 = vsub.s32 1, %v1306
  %v1308 = vrot.slane %v1299, %v1307
  %v1343 = vunpack.c.l.b16 %v1266
  %v1344 = vunpack.c.h.b16 %v1266
  %v1345 = vunpack.c.l.b16 %v1267
  %v1346 = vunpack.c.h.b16 %v1267
  %v1347 = vunpack.c.l.b16 %v1268
  %v1348 = vunpack.c.h.b16 %v1268
  %v1349 = vunpack.c.l.b16 %v1269
  %v1350 = vunpack.c.h.b16 %v1269
  %v1351 = vunpack.c.l.b16 %v1270
  %v1352 = vunpack.c.h.b16 %v1270
  %v1353 = vunpack.c.l.b16 %v1271
  %v1354 = vunpack.c.h.b16 %v1271
  %v1355 = vunpack.c.l.b16 %v1272
  %v1356 = vunpack.c.h.b16 %v1272
  %v1357 = vunpack.c.l.b16 %v1273
  %v1358 = vunpack.c.h.b16 %v1273
  %v1359 = vunpack.c.l.b16 %v1274
  %v1360 = vunpack.c.h.b16 %v1274
  %v1361 = vunpack.c.l.b16 %v1275
  %v1362 = vunpack.c.h.b16 %v1275
  %v1363 = vunpack.c.l.b16 %v1276
  %v1364 = vunpack.c.h.b16 %v1276
  %v1365 = vunpack.c.l.b16 %v1277
  %v1366 = vunpack.c.h.b16 %v1277
  %v1367 = vunpack.c.l.b16 %v1278
  %v1368 = vunpack.c.h.b16 %v1278
  %v1369 = vunpack.c.l.b16 %v1279
  %v1370 = vunpack.c.h.b16 %v1279
  %v1371 = vunpack.c.l.b16 %v1280
  %v1372 = vunpack.c.h.b16 %v1280
  %v1373 = vunpack.c.l.b16 %v1281
  %v1374 = vunpack.c.h.b16 %v1281
  %v1375 = vunpack.c.l.b16 %v1282
  %v1376 = vunpack.c.h.b16 %v1282
  %v1377 = vunpack.c.l.b16 %v1283
  %v1378 = vunpack.c.h.b16 %v1283
  %v1379 = vunpack.c.l.b16 %v1284
  %v1380 = vunpack.c.h.b16 %v1284
  %v1381 = vunpack.c.l.b16 %v1285
  %v1382 = vunpack.c.h.b16 %v1285
  %v1383 = vunpack.c.l.b16 %v1286
  %v1384 = vunpack.c.h.b16 %v1286
  %v1385 = vunpack.c.l.b16 %v1287
  %v1386 = vunpack.c.h.b16 %v1287
  %v1387 = vunpack.c.l.b16 %v1288
  %v1388 = vunpack.c.h.b16 %v1288
  %v1389 = vunpack.c.l.b16 %v1289
  %v1390 = vunpack.c.h.b16 %v1289
  %v1391 = vunpack.c.l.b16 %v1290
  %v1392 = vunpack.c.h.b16 %v1290
  %v1393 = vunpack.c.l.b16 %v1291
  %v1394 = vunpack.c.h.b16 %v1291
  %v1395 = vunpack.c.l.b16 %v1292
  %v1396 = vunpack.c.h.b16 %v1292
  %v1397 = vunpack.c.l.b16 %v1293
  %v1398 = vunpack.c.h.b16 %v1293
  %v1399 = vunpack.c.l.b16 %v1294
  %v1400 = vunpack.c.h.b16 %v1294
  %v1401 = vunpack.c.l.b16 %v1295
  %v1402 = vunpack.c.h.b16 %v1295
  %v1403 = vunpack.c.l.b16 %v1296
  %v1404 = vunpack.c.h.b16 %v1296
  %v1405 = vunpack.c.l.b16 %v1297
  %v1406 = vunpack.c.h.b16 %v1297
  %v1407 = vpack.c.b16 %v1345, %v1343
  %v1408 = vpack.c.b16 %v1346, %v1344
  %v1409 = vpack.c.b16 %v1349, %v1347
  %v1410 = vpack.c.b16 %v1350, %v1348
  %v1411 = vpack.c.b16 %v1353, %v1351
  %v1412 = vpack.c.b16 %v1354, %v1352
  %v1413 = vpack.c.b16 %v1357, %v1355
  %v1414 = vpack.c.b16 %v1358, %v1356
  %v1415 = vpack.c.b16 %v1361, %v1359
  %v1416 = vpack.c.b16 %v1362, %v1360
  %v1417 = vpack.c.b16 %v1365, %v1363
  %v1418 = vpack.c.b16 %v1366, %v1364
  %v1419 = vpack.c.b16 %v1369, %v1367
  %v1420 = vpack.c.b16 %v1370, %v1368
  %v1421 = vpack.c.b16 %v1373, %v1371
  %v1422 = vpack.c.b16 %v1374, %v1372
  %v1423 = vpack.c.b16 %v1377, %v1375
  %v1424 = vpack.c.b16 %v1378, %v1376
  %v1425 = vpack.c.b16 %v1381, %v1379
  %v1426 = vpack.c.b16 %v1382, %v1380
  %v1427 = vpack.c.b16 %v1385, %v1383
  %v1428 = vpack.c.b16 %v1386, %v1384
  %v1429 = vpack.c.b16 %v1389, %v1387
  %v1430 = vpack.c.b16 %v1390, %v1388
  %v1431 = vpack.c.b16 %v1393, %v1391
  %v1432 = vpack.c.b16 %v1394, %v1392
  %v1433 = vpack.c.b16 %v1397, %v1395
  %v1434 = vpack.c.b16 %v1398, %v1396
  %v1435 = vpack.c.b16 %v1401, %v1399
  %v1436 = vpack.c.b16 %v1402, %v1400
  %v1437 = vpack.c.b16 %v1405, %v1403
  %v1438 = vpack.c.b16 %v1406, %v1404
  %1471 = vmatprep.subr.bf16.mxu0 %v1408
  %1472 = vmatpush1.bf16.msra.mxu0 %v1407
  %1473 = vmatprep.subr.bf16.mxu0 %v1410
  %1474 = vmatpush1.bf16.msra.mxu0 %v1409
  %1475 = vmatprep.subr.bf16.mxu0 %v1412
  %1476 = vmatpush1.bf16.msra.mxu0 %v1411
  %1477 = vmatprep.subr.bf16.mxu0 %v1414
  %1478 = vmatpush1.bf16.msra.mxu0 %v1413
  %1479 = vmatprep.subr.bf16.mxu0 %v1416
  %1480 = vmatpush1.bf16.msra.mxu0 %v1415
  %1481 = vmatprep.subr.bf16.mxu0 %v1418
  %1482 = vmatpush1.bf16.msra.mxu0 %v1417
  %1483 = vmatprep.subr.bf16.mxu0 %v1420
  %1484 = vmatpush1.bf16.msra.mxu0 %v1419
  %1485 = vmatprep.subr.bf16.mxu0 %v1422
  %1486 = vmatpush1.bf16.msra.mxu0 %v1421
  %1487 = vmatprep.subr.bf16.mxu0 %v1424
  %1488 = vmatpush1.bf16.msra.mxu0 %v1423
  %1489 = vmatprep.subr.bf16.mxu0 %v1426
  %1490 = vmatpush1.bf16.msra.mxu0 %v1425
  %1491 = vmatprep.subr.bf16.mxu0 %v1428
  %1492 = vmatpush1.bf16.msra.mxu0 %v1427
  %1493 = vmatprep.subr.bf16.mxu0 %v1430
  %1494 = vmatpush1.bf16.msra.mxu0 %v1429
  %1495 = vmatprep.subr.bf16.mxu0 %v1432
  %1496 = vmatpush1.bf16.msra.mxu0 %v1431
  %1497 = vmatprep.subr.bf16.mxu0 %v1434
  %1498 = vmatpush1.bf16.msra.mxu0 %v1433
  %1499 = vmatprep.subr.bf16.mxu0 %v1436
  %1500 = vmatpush1.bf16.msra.mxu0 %v1435
  %1501 = vmatprep.subr.bf16.mxu0 %v1438
  %1502 = vmatpush1.bf16.msra.mxu0 %v1437
  %1503 = vmatprep.mubr.bf16.mxu0 %v1264
  %1504 = vmatmul.mubr.bf16.gmra.mrb[0].mxu0 %v1263
  %v1505 = vpop.f32.mrb[0].mxu0
  %v1506 = vadd.f32 %v1304, %v1505
  %v1507 = vpop.f32.mrb[0].mxu0
  %v1508 = vadd.f32 %v1308, %v1507
  %v1509 = vpop.f32.mrb[0].mxu0
  %v1510 = vpop.f32.mrb[0].mxu0
  %1511 = vdwg.mxu0
  %v1512 = vpack.c.bf16 %v1506, %v1506
  %v1513 = vpack.c.bf16 %v1508, %v1508
  %s1514 = scalar_lea.vmem %s1, 1536
  %v1515 = vld [vmem:[%s1514] sm:$0xff]
  %v1516 = vld [vmem:[%s1514 + $0x8] sm:$0xff]
  %v1517 = vld [vmem:[%s1514 + $0x10] sm:$0xff]
  %v1518 = vld [vmem:[%s1514 + $0x18] sm:$0xff]
  %v1519 = vld [vmem:[%s1514 + $0x20] sm:$0xff]
  %v1520 = vld [vmem:[%s1514 + $0x28] sm:$0xff]
  %v1521 = vld [vmem:[%s1514 + $0x30] sm:$0xff]
  %v1522 = vld [vmem:[%s1514 + $0x38] sm:$0xff]
  %v1523 = vld [vmem:[%s1514 + $0x40] sm:$0xff]
  %v1524 = vld [vmem:[%s1514 + $0x48] sm:$0xff]
  %v1525 = vld [vmem:[%s1514 + $0x50] sm:$0xff]
  %v1526 = vld [vmem:[%s1514 + $0x58] sm:$0xff]
  %v1527 = vld [vmem:[%s1514 + $0x60] sm:$0xff]
  %v1528 = vld [vmem:[%s1514 + $0x68] sm:$0xff]
  %v1529 = vld [vmem:[%s1514 + $0x70] sm:$0xff]
  %v1530 = vld [vmem:[%s1514 + $0x78] sm:$0xff]
  %v1531 = vld [vmem:[%s1514 + $0x80] sm:$0xff]
  %v1532 = vld [vmem:[%s1514 + $0x88] sm:$0xff]
  %v1533 = vld [vmem:[%s1514 + $0x90] sm:$0xff]
  %v1534 = vld [vmem:[%s1514 + $0x98] sm:$0xff]
  %v1535 = vld [vmem:[%s1514 + $0xa0] sm:$0xff]
  %v1536 = vld [vmem:[%s1514 + $0xa8] sm:$0xff]
  %v1537 = vld [vmem:[%s1514 + $0xb0] sm:$0xff]
  %v1538 = vld [vmem:[%s1514 + $0xb8] sm:$0xff]
  %v1539 = vld [vmem:[%s1514 + $0xc0] sm:$0xff]
  %v1540 = vld [vmem:[%s1514 + $0xc8] sm:$0xff]
  %v1541 = vld [vmem:[%s1514 + $0xd0] sm:$0xff]
  %v1542 = vld [vmem:[%s1514 + $0xd8] sm:$0xff]
  %v1543 = vld [vmem:[%s1514 + $0xe0] sm:$0xff]
  %v1544 = vld [vmem:[%s1514 + $0xe8] sm:$0xff]
  %v1545 = vld [vmem:[%s1514 + $0xf0] sm:$0xff]
  %v1546 = vld [vmem:[%s1514 + $0xf8] sm:$0xff]
  %s1547 = scalar_lea.vmem %s2, 12
  %v1548 = vld [vmem:[%s1547] sm:$0x3]
  %v1550 = vlaneseq
  %v1551 = vshrl.u32 %v1550, 7
  %v1552 = vsub.s32 0, %v1551
  %v1553 = vrot.slane %v1548, %v1552
  %v1554 = vlaneseq
  %v1555 = vshrl.u32 %v1554, 7
  %v1556 = vsub.s32 1, %v1555
  %v1557 = vrot.slane %v1548, %v1556
  %v1592 = vunpack.c.l.b16 %v1515
  %v1593 = vunpack.c.h.b16 %v1515
  %v1594 = vunpack.c.l.b16 %v1516
  %v1595 = vunpack.c.h.b16 %v1516
  %v1596 = vunpack.c.l.b16 %v1517
  %v1597 = vunpack.c.h.b16 %v1517
  %v1598 = vunpack.c.l.b16 %v1518
  %v1599 = vunpack.c.h.b16 %v1518
  %v1600 = vunpack.c.l.b16 %v1519
  %v1601 = vunpack.c.h.b16 %v1519
  %v1602 = vunpack.c.l.b16 %v1520
  %v1603 = vunpack.c.h.b16 %v1520
  %v1604 = vunpack.c.l.b16 %v1521
  %v1605 = vunpack.c.h.b16 %v1521
  %v1606 = vunpack.c.l.b16 %v1522
  %v1607 = vunpack.c.h.b16 %v1522
  %v1608 = vunpack.c.l.b16 %v1523
  %v1609 = vunpack.c.h.b16 %v1523
  %v1610 = vunpack.c.l.b16 %v1524
  %v1611 = vunpack.c.h.b16 %v1524
  %v1612 = vunpack.c.l.b16 %v1525
  %v1613 = vunpack.c.h.b16 %v1525
  %v1614 = vunpack.c.l.b16 %v1526
  %v1615 = vunpack.c.h.b16 %v1526
  %v1616 = vunpack.c.l.b16 %v1527
  %v1617 = vunpack.c.h.b16 %v1527
  %v1618 = vunpack.c.l.b16 %v1528
  %v1619 = vunpack.c.h.b16 %v1528
  %v1620 = vunpack.c.l.b16 %v1529
  %v1621 = vunpack.c.h.b16 %v1529
  %v1622 = vunpack.c.l.b16 %v1530
  %v1623 = vunpack.c.h.b16 %v1530
  %v1624 = vunpack.c.l.b16 %v1531
  %v1625 = vunpack.c.h.b16 %v1531
  %v1626 = vunpack.c.l.b16 %v1532
  %v1627 = vunpack.c.h.b16 %v1532
  %v1628 = vunpack.c.l.b16 %v1533
  %v1629 = vunpack.c.h.b16 %v1533
  %v1630 = vunpack.c.l.b16 %v1534
  %v1631 = vunpack.c.h.b16 %v1534
  %v1632 = vunpack.c.l.b16 %v1535
  %v1633 = vunpack.c.h.b16 %v1535
  %v1634 = vunpack.c.l.b16 %v1536
  %v1635 = vunpack.c.h.b16 %v1536
  %v1636 = vunpack.c.l.b16 %v1537
  %v1637 = vunpack.c.h.b16 %v1537
  %v1638 = vunpack.c.l.b16 %v1538
  %v1639 = vunpack.c.h.b16 %v1538
  %v1640 = vunpack.c.l.b16 %v1539
  %v1641 = vunpack.c.h.b16 %v1539
  %v1642 = vunpack.c.l.b16 %v1540
  %v1643 = vunpack.c.h.b16 %v1540
  %v1644 = vunpack.c.l.b16 %v1541
  %v1645 = vunpack.c.h.b16 %v1541
  %v1646 = vunpack.c.l.b16 %v1542
  %v1647 = vunpack.c.h.b16 %v1542
  %v1648 = vunpack.c.l.b16 %v1543
  %v1649 = vunpack.c.h.b16 %v1543
  %v1650 = vunpack.c.l.b16 %v1544
  %v1651 = vunpack.c.h.b16 %v1544
  %v1652 = vunpack.c.l.b16 %v1545
  %v1653 = vunpack.c.h.b16 %v1545
  %v1654 = vunpack.c.l.b16 %v1546
  %v1655 = vunpack.c.h.b16 %v1546
  %v1656 = vpack.c.b16 %v1594, %v1592
  %v1657 = vpack.c.b16 %v1595, %v1593
  %v1658 = vpack.c.b16 %v1598, %v1596
  %v1659 = vpack.c.b16 %v1599, %v1597
  %v1660 = vpack.c.b16 %v1602, %v1600
  %v1661 = vpack.c.b16 %v1603, %v1601
  %v1662 = vpack.c.b16 %v1606, %v1604
  %v1663 = vpack.c.b16 %v1607, %v1605
  %v1664 = vpack.c.b16 %v1610, %v1608
  %v1665 = vpack.c.b16 %v1611, %v1609
  %v1666 = vpack.c.b16 %v1614, %v1612
  %v1667 = vpack.c.b16 %v1615, %v1613
  %v1668 = vpack.c.b16 %v1618, %v1616
  %v1669 = vpack.c.b16 %v1619, %v1617
  %v1670 = vpack.c.b16 %v1622, %v1620
  %v1671 = vpack.c.b16 %v1623, %v1621
  %v1672 = vpack.c.b16 %v1626, %v1624
  %v1673 = vpack.c.b16 %v1627, %v1625
  %v1674 = vpack.c.b16 %v1630, %v1628
  %v1675 = vpack.c.b16 %v1631, %v1629
  %v1676 = vpack.c.b16 %v1634, %v1632
  %v1677 = vpack.c.b16 %v1635, %v1633
  %v1678 = vpack.c.b16 %v1638, %v1636
  %v1679 = vpack.c.b16 %v1639, %v1637
  %v1680 = vpack.c.b16 %v1642, %v1640
  %v1681 = vpack.c.b16 %v1643, %v1641
  %v1682 = vpack.c.b16 %v1646, %v1644
  %v1683 = vpack.c.b16 %v1647, %v1645
  %v1684 = vpack.c.b16 %v1650, %v1648
  %v1685 = vpack.c.b16 %v1651, %v1649
  %v1686 = vpack.c.b16 %v1654, %v1652
  %v1687 = vpack.c.b16 %v1655, %v1653
  %1720 = vmatprep.subr.bf16.mxu0 %v1657
  %1721 = vmatpush1.bf16.msra.mxu0 %v1656
  %1722 = vmatprep.subr.bf16.mxu0 %v1659
  %1723 = vmatpush1.bf16.msra.mxu0 %v1658
  %1724 = vmatprep.subr.bf16.mxu0 %v1661
  %1725 = vmatpush1.bf16.msra.mxu0 %v1660
  %1726 = vmatprep.subr.bf16.mxu0 %v1663
  %1727 = vmatpush1.bf16.msra.mxu0 %v1662
  %1728 = vmatprep.subr.bf16.mxu0 %v1665
  %1729 = vmatpush1.bf16.msra.mxu0 %v1664
  %1730 = vmatprep.subr.bf16.mxu0 %v1667
  %1731 = vmatpush1.bf16.msra.mxu0 %v1666
  %1732 = vmatprep.subr.bf16.mxu0 %v1669
  %1733 = vmatpush1.bf16.msra.mxu0 %v1668
  %1734 = vmatprep.subr.bf16.mxu0 %v1671
  %1735 = vmatpush1.bf16.msra.mxu0 %v1670
  %1736 = vmatprep.subr.bf16.mxu0 %v1673
  %1737 = vmatpush1.bf16.msra.mxu0 %v1672
  %1738 = vmatprep.subr.bf16.mxu0 %v1675
  %1739 = vmatpush1.bf16.msra.mxu0 %v1674
  %1740 = vmatprep.subr.bf16.mxu0 %v1677
  %1741 = vmatpush1.bf16.msra.mxu0 %v1676
  %1742 = vmatprep.subr.bf16.mxu0 %v1679
  %1743 = vmatpush1.bf16.msra.mxu0 %v1678
  %1744 = vmatprep.subr.bf16.mxu0 %v1681
  %1745 = vmatpush1.bf16.msra.mxu0 %v1680
  %1746 = vmatprep.subr.bf16.mxu0 %v1683
  %1747 = vmatpush1.bf16.msra.mxu0 %v1682
  %1748 = vmatprep.subr.bf16.mxu0 %v1685
  %1749 = vmatpush1.bf16.msra.mxu0 %v1684
  %1750 = vmatprep.subr.bf16.mxu0 %v1687
  %1751 = vmatpush1.bf16.msra.mxu0 %v1686
  %1752 = vmatprep.mubr.bf16.mxu0 %v1513
  %1753 = vmatmul.mubr.bf16.gmra.mrb[0].mxu0 %v1512
  %v1754 = vpop.f32.mrb[0].mxu0
  %v1755 = vadd.f32 %v1553, %v1754
  %v1756 = vpop.f32.mrb[0].mxu0
  %v1757 = vadd.f32 %v1557, %v1756
  %v1758 = vpop.f32.mrb[0].mxu0
  %v1759 = vpop.f32.mrb[0].mxu0
  %1760 = vdwg.mxu0
  %v1761 = vpack.c.bf16 %v1755, %v1755
  %v1762 = vpack.c.bf16 %v1757, %v1757
  %s1763 = scalar_lea.vmem %s1, 1792
  %v1764 = vld [vmem:[%s1763] sm:$0xff]
  %v1765 = vld [vmem:[%s1763 + $0x8] sm:$0xff]
  %v1766 = vld [vmem:[%s1763 + $0x10] sm:$0xff]
  %v1767 = vld [vmem:[%s1763 + $0x18] sm:$0xff]
  %v1768 = vld [vmem:[%s1763 + $0x20] sm:$0xff]
  %v1769 = vld [vmem:[%s1763 + $0x28] sm:$0xff]
  %v1770 = vld [vmem:[%s1763 + $0x30] sm:$0xff]
  %v1771 = vld [vmem:[%s1763 + $0x38] sm:$0xff]
  %v1772 = vld [vmem:[%s1763 + $0x40] sm:$0xff]
  %v1773 = vld [vmem:[%s1763 + $0x48] sm:$0xff]
  %v1774 = vld [vmem:[%s1763 + $0x50] sm:$0xff]
  %v1775 = vld [vmem:[%s1763 + $0x58] sm:$0xff]
  %v1776 = vld [vmem:[%s1763 + $0x60] sm:$0xff]
  %v1777 = vld [vmem:[%s1763 + $0x68] sm:$0xff]
  %v1778 = vld [vmem:[%s1763 + $0x70] sm:$0xff]
  %v1779 = vld [vmem:[%s1763 + $0x78] sm:$0xff]
  %v1780 = vld [vmem:[%s1763 + $0x80] sm:$0xff]
  %v1781 = vld [vmem:[%s1763 + $0x88] sm:$0xff]
  %v1782 = vld [vmem:[%s1763 + $0x90] sm:$0xff]
  %v1783 = vld [vmem:[%s1763 + $0x98] sm:$0xff]
  %v1784 = vld [vmem:[%s1763 + $0xa0] sm:$0xff]
  %v1785 = vld [vmem:[%s1763 + $0xa8] sm:$0xff]
  %v1786 = vld [vmem:[%s1763 + $0xb0] sm:$0xff]
  %v1787 = vld [vmem:[%s1763 + $0xb8] sm:$0xff]
  %v1788 = vld [vmem:[%s1763 + $0xc0] sm:$0xff]
  %v1789 = vld [vmem:[%s1763 + $0xc8] sm:$0xff]
  %v1790 = vld [vmem:[%s1763 + $0xd0] sm:$0xff]
  %v1791 = vld [vmem:[%s1763 + $0xd8] sm:$0xff]
  %v1792 = vld [vmem:[%s1763 + $0xe0] sm:$0xff]
  %v1793 = vld [vmem:[%s1763 + $0xe8] sm:$0xff]
  %v1794 = vld [vmem:[%s1763 + $0xf0] sm:$0xff]
  %v1795 = vld [vmem:[%s1763 + $0xf8] sm:$0xff]
  %s1796 = scalar_lea.vmem %s2, 14
  %v1797 = vld [vmem:[%s1796] sm:$0x3]
  %v1799 = vlaneseq
  %v1800 = vshrl.u32 %v1799, 7
  %v1801 = vsub.s32 0, %v1800
  %v1802 = vrot.slane %v1797, %v1801
  %v1803 = vlaneseq
  %v1804 = vshrl.u32 %v1803, 7
  %v1805 = vsub.s32 1, %v1804
  %v1806 = vrot.slane %v1797, %v1805
  %v1841 = vunpack.c.l.b16 %v1764
  %v1842 = vunpack.c.h.b16 %v1764
  %v1843 = vunpack.c.l.b16 %v1765
  %v1844 = vunpack.c.h.b16 %v1765
  %v1845 = vunpack.c.l.b16 %v1766
  %v1846 = vunpack.c.h.b16 %v1766
  %v1847 = vunpack.c.l.b16 %v1767
  %v1848 = vunpack.c.h.b16 %v1767
  %v1849 = vunpack.c.l.b16 %v1768
  %v1850 = vunpack.c.h.b16 %v1768
  %v1851 = vunpack.c.l.b16 %v1769
  %v1852 = vunpack.c.h.b16 %v1769
  %v1853 = vunpack.c.l.b16 %v1770
  %v1854 = vunpack.c.h.b16 %v1770
  %v1855 = vunpack.c.l.b16 %v1771
  %v1856 = vunpack.c.h.b16 %v1771
  %v1857 = vunpack.c.l.b16 %v1772
  %v1858 = vunpack.c.h.b16 %v1772
  %v1859 = vunpack.c.l.b16 %v1773
  %v1860 = vunpack.c.h.b16 %v1773
  %v1861 = vunpack.c.l.b16 %v1774
  %v1862 = vunpack.c.h.b16 %v1774
  %v1863 = vunpack.c.l.b16 %v1775
  %v1864 = vunpack.c.h.b16 %v1775
  %v1865 = vunpack.c.l.b16 %v1776
  %v1866 = vunpack.c.h.b16 %v1776
  %v1867 = vunpack.c.l.b16 %v1777
  %v1868 = vunpack.c.h.b16 %v1777
  %v1869 = vunpack.c.l.b16 %v1778
  %v1870 = vunpack.c.h.b16 %v1778
  %v1871 = vunpack.c.l.b16 %v1779
  %v1872 = vunpack.c.h.b16 %v1779
  %v1873 = vunpack.c.l.b16 %v1780
  %v1874 = vunpack.c.h.b16 %v1780
  %v1875 = vunpack.c.l.b16 %v1781
  %v1876 = vunpack.c.h.b16 %v1781
  %v1877 = vunpack.c.l.b16 %v1782
  %v1878 = vunpack.c.h.b16 %v1782
  %v1879 = vunpack.c.l.b16 %v1783
  %v1880 = vunpack.c.h.b16 %v1783
  %v1881 = vunpack.c.l.b16 %v1784
  %v1882 = vunpack.c.h.b16 %v1784
  %v1883 = vunpack.c.l.b16 %v1785
  %v1884 = vunpack.c.h.b16 %v1785
  %v1885 = vunpack.c.l.b16 %v1786
  %v1886 = vunpack.c.h.b16 %v1786
  %v1887 = vunpack.c.l.b16 %v1787
  %v1888 = vunpack.c.h.b16 %v1787
  %v1889 = vunpack.c.l.b16 %v1788
  %v1890 = vunpack.c.h.b16 %v1788
  %v1891 = vunpack.c.l.b16 %v1789
  %v1892 = vunpack.c.h.b16 %v1789
  %v1893 = vunpack.c.l.b16 %v1790
  %v1894 = vunpack.c.h.b16 %v1790
  %v1895 = vunpack.c.l.b16 %v1791
  %v1896 = vunpack.c.h.b16 %v1791
  %v1897 = vunpack.c.l.b16 %v1792
  %v1898 = vunpack.c.h.b16 %v1792
  %v1899 = vunpack.c.l.b16 %v1793
  %v1900 = vunpack.c.h.b16 %v1793
  %v1901 = vunpack.c.l.b16 %v1794
  %v1902 = vunpack.c.h.b16 %v1794
  %v1903 = vunpack.c.l.b16 %v1795
  %v1904 = vunpack.c.h.b16 %v1795
  %v1905 = vpack.c.b16 %v1843, %v1841
  %v1906 = vpack.c.b16 %v1844, %v1842
  %v1907 = vpack.c.b16 %v1847, %v1845
  %v1908 = vpack.c.b16 %v1848, %v1846
  %v1909 = vpack.c.b16 %v1851, %v1849
  %v1910 = vpack.c.b16 %v1852, %v1850
  %v1911 = vpack.c.b16 %v1855, %v1853
  %v1912 = vpack.c.b16 %v1856, %v1854
  %v1913 = vpack.c.b16 %v1859, %v1857
  %v1914 = vpack.c.b16 %v1860, %v1858
  %v1915 = vpack.c.b16 %v1863, %v1861
  %v1916 = vpack.c.b16 %v1864, %v1862
  %v1917 = vpack.c.b16 %v1867, %v1865
  %v1918 = vpack.c.b16 %v1868, %v1866
  %v1919 = vpack.c.b16 %v1871, %v1869
  %v1920 = vpack.c.b16 %v1872, %v1870
  %v1921 = vpack.c.b16 %v1875, %v1873
  %v1922 = vpack.c.b16 %v1876, %v1874
  %v1923 = vpack.c.b16 %v1879, %v1877
  %v1924 = vpack.c.b16 %v1880, %v1878
  %v1925 = vpack.c.b16 %v1883, %v1881
  %v1926 = vpack.c.b16 %v1884, %v1882
  %v1927 = vpack.c.b16 %v1887, %v1885
  %v1928 = vpack.c.b16 %v1888, %v1886
  %v1929 = vpack.c.b16 %v1891, %v1889
  %v1930 = vpack.c.b16 %v1892, %v1890
  %v1931 = vpack.c.b16 %v1895, %v1893
  %v1932 = vpack.c.b16 %v1896, %v1894
  %v1933 = vpack.c.b16 %v1899, %v1897
  %v1934 = vpack.c.b16 %v1900, %v1898
  %v1935 = vpack.c.b16 %v1903, %v1901
  %v1936 = vpack.c.b16 %v1904, %v1902
  %1969 = vmatprep.subr.bf16.mxu0 %v1906
  %1970 = vmatpush1.bf16.msra.mxu0 %v1905
  %1971 = vmatprep.subr.bf16.mxu0 %v1908
  %1972 = vmatpush1.bf16.msra.mxu0 %v1907
  %1973 = vmatprep.subr.bf16.mxu0 %v1910
  %1974 = vmatpush1.bf16.msra.mxu0 %v1909
  %1975 = vmatprep.subr.bf16.mxu0 %v1912
  %1976 = vmatpush1.bf16.msra.mxu0 %v1911
  %1977 = vmatprep.subr.bf16.mxu0 %v1914
  %1978 = vmatpush1.bf16.msra.mxu0 %v1913
  %1979 = vmatprep.subr.bf16.mxu0 %v1916
  %1980 = vmatpush1.bf16.msra.mxu0 %v1915
  %1981 = vmatprep.subr.bf16.mxu0 %v1918
  %1982 = vmatpush1.bf16.msra.mxu0 %v1917
  %1983 = vmatprep.subr.bf16.mxu0 %v1920
  %1984 = vmatpush1.bf16.msra.mxu0 %v1919
  %1985 = vmatprep.subr.bf16.mxu0 %v1922
  %1986 = vmatpush1.bf16.msra.mxu0 %v1921
  %1987 = vmatprep.subr.bf16.mxu0 %v1924
  %1988 = vmatpush1.bf16.msra.mxu0 %v1923
  %1989 = vmatprep.subr.bf16.mxu0 %v1926
  %1990 = vmatpush1.bf16.msra.mxu0 %v1925
  %1991 = vmatprep.subr.bf16.mxu0 %v1928
  %1992 = vmatpush1.bf16.msra.mxu0 %v1927
  %1993 = vmatprep.subr.bf16.mxu0 %v1930
  %1994 = vmatpush1.bf16.msra.mxu0 %v1929
  %1995 = vmatprep.subr.bf16.mxu0 %v1932
  %1996 = vmatpush1.bf16.msra.mxu0 %v1931
  %1997 = vmatprep.subr.bf16.mxu0 %v1934
  %1998 = vmatpush1.bf16.msra.mxu0 %v1933
  %1999 = vmatprep.subr.bf16.mxu0 %v1936
  %2000 = vmatpush1.bf16.msra.mxu0 %v1935
  %2001 = vmatprep.mubr.bf16.mxu0 %v1762
  %2002 = vmatmul.mubr.bf16.gmra.mrb[0].mxu0 %v1761
  %v2003 = vpop.f32.mrb[0].mxu0
  %v2004 = vadd.f32 %v1802, %v2003
  %v2005 = vpop.f32.mrb[0].mxu0
  %v2006 = vadd.f32 %v1806, %v2005
  %v2007 = vpop.f32.mrb[0].mxu0
  %v2008 = vpop.f32.mrb[0].mxu0
  %2009 = vdwg.mxu0
  %2010 = vst [vmem:[%s3] sm:$0xff] %v2004
  %2011 = vst [vmem:[%s3 + $0x8] sm:$0xff] %v2006
  // Predicated region
  $region14: #{vsnet_forward.19} parent=0 // pred_check
    _
  $region15: #{vsnet_forward.19} parent=0 // pred_check_branch
    %2013 = sbr.rel (0) target = $region17
  $region16: #{vsnet_forward.19} parent=0 // pred_region
    _
  $region17: #{vsnet_forward.19} parent=0 // pred_fallthru
    _
  // Predicated region
  $region18: #{vsnet_forward.19} parent=0 // pred_check
    _
  $region19: #{vsnet_forward.19} parent=0 // pred_check_branch
    %2015 = sbr.rel (0) target = $region21
  $region20: #{vsnet_forward.19} parent=0 // pred_region
    _
  $region21: #{vsnet_forward.19} parent=0 // pred_fallthru
    _

</llo_original>
